<compile_context>
chip_gen: v6e
topology: v6e:2x2x1
jax: 0.10.0
libtpu: 0.0.40
codegen_flags: <defaults>
</compile_context>

<pallas_src>
import jax
import jax.numpy as jnp
import numpy as np
from jax.experimental import pallas as pl
from jax.experimental.pallas import tpu as pltpu

LN_EPS = 1e-5  # nn.LayerNorm default


def _layer_norm(x, gamma, beta):
    # f32 statistics (biased variance, eps=1e-5), matching nn.LayerNorm.
    mu = jnp.mean(x, axis=-1, keepdims=True)
    xc = x - mu
    var = jnp.mean(xc * xc, axis=-1, keepdims=True)
    inv = jax.lax.rsqrt(var + LN_EPS)
    return xc * inv * gamma + beta


def _make_kernel(num_heads, compute_dtype, n_valid, mlp_chunk):
    cdt = compute_dtype

    def kernel(x_ref, ew_ref, eb_ref, pos_ref,
               n1g_ref, n1b_ref, qkvw_ref, qkvb_ref, pw_ref, pb_ref,
               n2g_ref, n2b_ref, f1w_ref, f1b_ref, f2w_ref, f2b_ref,
               nfg_ref, nfb_ref, predw_ref, predb_ref,
               o_ref, h_ref):
        bblk, n_tok, e_in = x_ref.shape
        dec_dim = ew_ref.shape[1]
        hid = f1w_ref.shape[-1]
        head_dim = dec_dim // num_heads
        m_rows = bblk * n_tok

        d = pl.program_id(1)
        d_last = pl.num_programs(1) - 1

        def dot(a_f32, w2d):
            # bf16 (or cdt) MXU inputs, f32 accumulation.
            return jnp.dot(a_f32.astype(cdt), w2d, preferred_element_type=jnp.float32)

        # ----- layer 0 only: decoder_embed + pos_embed -> VMEM-resident activation
        @pl.when(d == 0)
        def _():
            x2 = x_ref[...].reshape(m_rows, e_in)
            h0 = dot(x2, ew_ref[...]) + eb_ref[...]
            h_ref[...] = h0.reshape(bblk, n_tok, dec_dim) + pos_ref[...][None]

        h2 = h_ref[...].reshape(m_rows, dec_dim)          # (M, D) f32, folded rows

        # ----------------- attention sub-block (layer d) -----------------
        y2 = _layer_norm(h2, n1g_ref[0], n1b_ref[0])
        # Attention scale is pre-folded into the Q columns of qkv_w/qkv_b (host),
        # and qkv is cast to the compute dtype exactly once.
        qkv = dot(y2, qkvw_ref[0]) + qkvb_ref[0]          # (M, 3D) f32, fused projection
        qkv_c = qkv.astype(cdt).reshape(bblk, n_tok, 3 * dec_dim)

        key_ok = None
        if n_valid != n_tok:                              # static: only when tokens padded
            key_ok = jax.lax.broadcasted_iota(jnp.int32, (1, 1, n_tok), 2) < n_valid

        # TODO(synk): head-batched 'bnhd,bmhd->bhnm' form blocked by Mosaic's
        # minor-dims-only transpose support; static per-head loop retained.
        heads = []
        for hh in range(num_heads):
            lo = hh * head_dim
            q = qkv_c[:, :, lo:lo + head_dim]
            k = qkv_c[:, :, dec_dim + lo:dec_dim + lo + head_dim]
            v = qkv_c[:, :, 2 * dec_dim + lo:2 * dec_dim + lo + head_dim]
            s = jnp.einsum("bnd,bmd->bnm", q, k, preferred_element_type=jnp.float32)
            if key_ok is not None:
                s = jnp.where(key_ok, s, -1e30)
            s = s - jnp.max(s, axis=-1, keepdims=True)
            p = jnp.exp(s)
            inv = pl.reciprocal(jnp.sum(p, axis=-1, keepdims=True), approx=True)
            o = jnp.einsum("bnm,bmd->bnd", p.astype(cdt), v,
                           preferred_element_type=jnp.float32)
            heads.append(o * inv)      # normalize after PV: N*hd elems instead of N*N
        attn = jnp.concatenate(heads, axis=-1).reshape(m_rows, dec_dim)
        h2 = h2 + dot(attn, pw_ref[0]) + pb_ref[0]

        # ----------- MLP sub-block (layer d), chunked over the hidden dim -----------
        y2 = _layer_norm(h2, n2g_ref[0], n2b_ref[0])
        y2c = y2.astype(cdt)
        acc = h2 + f2b_ref[0]
        for c0 in range(0, hid, mlp_chunk):               # static chunk loop
            c1 = min(hid, c0 + mlp_chunk)
            m1 = jnp.dot(y2c, f1w_ref[0, :, c0:c1],
                         preferred_element_type=jnp.float32) + f1b_ref[0, :, c0:c1]
            # TODO(synk): torch nn.GELU() default is exact erf GELU; tanh approx used.
            g = jax.nn.gelu(m1, approximate=True)
            acc = acc + jnp.dot(g.astype(cdt), f2w_ref[0, c0:c1, :],
                                preferred_element_type=jnp.float32)
        h2 = acc
        h_ref[...] = h2.reshape(bblk, n_tok, dec_dim)

        # ----- last layer only: final LayerNorm + decoder_pred (lane-padded output)
        @pl.when(d == d_last)
        def _():
            yf = _layer_norm(h2, nfg_ref[...], nfb_ref[...])
            out = dot(yf, predw_ref[...]) + predb_ref[...]
            o_ref[...] = out.reshape(bblk, n_tok, -1).astype(o_ref.dtype)

    return kernel


PARAM_ORDER = ("embed_w", "embed_b", "pos",
               "n1g", "n1b", "qkv_w", "qkv_b", "proj_w", "proj_b",
               "n2g", "n2b", "fc1_w", "fc1_b", "fc2_w", "fc2_b",
               "nfg", "nfb", "pred_w", "pred_b")

_CONST_KEYS = ("embed_w", "embed_b", "pos", "nfg", "nfb", "pred_w", "pred_b")


def _pick_block_b(batch, n_tok):
    """Largest divisor of `batch` with block_b*n_tok <= ~512 rows, keeping >=2
    batch blocks (when possible) so the 'parallel' axis can shard across v7x's
    two TensorCores."""
    want = max(1, -(-512 // n_tok))
    best = 1
    for cand in range(1, batch + 1):
        if batch % cand:
            continue
        if batch >= 2 and batch // cand < 2:
            continue
        if cand <= want:
            best = max(best, cand)
    return best


def _default_vmem_limit():
    try:
        cap = pltpu.get_tpu_info().vmem_capacity_bytes   # 128 MiB v5e/v6e, 64 MiB v7x
    except Exception:
        cap = 64 * 1024 * 1024
    return min(int(cap * 3 // 4), 96 * 1024 * 1024)


def mae_decoder_pallas(x, params, *, depth, num_heads, block_b=None,
                       compute_dtype=jnp.bfloat16, out_dtype=None,
                       mlp_chunk=1024, vmem_limit_bytes=None):
    B, N, E = x.shape
    D = params["embed_w"].shape[1]
    hid = params["fc1_w"].shape[-1]
    P = params["pred_w"].shape[1]
    assert D % num_heads == 0
    head_dim = D // num_heads
    out_dtype = x.dtype if out_dtype is None else out_dtype
    f32 = jnp.float32
    cdt = compute_dtype

    # padding: tokens to a multiple of 8 (sublanes), prediction lanes to 128.
    Npad = ((N + 7) // 8) * 8
    Ppad = ((P + 127) // 128) * 128

    if block_b is None:
        block_b = _pick_block_b(B, Npad)
    assert B % block_b == 0
    assert params["pos"].shape[0] == N

    xp = x if Npad == N else jnp.pad(x, ((0, 0), (0, Npad - N), (0, 0)))
    pos = params["pos"]
    if Npad != N:
        pos = jnp.pad(pos, ((0, Npad - N), (0, 0)))

    # fold the attention scale into the Q columns of the fused qkv projection.
    scale = head_dim ** -0.5
    qscale = jnp.concatenate([jnp.full((D,), scale, f32), jnp.ones((2 * D,), f32)])
    qkv_w = params["qkv_w"] * qscale
    qkv_b = params["qkv_b"] * qscale

    pred_w, pred_b = params["pred_w"], params["pred_b"]
    if Ppad != P:
        pred_w = jnp.pad(pred_w, ((0, 0), (0, Ppad - P)))
        pred_b = jnp.pad(pred_b, ((0, 0), (0, Ppad - P)))

    def vec3(a):  # (depth, X) -> (depth, 1, X): keeps blocks (8,128)-rule clean
        return a.reshape(depth, 1, -1)

    # Matmul weights in the compute dtype; biases / LN params / pos stay f32.
    arrs = {
        "embed_w": params["embed_w"].astype(cdt),
        "embed_b": params["embed_b"].astype(f32),
        "pos":     pos.astype(f32),
        "n1g":     vec3(params["n1g"].astype(f32)),
        "n1b":     vec3(params["n1b"].astype(f32)),
        "qkv_w":   qkv_w.astype(cdt),
        "qkv_b":   vec3(qkv_b.astype(f32)),
        "proj_w":  params["proj_w"].astype(cdt),
        "proj_b":  vec3(params["proj_b"].astype(f32)),
        "n2g":     vec3(params["n2g"].astype(f32)),
        "n2b":     vec3(params["n2b"].astype(f32)),
        "fc1_w":   params["fc1_w"].astype(cdt),
        "fc1_b":   vec3(params["fc1_b"].astype(f32)),
        "fc2_w":   params["fc2_w"].astype(cdt),
        "fc2_b":   vec3(params["fc2_b"].astype(f32)),
        "nfg":     params["nfg"].astype(f32),
        "nfb":     params["nfb"].astype(f32),
        "pred_w":  pred_w.astype(cdt),
        "pred_b":  pred_b.astype(f32),
    }

    if mlp_chunk >= hid:
        mchunk = hid
    else:
        mchunk = max(128, (mlp_chunk // 128) * 128)

    if vmem_limit_bytes is None:
        vmem_limit_bytes = _default_vmem_limit()

    kernel = _make_kernel(num_heads, cdt, N, mchunk)

    # advisory cost estimate; per-layer weights are re-streamed once per batch block.
    n_bblk = B // block_b
    M_tot = B * Npad
    flops = 2 * M_tot * E * D + 2 * M_tot * D * Ppad
    flops += depth * (2 * M_tot * D * (3 * D) + 2 * M_tot * D * D
                      + 4 * M_tot * D * hid
                      + 4 * B * num_heads * Npad * Npad * head_dim)
    transcendentals = depth * (B * num_heads * Npad * Npad + M_tot * hid)
    const_bytes = sum(int(np.prod(arrs[k].shape)) * arrs[k].dtype.itemsize
                      for k in _CONST_KEYS)
    layer_bytes = sum(int(np.prod(arrs[k].shape)) * arrs[k].dtype.itemsize
                      for k in PARAM_ORDER if k not in _CONST_KEYS)
    bytes_accessed = (xp.size * xp.dtype.itemsize
                      + B * Npad * Ppad * np.dtype(out_dtype).itemsize
                      + const_bytes + layer_bytes * n_bblk)
    cost = pl.CostEstimate(flops=int(flops), transcendentals=int(transcendentals),
                           bytes_accessed=int(bytes_accessed))

    def run(single_buffer_constants):
        def spec(shape, idx, const=False):
            if const and single_buffer_constants:
                # constant block index -> one buffer is enough; saves VMEM headroom.
                return pl.BlockSpec(shape, idx, pipeline_mode=pl.Buffered(1))
            return pl.BlockSpec(shape, idx)

        specs = {
            # global (layer-independent) tensors: fetched once, single-buffered
            "embed_w": spec((E, D),        lambda b, d: (0, 0), True),
            "embed_b": spec((1, D),        lambda b, d: (0, 0), True),
            "pos":     spec((Npad, D),     lambda b, d: (0, 0), True),
            "nfg":     spec((1, D),        lambda b, d: (0, 0), True),
            "nfb":     spec((1, D),        lambda b, d: (0, 0), True),
            "pred_w":  spec((D, Ppad),     lambda b, d: (0, 0), True),
            "pred_b":  spec((1, Ppad),     lambda b, d: (0, 0), True),
            # per-layer tensors: streamed (double-buffered) along the depth axis
            "n1g":     spec((1, 1, D),     lambda b, d: (d, 0, 0)),
            "n1b":     spec((1, 1, D),     lambda b, d: (d, 0, 0)),
            "qkv_w":   spec((1, D, 3 * D), lambda b, d: (d, 0, 0)),
            "qkv_b":   spec((1, 1, 3 * D), lambda b, d: (d, 0, 0)),
            "proj_w":  spec((1, D, D),     lambda b, d: (d, 0, 0)),
            "proj_b":  spec((1, 1, D),     lambda b, d: (d, 0, 0)),
            "n2g":     spec((1, 1, D),     lambda b, d: (d, 0, 0)),
            "n2b":     spec((1, 1, D),     lambda b, d: (d, 0, 0)),
            "fc1_w":   spec((1, D, hid),   lambda b, d: (d, 0, 0)),
            "fc1_b":   spec((1, 1, hid),   lambda b, d: (d, 0, 0)),
            "fc2_w":   spec((1, hid, D),   lambda b, d: (d, 0, 0)),
            "fc2_b":   spec((1, 1, D),     lambda b, d: (d, 0, 0)),
        }
        in_specs = [pl.BlockSpec((block_b, Npad, E), lambda b, d: (b, 0, 0))] + \
                   [specs[k] for k in PARAM_ORDER]
        out_spec = pl.BlockSpec((block_b, Npad, Ppad), lambda b, d: (b, 0, 0))

        return pl.pallas_call(
            kernel,
            out_shape=jax.ShapeDtypeStruct((B, Npad, Ppad), out_dtype),
            grid_spec=pltpu.PrefetchScalarGridSpec(
                num_scalar_prefetch=0,
                grid=(B // block_b, depth),
                in_specs=in_specs,
                out_specs=out_spec,
                scratch_shapes=[pltpu.VMEM((block_b, Npad, D), jnp.float32)],
            ),
            compiler_params=pltpu.CompilerParams(
                dimension_semantics=("parallel", "arbitrary"),
                vmem_limit_bytes=int(vmem_limit_bytes)),
            cost_estimate=cost,
        )(xp, *[arrs[k] for k in PARAM_ORDER])

    try:
        out = run(True)
    except Exception:
        # pipeline_mode=pl.Buffered(1) unsupported by this Pallas build; retry default.
        out = run(False)
    return out[:, :N, :P]


# ------------------------- pure-JAX reference -------------------------
def mae_decoder_ref(x, params, *, depth, num_heads, compute_dtype=jnp.bfloat16):
    cdt = compute_dtype
    D = params["embed_w"].shape[1]
    head_dim = D // num_heads
    scale = head_dim ** -0.5

    def dot(a, w):
        return jnp.dot(a.astype(cdt), w.astype(cdt), preferred_element_type=jnp.float32)

    h = dot(x, params["embed_w"]) + params["embed_b"]
    h = h + params["pos"][None]
    for d in range(depth):
        y = _layer_norm(h, params["n1g"][d], params["n1b"][d])
        qkv = dot(y, params["qkv_w"][d]) + params["qkv_b"][d]
        outs = []
        for hh in range(num_heads):
            lo = hh * head_dim
            q = qkv[..., lo:lo + head_dim] * scale
            k = qkv[..., D + lo: D + lo + head_dim]
            v = qkv[..., 2 * D + lo: 2 * D + lo + head_dim]
            s = jnp.einsum("bnd,bmd->bnm", q.astype(cdt), k.astype(cdt),
                           preferred_element_type=jnp.float32)
            s = s - jnp.max(s, axis=-1, keepdims=True)
            p = jnp.exp(s)
            p = p / jnp.sum(p, axis=-1, keepdims=True)
            outs.append(jnp.einsum("bnm,bmd->bnd", p.astype(cdt), v.astype(cdt),
                                   preferred_element_type=jnp.float32))
        attn = jnp.concatenate(outs, axis=-1)
        h = h + dot(attn, params["proj_w"][d]) + params["proj_b"][d]

        y = _layer_norm(h, params["n2g"][d], params["n2b"][d])
        m = jax.nn.gelu(dot(y, params["fc1_w"][d]) + params["fc1_b"][d], approximate=True)
        h = h + dot(m, params["fc2_w"][d]) + params["fc2_b"][d]

    y = _layer_norm(h, params["nfg"], params["nfb"])
    return dot(y, params["pred_w"]) + params["pred_b"]


def make_params(key, *, embed_dim, dec_dim, depth, mlp_ratio, patch_size, in_channels, num_patch):
    hid = int(dec_dim * mlp_ratio)
    pred_dim = patch_size ** 2 * in_channels
    ks = jax.random.split(key, 16)
    f32 = jnp.float32

    def rnd(k, shape, s=0.02):
        return jax.random.normal(k, shape, dtype=f32) * s

    return {
        "embed_w": rnd(ks[0], (embed_dim, dec_dim)),
        "embed_b": rnd(ks[1], (1, dec_dim)),
        "pos":     rnd(ks[2], (num_patch, dec_dim)),
        "n1g": jnp.ones((depth, dec_dim), f32),
        "n1b": jnp.zeros((depth, dec_dim), f32),
        "qkv_w": rnd(ks[3], (depth, dec_dim, 3 * dec_dim)),
        "qkv_b": rnd(ks[4], (depth, 3 * dec_dim)),
        "proj_w": rnd(ks[5], (depth, dec_dim, dec_dim)),
        "proj_b": rnd(ks[6], (depth, dec_dim)),
        "n2g": jnp.ones((depth, dec_dim), f32),
        "n2b": jnp.zeros((depth, dec_dim), f32),
        "fc1_w": rnd(ks[7], (depth, dec_dim, hid)),
        "fc1_b": rnd(ks[8], (depth, hid)),
        "fc2_w": rnd(ks[9], (depth, hid, dec_dim)),
        "fc2_b": rnd(ks[10], (depth, dec_dim)),
        "nfg": jnp.ones((1, dec_dim), f32),
        "nfb": jnp.zeros((1, dec_dim), f32),
        "pred_w": rnd(ks[11], (dec_dim, pred_dim)),
        "pred_b": rnd(ks[12], (1, pred_dim)),
    }


if __name__ == "__main__":
    # Small, self-consistent MAE decoder configuration.
    B = 2                 # batch
    embed_dim = 32        # encoder embedding dim (input features)
    dec_dim = 64          # decoder_embed_dim
    depth = 2             # decoder_depth
    num_heads = 4         # decoder_num_heads
    patch_size = 4
    in_channels = 3
    mlp_ratio = 4.0
    num_patch = 8         # tokens

    key = jax.random.PRNGKey(0)
    kx, kp = jax.random.split(key)
    x = jax.random.normal(kx, (B, num_patch, embed_dim), dtype=jnp.float32)
    params = make_params(kp, embed_dim=embed_dim, dec_dim=dec_dim, depth=depth,
                         mlp_ratio=mlp_ratio, patch_size=patch_size,
                         in_channels=in_channels, num_patch=num_patch)

    out = mae_decoder_pallas(x, params, depth=depth, num_heads=num_heads,
                             compute_dtype=jnp.bfloat16, out_dtype=jnp.bfloat16)
    out = jax.block_until_ready(out)

    ref = jax.block_until_ready(
        mae_decoder_ref(x, params, depth=depth, num_heads=num_heads,
                        compute_dtype=jnp.bfloat16))
    assert out.shape == (B, num_patch, patch_size ** 2 * in_channels)
    np.testing.assert_allclose(np.asarray(out, dtype=np.float32), np.asarray(ref),
                               rtol=2e-2, atol=3e-3)

    print("KERNEL_OK")
</pallas_src>

<mosaic_0001>
module attributes {stable_mosaic.version = 11 : i64} {
  func.func @kernel(%arg0: i32, %arg1: i32, %arg2: memref<1x8x32xf32, #tpu.memory_space<vmem>>, %arg3: memref<32x64xbf16, #tpu.memory_space<vmem>>, %arg4: memref<1x64xf32, #tpu.memory_space<vmem>>, %arg5: memref<8x64xf32, #tpu.memory_space<vmem>>, %arg6: memref<1x1x64xf32, #tpu.memory_space<vmem>>, %arg7: memref<1x1x64xf32, #tpu.memory_space<vmem>>, %arg8: memref<1x64x192xbf16, #tpu.memory_space<vmem>>, %arg9: memref<1x1x192xf32, #tpu.memory_space<vmem>>, %arg10: memref<1x64x64xbf16, #tpu.memory_space<vmem>>, %arg11: memref<1x1x64xf32, #tpu.memory_space<vmem>>, %arg12: memref<1x1x64xf32, #tpu.memory_space<vmem>>, %arg13: memref<1x1x64xf32, #tpu.memory_space<vmem>>, %arg14: memref<1x64x256xbf16, #tpu.memory_space<vmem>>, %arg15: memref<1x1x256xf32, #tpu.memory_space<vmem>>, %arg16: memref<1x256x64xbf16, #tpu.memory_space<vmem>>, %arg17: memref<1x1x64xf32, #tpu.memory_space<vmem>>, %arg18: memref<1x64xf32, #tpu.memory_space<vmem>>, %arg19: memref<1x64xf32, #tpu.memory_space<vmem>>, %arg20: memref<64x128xbf16, #tpu.memory_space<vmem>>, %arg21: memref<1x128xf32, #tpu.memory_space<vmem>>, %arg22: memref<1x8x128xbf16, #tpu.memory_space<vmem>>, %arg23: memref<1x8x64xf32, #tpu.memory_space<vmem>>) attributes {dimension_semantics = [#tpu.dimension_semantics<parallel>, #tpu.dimension_semantics<arbitrary>], iteration_bounds = array<i64: 2, 2>, scalar_prefetch = 0 : i64, scratch_operands = 1 : i64, tpu.core_type = #tpu.core_type<tc>, window_params = [{transform_indices = @transform_0, window_bounds = array<i64: 1, 8, 32>}, {pipeline_mode = #tpu.pipeline_mode<synchronous>, transform_indices = @transform_1, window_bounds = array<i64: 32, 64>}, {pipeline_mode = #tpu.pipeline_mode<synchronous>, transform_indices = @transform_2, window_bounds = array<i64: 1, 64>}, {pipeline_mode = #tpu.pipeline_mode<synchronous>, transform_indices = @transform_3, window_bounds = array<i64: 8, 64>}, {transform_indices = @transform_4, window_bounds = array<i64: 1, 1, 64>}, {transform_indices = @transform_5, window_bounds = array<i64: 1, 1, 64>}, {transform_indices = @transform_6, window_bounds = array<i64: 1, 64, 192>}, {transform_indices = @transform_7, window_bounds = array<i64: 1, 1, 192>}, {transform_indices = @transform_8, window_bounds = array<i64: 1, 64, 64>}, {transform_indices = @transform_9, window_bounds = array<i64: 1, 1, 64>}, {transform_indices = @transform_10, window_bounds = array<i64: 1, 1, 64>}, {transform_indices = @transform_11, window_bounds = array<i64: 1, 1, 64>}, {transform_indices = @transform_12, window_bounds = array<i64: 1, 64, 256>}, {transform_indices = @transform_13, window_bounds = array<i64: 1, 1, 256>}, {transform_indices = @transform_14, window_bounds = array<i64: 1, 256, 64>}, {transform_indices = @transform_15, window_bounds = array<i64: 1, 1, 64>}, {pipeline_mode = #tpu.pipeline_mode<synchronous>, transform_indices = @transform_16, window_bounds = array<i64: 1, 64>}, {pipeline_mode = #tpu.pipeline_mode<synchronous>, transform_indices = @transform_17, window_bounds = array<i64: 1, 64>}, {pipeline_mode = #tpu.pipeline_mode<synchronous>, transform_indices = @transform_18, window_bounds = array<i64: 64, 128>}, {pipeline_mode = #tpu.pipeline_mode<synchronous>, transform_indices = @transform_19, window_bounds = array<i64: 1, 128>}, {transform_indices = @transform_20, window_bounds = array<i64: 1, 8, 128>}]} {
    %c0_i32 = arith.constant 0 : i32
    %0 = arith.cmpi eq, %arg1, %c0_i32 : i32
    %1 = arith.extui %0 : i1 to i32
    %c0_i32_0 = arith.constant 0 : i32
    %2 = arith.cmpi ne, %1, %c0_i32_0 : i32
    scf.if %2 {
      %c0_76 = arith.constant 0 : index
      %c0_77 = arith.constant 0 : index
      %c0_78 = arith.constant 0 : index
      %173 = vector.load %arg2[%c0_76, %c0_77, %c0_78] : memref<1x8x32xf32, #tpu.memory_space<vmem>>, vector<1x8x32xf32>
      %174 = vector.shape_cast %173 : vector<1x8x32xf32> to vector<8x32xf32>
      %c0_79 = arith.constant 0 : index
      %c0_80 = arith.constant 0 : index
      %175 = vector.load %arg3[%c0_79, %c0_80] : memref<32x64xbf16, #tpu.memory_space<vmem>>, vector<32x64xbf16>
      %176 = arith.truncf %174 : vector<8x32xf32> to vector<8x32xbf16>
      %cst_81 = arith.constant dense<0.000000e+00> : vector<8x64xf32>
      %177 = tpu.matmul %176, %175, %cst_81 {dimension_numbers = #tpu.dot_dimension_numbers<[1], [0], [0], [1], [0, 0, 1, 1], [], []>} : vector<8x32xbf16>, vector<32x64xbf16>, vector<8x64xf32> -> vector<8x64xf32>
      %c0_82 = arith.constant 0 : index
      %c0_83 = arith.constant 0 : index
      %178 = vector.load %arg4[%c0_82, %c0_83] : memref<1x64xf32, #tpu.memory_space<vmem>>, vector<1x64xf32>
      %179 = vector.broadcast %178 : vector<1x64xf32> to vector<8x64xf32>
      %180 = arith.addf %177, %179 : vector<8x64xf32>
      %181 = vector.shape_cast %180 : vector<8x64xf32> to vector<1x8x64xf32>
      %c0_84 = arith.constant 0 : index
      %c0_85 = arith.constant 0 : index
      %182 = vector.load %arg5[%c0_84, %c0_85] : memref<8x64xf32, #tpu.memory_space<vmem>>, vector<8x64xf32>
      %183 = vector.shape_cast %182 : vector<8x64xf32> to vector<1x8x64xf32>
      %184 = arith.addf %181, %183 : vector<1x8x64xf32>
      %c0_86 = arith.constant 0 : index
      %c0_87 = arith.constant 0 : index
      %c0_88 = arith.constant 0 : index
      %185 = vector.load %arg23[%c0_86, %c0_87, %c0_88] : memref<1x8x64xf32, #tpu.memory_space<vmem>>, vector<1x8x64xf32>
      tpu.vector_store %arg23[%c0_86, %c0_87, %c0_88], %184 {strides = array<i32>} : memref<1x8x64xf32, #tpu.memory_space<vmem>>, vector<1x8x64xf32>,
    } else {
    }
    %c0 = arith.constant 0 : index
    %c0_1 = arith.constant 0 : index
    %c0_2 = arith.constant 0 : index
    %3 = vector.load %arg23[%c0, %c0_1, %c0_2] : memref<1x8x64xf32, #tpu.memory_space<vmem>>, vector<1x8x64xf32>
    %4 = vector.shape_cast %3 : vector<1x8x64xf32> to vector<8x64xf32>
    %c0_3 = arith.constant 0 : index
    %c0_4 = arith.constant 0 : index
    %c0_5 = arith.constant 0 : index
    %5 = vector.load %arg6[%c0_3, %c0_4, %c0_5] : memref<1x1x64xf32, #tpu.memory_space<vmem>>, vector<1x1x64xf32>
    %6 = vector.shape_cast %5 : vector<1x1x64xf32> to vector<1x64xf32>
    %c0_6 = arith.constant 0 : index
    %c0_7 = arith.constant 0 : index
    %c0_8 = arith.constant 0 : index
    %7 = vector.load %arg7[%c0_6, %c0_7, %c0_8] : memref<1x1x64xf32, #tpu.memory_space<vmem>>, vector<1x1x64xf32>
    %8 = vector.shape_cast %7 : vector<1x1x64xf32> to vector<1x64xf32>
    %cst = arith.constant dense<0.000000e+00> : vector<8xf32>
    %9 = vector.multi_reduction <add>, %4, %cst [1] : vector<8x64xf32> to vector<8xf32>
    %10 = vector.shape_cast %9 : vector<8xf32> to vector<8x1xf32>
    %cst_9 = arith.constant 6.400000e+01 : f32
    %11 = vector.broadcast %cst_9 : f32 to vector<8x1xf32>
    %12 = arith.divf %10, %11 : vector<8x1xf32>
    %13 = vector.broadcast %12 : vector<8x1xf32> to vector<8x64xf32>
    %14 = arith.subf %4, %13 : vector<8x64xf32>
    %15 = arith.mulf %14, %14 : vector<8x64xf32>
    %cst_10 = arith.constant dense<0.000000e+00> : vector<8xf32>
    %16 = vector.multi_reduction <add>, %15, %cst_10 [1] : vector<8x64xf32> to vector<8xf32>
    %17 = vector.shape_cast %16 : vector<8xf32> to vector<8x1xf32>
    %cst_11 = arith.constant 6.400000e+01 : f32
    %18 = vector.broadcast %cst_11 : f32 to vector<8x1xf32>
    %19 = arith.divf %17, %18 : vector<8x1xf32>
    %cst_12 = arith.constant 9.99999974E-6 : f32
    %20 = vector.broadcast %cst_12 : f32 to vector<8x1xf32>
    %21 = arith.addf %19, %20 : vector<8x1xf32>
    %22 = math.rsqrt %21 : vector<8x1xf32>
    %23 = vector.broadcast %22 : vector<8x1xf32> to vector<8x64xf32>
    %24 = arith.mulf %14, %23 : vector<8x64xf32>
    %25 = vector.broadcast %6 : vector<1x64xf32> to vector<8x64xf32>
    %26 = arith.mulf %24, %25 : vector<8x64xf32>
    %27 = vector.broadcast %8 : vector<1x64xf32> to vector<8x64xf32>
    %28 = arith.addf %26, %27 : vector<8x64xf32>
    %c0_13 = arith.constant 0 : index
    %c0_14 = arith.constant 0 : index
    %c0_15 = arith.constant 0 : index
    %29 = vector.load %arg8[%c0_13, %c0_14, %c0_15] : memref<1x64x192xbf16, #tpu.memory_space<vmem>>, vector<1x64x192xbf16>
    %30 = vector.shape_cast %29 : vector<1x64x192xbf16> to vector<64x192xbf16>
    %31 = arith.truncf %28 : vector<8x64xf32> to vector<8x64xbf16>
    %cst_16 = arith.constant dense<0.000000e+00> : vector<8x192xf32>
    %32 = tpu.matmul %31, %30, %cst_16 {dimension_numbers = #tpu.dot_dimension_numbers<[1], [0], [0], [1], [0, 0, 1, 1], [], []>} : vector<8x64xbf16>, vector<64x192xbf16>, vector<8x192xf32> -> vector<8x192xf32>
    %c0_17 = arith.constant 0 : index
    %c0_18 = arith.constant 0 : index
    %c0_19 = arith.constant 0 : index
    %33 = vector.load %arg9[%c0_17, %c0_18, %c0_19] : memref<1x1x192xf32, #tpu.memory_space<vmem>>, vector<1x1x192xf32>
    %34 = vector.shape_cast %33 : vector<1x1x192xf32> to vector<1x192xf32>
    %35 = vector.broadcast %34 : vector<1x192xf32> to vector<8x192xf32>
    %36 = arith.addf %32, %35 : vector<8x192xf32>
    %37 = arith.truncf %36 : vector<8x192xf32> to vector<8x192xbf16>
    %38 = vector.shape_cast %37 : vector<8x192xbf16> to vector<1x8x192xbf16>
    %39 = vector.extract_strided_slice %38 {offsets = [0, 0, 0], sizes = [1, 8, 16], strides = [1, 1, 1]} : vector<1x8x192xbf16> to vector<1x8x16xbf16>
    %40 = vector.extract_strided_slice %38 {offsets = [0, 0, 64], sizes = [1, 8, 16], strides = [1, 1, 1]} : vector<1x8x192xbf16> to vector<1x8x16xbf16>
    %41 = vector.extract_strided_slice %38 {offsets = [0, 0, 128], sizes = [1, 8, 16], strides = [1, 1, 1]} : vector<1x8x192xbf16> to vector<1x8x16xbf16>
    "tpu.trace_start"() <{level = 10 : i32, message = "bnd,bmd->bnm"}> : () -> ()
    %cst_20 = arith.constant dense<0.000000e+00> : vector<1x8x8xf32>
    %42 = tpu.matmul %39, %40, %cst_20 {dimension_numbers = #tpu.dot_dimension_numbers<[2], [2], [1], [1], [0, 0, 0, 1, 1, 1], [0], [0]>} : vector<1x8x16xbf16>, vector<1x8x16xbf16>, vector<1x8x8xf32> -> vector<1x8x8xf32>
    "tpu.trace_stop"() : () -> ()
    %cst_21 = arith.constant dense<0xFF800000> : vector<1x8xf32>
    %43 = vector.multi_reduction <maximumf>, %42, %cst_21 [2] : vector<1x8x8xf32> to vector<1x8xf32>
    %44 = vector.shape_cast %43 : vector<1x8xf32> to vector<1x8x1xf32>
    %45 = vector.broadcast %44 : vector<1x8x1xf32> to vector<1x8x8xf32>
    %46 = arith.subf %42, %45 : vector<1x8x8xf32>
    %47 = math.exp %46 : vector<1x8x8xf32>
    %cst_22 = arith.constant dense<0.000000e+00> : vector<1x8xf32>
    %48 = vector.multi_reduction <add>, %47, %cst_22 [2] : vector<1x8x8xf32> to vector<1x8xf32>
    %49 = vector.shape_cast %48 : vector<1x8xf32> to vector<1x8x1xf32>
    %50 = tpu.reciprocal %49 {approx = true} : vector<1x8x1xf32> -> vector<1x8x1xf32>
    %51 = arith.truncf %47 : vector<1x8x8xf32> to vector<1x8x8xbf16>
    "tpu.trace_start"() <{level = 10 : i32, message = "bnm,bmd->bnd"}> : () -> ()
    %cst_23 = arith.constant dense<0.000000e+00> : vector<1x8x16xf32>
    %52 = tpu.matmul %51, %41, %cst_23 {dimension_numbers = #tpu.dot_dimension_numbers<[2], [1], [1], [2], [0, 0, 0, 1, 1, 2], [0], [0]>} : vector<1x8x8xbf16>, vector<1x8x16xbf16>, vector<1x8x16xf32> -> vector<1x8x16xf32>
    "tpu.trace_stop"() : () -> ()
    %53 = vector.broadcast %50 : vector<1x8x1xf32> to vector<1x8x16xf32>
    %54 = arith.mulf %52, %53 : vector<1x8x16xf32>
    %55 = vector.extract_strided_slice %38 {offsets = [0, 0, 16], sizes = [1, 8, 16], strides = [1, 1, 1]} : vector<1x8x192xbf16> to vector<1x8x16xbf16>
    %56 = vector.extract_strided_slice %38 {offsets = [0, 0, 80], sizes = [1, 8, 16], strides = [1, 1, 1]} : vector<1x8x192xbf16> to vector<1x8x16xbf16>
    %57 = vector.extract_strided_slice %38 {offsets = [0, 0, 144], sizes = [1, 8, 16], strides = [1, 1, 1]} : vector<1x8x192xbf16> to vector<1x8x16xbf16>
    "tpu.trace_start"() <{level = 10 : i32, message = "bnd,bmd->bnm"}> : () -> ()
    %cst_24 = arith.constant dense<0.000000e+00> : vector<1x8x8xf32>
    %58 = tpu.matmul %55, %56, %cst_24 {dimension_numbers = #tpu.dot_dimension_numbers<[2], [2], [1], [1], [0, 0, 0, 1, 1, 1], [0], [0]>} : vector<1x8x16xbf16>, vector<1x8x16xbf16>, vector<1x8x8xf32> -> vector<1x8x8xf32>
    "tpu.trace_stop"() : () -> ()
    %cst_25 = arith.constant dense<0xFF800000> : vector<1x8xf32>
    %59 = vector.multi_reduction <maximumf>, %58, %cst_25 [2] : vector<1x8x8xf32> to vector<1x8xf32>
    %60 = vector.shape_cast %59 : vector<1x8xf32> to vector<1x8x1xf32>
    %61 = vector.broadcast %60 : vector<1x8x1xf32> to vector<1x8x8xf32>
    %62 = arith.subf %58, %61 : vector<1x8x8xf32>
    %63 = math.exp %62 : vector<1x8x8xf32>
    %cst_26 = arith.constant dense<0.000000e+00> : vector<1x8xf32>
    %64 = vector.multi_reduction <add>, %63, %cst_26 [2] : vector<1x8x8xf32> to vector<1x8xf32>
    %65 = vector.shape_cast %64 : vector<1x8xf32> to vector<1x8x1xf32>
    %66 = tpu.reciprocal %65 {approx = true} : vector<1x8x1xf32> -> vector<1x8x1xf32>
    %67 = arith.truncf %63 : vector<1x8x8xf32> to vector<1x8x8xbf16>
    "tpu.trace_start"() <{level = 10 : i32, message = "bnm,bmd->bnd"}> : () -> ()
    %cst_27 = arith.constant dense<0.000000e+00> : vector<1x8x16xf32>
    %68 = tpu.matmul %67, %57, %cst_27 {dimension_numbers = #tpu.dot_dimension_numbers<[2], [1], [1], [2], [0, 0, 0, 1, 1, 2], [0], [0]>} : vector<1x8x8xbf16>, vector<1x8x16xbf16>, vector<1x8x16xf32> -> vector<1x8x16xf32>
    "tpu.trace_stop"() : () -> ()
    %69 = vector.broadcast %66 : vector<1x8x1xf32> to vector<1x8x16xf32>
    %70 = arith.mulf %68, %69 : vector<1x8x16xf32>
    %71 = vector.extract_strided_slice %38 {offsets = [0, 0, 32], sizes = [1, 8, 16], strides = [1, 1, 1]} : vector<1x8x192xbf16> to vector<1x8x16xbf16>
    %72 = vector.extract_strided_slice %38 {offsets = [0, 0, 96], sizes = [1, 8, 16], strides = [1, 1, 1]} : vector<1x8x192xbf16> to vector<1x8x16xbf16>
    %73 = vector.extract_strided_slice %38 {offsets = [0, 0, 160], sizes = [1, 8, 16], strides = [1, 1, 1]} : vector<1x8x192xbf16> to vector<1x8x16xbf16>
    "tpu.trace_start"() <{level = 10 : i32, message = "bnd,bmd->bnm"}> : () -> ()
    %cst_28 = arith.constant dense<0.000000e+00> : vector<1x8x8xf32>
    %74 = tpu.matmul %71, %72, %cst_28 {dimension_numbers = #tpu.dot_dimension_numbers<[2], [2], [1], [1], [0, 0, 0, 1, 1, 1], [0], [0]>} : vector<1x8x16xbf16>, vector<1x8x16xbf16>, vector<1x8x8xf32> -> vector<1x8x8xf32>
    "tpu.trace_stop"() : () -> ()
    %cst_29 = arith.constant dense<0xFF800000> : vector<1x8xf32>
    %75 = vector.multi_reduction <maximumf>, %74, %cst_29 [2] : vector<1x8x8xf32> to vector<1x8xf32>
    %76 = vector.shape_cast %75 : vector<1x8xf32> to vector<1x8x1xf32>
    %77 = vector.broadcast %76 : vector<1x8x1xf32> to vector<1x8x8xf32>
    %78 = arith.subf %74, %77 : vector<1x8x8xf32>
    %79 = math.exp %78 : vector<1x8x8xf32>
    %cst_30 = arith.constant dense<0.000000e+00> : vector<1x8xf32>
    %80 = vector.multi_reduction <add>, %79, %cst_30 [2] : vector<1x8x8xf32> to vector<1x8xf32>
    %81 = vector.shape_cast %80 : vector<1x8xf32> to vector<1x8x1xf32>
    %82 = tpu.reciprocal %81 {approx = true} : vector<1x8x1xf32> -> vector<1x8x1xf32>
    %83 = arith.truncf %79 : vector<1x8x8xf32> to vector<1x8x8xbf16>
    "tpu.trace_start"() <{level = 10 : i32, message = "bnm,bmd->bnd"}> : () -> ()
    %cst_31 = arith.constant dense<0.000000e+00> : vector<1x8x16xf32>
    %84 = tpu.matmul %83, %73, %cst_31 {dimension_numbers = #tpu.dot_dimension_numbers<[2], [1], [1], [2], [0, 0, 0, 1, 1, 2], [0], [0]>} : vector<1x8x8xbf16>, vector<1x8x16xbf16>, vector<1x8x16xf32> -> vector<1x8x16xf32>
    "tpu.trace_stop"() : () -> ()
    %85 = vector.broadcast %82 : vector<1x8x1xf32> to vector<1x8x16xf32>
    %86 = arith.mulf %84, %85 : vector<1x8x16xf32>
    %87 = vector.extract_strided_slice %38 {offsets = [0, 0, 48], sizes = [1, 8, 16], strides = [1, 1, 1]} : vector<1x8x192xbf16> to vector<1x8x16xbf16>
    %88 = vector.extract_strided_slice %38 {offsets = [0, 0, 112], sizes = [1, 8, 16], strides = [1, 1, 1]} : vector<1x8x192xbf16> to vector<1x8x16xbf16>
    %89 = vector.extract_strided_slice %38 {offsets = [0, 0, 176], sizes = [1, 8, 16], strides = [1, 1, 1]} : vector<1x8x192xbf16> to vector<1x8x16xbf16>
    "tpu.trace_start"() <{level = 10 : i32, message = "bnd,bmd->bnm"}> : () -> ()
    %cst_32 = arith.constant dense<0.000000e+00> : vector<1x8x8xf32>
    %90 = tpu.matmul %87, %88, %cst_32 {dimension_numbers = #tpu.dot_dimension_numbers<[2], [2], [1], [1], [0, 0, 0, 1, 1, 1], [0], [0]>} : vector<1x8x16xbf16>, vector<1x8x16xbf16>, vector<1x8x8xf32> -> vector<1x8x8xf32>
    "tpu.trace_stop"() : () -> ()
    %cst_33 = arith.constant dense<0xFF800000> : vector<1x8xf32>
    %91 = vector.multi_reduction <maximumf>, %90, %cst_33 [2] : vector<1x8x8xf32> to vector<1x8xf32>
    %92 = vector.shape_cast %91 : vector<1x8xf32> to vector<1x8x1xf32>
    %93 = vector.broadcast %92 : vector<1x8x1xf32> to vector<1x8x8xf32>
    %94 = arith.subf %90, %93 : vector<1x8x8xf32>
    %95 = math.exp %94 : vector<1x8x8xf32>
    %cst_34 = arith.constant dense<0.000000e+00> : vector<1x8xf32>
    %96 = vector.multi_reduction <add>, %95, %cst_34 [2] : vector<1x8x8xf32> to vector<1x8xf32>
    %97 = vector.shape_cast %96 : vector<1x8xf32> to vector<1x8x1xf32>
    %98 = tpu.reciprocal %97 {approx = true} : vector<1x8x1xf32> -> vector<1x8x1xf32>
    %99 = arith.truncf %95 : vector<1x8x8xf32> to vector<1x8x8xbf16>
    "tpu.trace_start"() <{level = 10 : i32, message = "bnm,bmd->bnd"}> : () -> ()
    %cst_35 = arith.constant dense<0.000000e+00> : vector<1x8x16xf32>
    %100 = tpu.matmul %99, %89, %cst_35 {dimension_numbers = #tpu.dot_dimension_numbers<[2], [1], [1], [2], [0, 0, 0, 1, 1, 2], [0], [0]>} : vector<1x8x8xbf16>, vector<1x8x16xbf16>, vector<1x8x16xf32> -> vector<1x8x16xf32>
    "tpu.trace_stop"() : () -> ()
    %101 = vector.broadcast %98 : vector<1x8x1xf32> to vector<1x8x16xf32>
    %102 = arith.mulf %100, %101 : vector<1x8x16xf32>
    %103 = tpu.concatenate %54, %70, %86, %102 in 2 : vector<1x8x16xf32>, vector<1x8x16xf32>, vector<1x8x16xf32>, vector<1x8x16xf32> -> vector<1x8x64xf32>
    %104 = vector.shape_cast %103 : vector<1x8x64xf32> to vector<8x64xf32>
    %c0_36 = arith.constant 0 : index
    %c0_37 = arith.constant 0 : index
    %c0_38 = arith.constant 0 : index
    %105 = vector.load %arg10[%c0_36, %c0_37, %c0_38] : memref<1x64x64xbf16, #tpu.memory_space<vmem>>, vector<1x64x64xbf16>
    %106 = vector.shape_cast %105 : vector<1x64x64xbf16> to vector<64x64xbf16>
    %107 = arith.truncf %104 : vector<8x64xf32> to vector<8x64xbf16>
    %cst_39 = arith.constant dense<0.000000e+00> : vector<8x64xf32>
    %108 = tpu.matmul %107, %106, %cst_39 {dimension_numbers = #tpu.dot_dimension_numbers<[1], [0], [0], [1], [0, 0, 1, 1], [], []>} : vector<8x64xbf16>, vector<64x64xbf16>, vector<8x64xf32> -> vector<8x64xf32>
    %109 = arith.addf %4, %108 : vector<8x64xf32>
    %c0_40 = arith.constant 0 : index
    %c0_41 = arith.constant 0 : index
    %c0_42 = arith.constant 0 : index
    %110 = vector.load %arg11[%c0_40, %c0_41, %c0_42] : memref<1x1x64xf32, #tpu.memory_space<vmem>>, vector<1x1x64xf32>
    %111 = vector.shape_cast %110 : vector<1x1x64xf32> to vector<1x64xf32>
    %112 = vector.broadcast %111 : vector<1x64xf32> to vector<8x64xf32>
    %113 = arith.addf %109, %112 : vector<8x64xf32>
    %c0_43 = arith.constant 0 : index
    %c0_44 = arith.constant 0 : index
    %c0_45 = arith.constant 0 : index
    %114 = vector.load %arg12[%c0_43, %c0_44, %c0_45] : memref<1x1x64xf32, #tpu.memory_space<vmem>>, vector<1x1x64xf32>
    %115 = vector.shape_cast %114 : vector<1x1x64xf32> to vector<1x64xf32>
    %c0_46 = arith.constant 0 : index
    %c0_47 = arith.constant 0 : index
    %c0_48 = arith.constant 0 : index
    %116 = vector.load %arg13[%c0_46, %c0_47, %c0_48] : memref<1x1x64xf32, #tpu.memory_space<vmem>>, vector<1x1x64xf32>
    %117 = vector.shape_cast %116 : vector<1x1x64xf32> to vector<1x64xf32>
    %cst_49 = arith.constant dense<0.000000e+00> : vector<8xf32>
    %118 = vector.multi_reduction <add>, %113, %cst_49 [1] : vector<8x64xf32> to vector<8xf32>
    %119 = vector.shape_cast %118 : vector<8xf32> to vector<8x1xf32>
    %cst_50 = arith.constant 6.400000e+01 : f32
    %120 = vector.broadcast %cst_50 : f32 to vector<8x1xf32>
    %121 = arith.divf %119, %120 : vector<8x1xf32>
    %122 = vector.broadcast %121 : vector<8x1xf32> to vector<8x64xf32>
    %123 = arith.subf %113, %122 : vector<8x64xf32>
    %124 = arith.mulf %123, %123 : vector<8x64xf32>
    %cst_51 = arith.constant dense<0.000000e+00> : vector<8xf32>
    %125 = vector.multi_reduction <add>, %124, %cst_51 [1] : vector<8x64xf32> to vector<8xf32>
    %126 = vector.shape_cast %125 : vector<8xf32> to vector<8x1xf32>
    %cst_52 = arith.constant 6.400000e+01 : f32
    %127 = vector.broadcast %cst_52 : f32 to vector<8x1xf32>
    %128 = arith.divf %126, %127 : vector<8x1xf32>
    %cst_53 = arith.constant 9.99999974E-6 : f32
    %129 = vector.broadcast %cst_53 : f32 to vector<8x1xf32>
    %130 = arith.addf %128, %129 : vector<8x1xf32>
    %131 = math.rsqrt %130 : vector<8x1xf32>
    %132 = vector.broadcast %131 : vector<8x1xf32> to vector<8x64xf32>
    %133 = arith.mulf %123, %132 : vector<8x64xf32>
    %134 = vector.broadcast %115 : vector<1x64xf32> to vector<8x64xf32>
    %135 = arith.mulf %133, %134 : vector<8x64xf32>
    %136 = vector.broadcast %117 : vector<1x64xf32> to vector<8x64xf32>
    %137 = arith.addf %135, %136 : vector<8x64xf32>
    %138 = arith.truncf %137 : vector<8x64xf32> to vector<8x64xbf16>
    %c0_54 = arith.constant 0 : index
    %c0_55 = arith.constant 0 : index
    %c0_56 = arith.constant 0 : index
    %139 = vector.load %arg17[%c0_54, %c0_55, %c0_56] : memref<1x1x64xf32, #tpu.memory_space<vmem>>, vector<1x1x64xf32>
    %140 = vector.shape_cast %139 : vector<1x1x64xf32> to vector<1x64xf32>
    %141 = vector.broadcast %140 : vector<1x64xf32> to vector<8x64xf32>
    %142 = arith.addf %113, %141 : vector<8x64xf32>
    %c0_57 = arith.constant 0 : index
    %c0_58 = arith.constant 0 : index
    %c0_59 = arith.constant 0 : index
    %143 = vector.load %arg14[%c0_57, %c0_58, %c0_59] : memref<1x64x256xbf16, #tpu.memory_space<vmem>>, vector<1x64x256xbf16>
    %144 = vector.shape_cast %143 : vector<1x64x256xbf16> to vector<64x256xbf16>
    %cst_60 = arith.constant dense<0.000000e+00> : vector<8x256xf32>
    %145 = tpu.matmul %138, %144, %cst_60 {dimension_numbers = #tpu.dot_dimension_numbers<[1], [0], [0], [1], [0, 0, 1, 1], [], []>} : vector<8x64xbf16>, vector<64x256xbf16>, vector<8x256xf32> -> vector<8x256xf32>
    %c0_61 = arith.constant 0 : index
    %c0_62 = arith.constant 0 : index
    %c0_63 = arith.constant 0 : index
    %146 = vector.load %arg15[%c0_61, %c0_62, %c0_63] : memref<1x1x256xf32, #tpu.memory_space<vmem>>, vector<1x1x256xf32>
    %147 = vector.shape_cast %146 : vector<1x1x256xf32> to vector<1x256xf32>
    %148 = vector.broadcast %147 : vector<1x256xf32> to vector<8x256xf32>
    %149 = arith.addf %145, %148 : vector<8x256xf32>
    %150 = arith.mulf %149, %149 : vector<8x256xf32>
    %151 = arith.mulf %149, %150 : vector<8x256xf32>
    %cst_64 = arith.constant 4.471500e-02 : f32
    %152 = vector.broadcast %cst_64 : f32 to vector<8x256xf32>
    %153 = arith.mulf %152, %151 : vector<8x256xf32>
    %154 = arith.addf %149, %153 : vector<8x256xf32>
    %cst_65 = arith.constant 0.797884583 : f32
    %155 = vector.broadcast %cst_65 : f32 to vector<8x256xf32>
    %156 = arith.mulf %155, %154 : vector<8x256xf32>
    %157 = math.tanh %156 : vector<8x256xf32>
    %cst_66 = arith.constant 1.000000e+00 : f32
    %158 = vector.broadcast %cst_66 : f32 to vector<8x256xf32>
    %159 = arith.addf %158, %157 : vector<8x256xf32>
    %cst_67 = arith.constant 5.000000e-01 : f32
    %160 = vector.broadcast %cst_67 : f32 to vector<8x256xf32>
    %161 = arith.mulf %160, %159 : vector<8x256xf32>
    %162 = arith.mulf %149, %161 : vector<8x256xf32>
    %163 = arith.truncf %162 : vector<8x256xf32> to vector<8x256xbf16>
    %c0_68 = arith.constant 0 : index
    %c0_69 = arith.constant 0 : index
    %c0_70 = arith.constant 0 : index
    %164 = vector.load %arg16[%c0_68, %c0_69, %c0_70] : memref<1x256x64xbf16, #tpu.memory_space<vmem>>, vector<1x256x64xbf16>
    %165 = vector.shape_cast %164 : vector<1x256x64xbf16> to vector<256x64xbf16>
    %cst_71 = arith.constant dense<0.000000e+00> : vector<8x64xf32>
    %166 = tpu.matmul %163, %165, %cst_71 {dimension_numbers = #tpu.dot_dimension_numbers<[1], [0], [0], [1], [0, 0, 1, 1], [], []>} : vector<8x256xbf16>, vector<256x64xbf16>, vector<8x64xf32> -> vector<8x64xf32>
    %167 = arith.addf %142, %166 : vector<8x64xf32>
    %168 = vector.shape_cast %167 : vector<8x64xf32> to vector<1x8x64xf32>
    %c0_72 = arith.constant 0 : index
    %c0_73 = arith.constant 0 : index
    %c0_74 = arith.constant 0 : index
    %169 = vector.load %arg23[%c0_72, %c0_73, %c0_74] : memref<1x8x64xf32, #tpu.memory_space<vmem>>, vector<1x8x64xf32>
    tpu.vector_store %arg23[%c0_72, %c0_73, %c0_74], %168 {strides = array<i32>} : memref<1x8x64xf32, #tpu.memory_space<vmem>>, vector<1x8x64xf32>,
    %c1_i32 = arith.constant 1 : i32
    %170 = arith.cmpi eq, %arg1, %c1_i32 : i32
    %171 = arith.extui %170 : i1 to i32
    %c0_i32_75 = arith.constant 0 : i32
    %172 = arith.cmpi ne, %171, %c0_i32_75 : i32
    scf.if %172 {
      %c0_76 = arith.constant 0 : index
      %c0_77 = arith.constant 0 : index
      %173 = vector.load %arg18[%c0_76, %c0_77] : memref<1x64xf32, #tpu.memory_space<vmem>>, vector<1x64xf32>
      %c0_78 = arith.constant 0 : index
      %c0_79 = arith.constant 0 : index
      %174 = vector.load %arg19[%c0_78, %c0_79] : memref<1x64xf32, #tpu.memory_space<vmem>>, vector<1x64xf32>
      %cst_80 = arith.constant dense<0.000000e+00> : vector<8xf32>
      %175 = vector.multi_reduction <add>, %167, %cst_80 [1] : vector<8x64xf32> to vector<8xf32>
      %176 = vector.shape_cast %175 : vector<8xf32> to vector<8x1xf32>
      %cst_81 = arith.constant 6.400000e+01 : f32
      %177 = vector.broadcast %cst_81 : f32 to vector<8x1xf32>
      %178 = arith.divf %176, %177 : vector<8x1xf32>
      %179 = vector.broadcast %178 : vector<8x1xf32> to vector<8x64xf32>
      %180 = arith.subf %167, %179 : vector<8x64xf32>
      %181 = arith.mulf %180, %180 : vector<8x64xf32>
      %cst_82 = arith.constant dense<0.000000e+00> : vector<8xf32>
      %182 = vector.multi_reduction <add>, %181, %cst_82 [1] : vector<8x64xf32> to vector<8xf32>
      %183 = vector.shape_cast %182 : vector<8xf32> to vector<8x1xf32>
      %cst_83 = arith.constant 6.400000e+01 : f32
      %184 = vector.broadcast %cst_83 : f32 to vector<8x1xf32>
      %185 = arith.divf %183, %184 : vector<8x1xf32>
      %cst_84 = arith.constant 9.99999974E-6 : f32
      %186 = vector.broadcast %cst_84 : f32 to vector<8x1xf32>
      %187 = arith.addf %185, %186 : vector<8x1xf32>
      %188 = math.rsqrt %187 : vector<8x1xf32>
      %189 = vector.broadcast %188 : vector<8x1xf32> to vector<8x64xf32>
      %190 = arith.mulf %180, %189 : vector<8x64xf32>
      %191 = vector.broadcast %173 : vector<1x64xf32> to vector<8x64xf32>
      %192 = arith.mulf %190, %191 : vector<8x64xf32>
      %193 = vector.broadcast %174 : vector<1x64xf32> to vector<8x64xf32>
      %194 = arith.addf %192, %193 : vector<8x64xf32>
      %c0_85 = arith.constant 0 : index
      %c0_86 = arith.constant 0 : index
      %195 = vector.load %arg20[%c0_85, %c0_86] : memref<64x128xbf16, #tpu.memory_space<vmem>>, vector<64x128xbf16>
      %196 = arith.truncf %194 : vector<8x64xf32> to vector<8x64xbf16>
      %cst_87 = arith.constant dense<0.000000e+00> : vector<8x128xf32>
      %197 = tpu.matmul %196, %195, %cst_87 {dimension_numbers = #tpu.dot_dimension_numbers<[1], [0], [0], [1], [0, 0, 1, 1], [], []>} : vector<8x64xbf16>, vector<64x128xbf16>, vector<8x128xf32> -> vector<8x128xf32>
      %c0_88 = arith.constant 0 : index
      %c0_89 = arith.constant 0 : index
      %198 = vector.load %arg21[%c0_88, %c0_89] : memref<1x128xf32, #tpu.memory_space<vmem>>, vector<1x128xf32>
      %199 = vector.broadcast %198 : vector<1x128xf32> to vector<8x128xf32>
      %200 = arith.addf %197, %199 : vector<8x128xf32>
      %201 = vector.shape_cast %200 : vector<8x128xf32> to vector<1x8x128xf32>
      %202 = arith.truncf %201 : vector<1x8x128xf32> to vector<1x8x128xbf16>
      %c0_90 = arith.constant 0 : index
      %c0_91 = arith.constant 0 : index
      %c0_92 = arith.constant 0 : index
      %203 = vector.load %arg22[%c0_90, %c0_91, %c0_92] : memref<1x8x128xbf16, #tpu.memory_space<vmem>>, vector<1x8x128xbf16>
      tpu.vector_store %arg22[%c0_90, %c0_91, %c0_92], %202 {strides = array<i32>} : memref<1x8x128xbf16, #tpu.memory_space<vmem>>, vector<1x8x128xbf16>,
    } else {
    }
    return
  }
  func.func @transform_0(%arg0: i32, %arg1: i32) -> (i32, i32, i32) {
    %c0_i32 = arith.constant 0 : i32
    %c0_i32_0 = arith.constant 0 : i32
    %c0_i32_1 = arith.constant 0 : i32
    return %arg0, %c0_i32, %c0_i32_0 : i32, i32, i32
  }
  func.func @transform_1(%arg0: i32, %arg1: i32) -> (i32, i32) {
    %c0_i32 = arith.constant 0 : i32
    %c0_i32_0 = arith.constant 0 : i32
    %c0_i32_1 = arith.constant 0 : i32
    return %c0_i32, %c0_i32_0 : i32, i32
  }
  func.func @transform_2(%arg0: i32, %arg1: i32) -> (i32, i32) {
    %c0_i32 = arith.constant 0 : i32
    %c0_i32_0 = arith.constant 0 : i32
    %c0_i32_1 = arith.constant 0 : i32
    return %c0_i32, %c0_i32_0 : i32, i32
  }
  func.func @transform_3(%arg0: i32, %arg1: i32) -> (i32, i32) {
    %c0_i32 = arith.constant 0 : i32
    %c0_i32_0 = arith.constant 0 : i32
    %c0_i32_1 = arith.constant 0 : i32
    return %c0_i32, %c0_i32_0 : i32, i32
  }
  func.func @transform_4(%arg0: i32, %arg1: i32) -> (i32, i32, i32) {
    %c0_i32 = arith.constant 0 : i32
    %c0_i32_0 = arith.constant 0 : i32
    %c0_i32_1 = arith.constant 0 : i32
    return %arg1, %c0_i32, %c0_i32_0 : i32, i32, i32
  }
  func.func @transform_5(%arg0: i32, %arg1: i32) -> (i32, i32, i32) {
    %c0_i32 = arith.constant 0 : i32
    %c0_i32_0 = arith.constant 0 : i32
    %c0_i32_1 = arith.constant 0 : i32
    return %arg1, %c0_i32, %c0_i32_0 : i32, i32, i32
  }
  func.func @transform_6(%arg0: i32, %arg1: i32) -> (i32, i32, i32) {
    %c0_i32 = arith.constant 0 : i32
    %c0_i32_0 = arith.constant 0 : i32
    %c0_i32_1 = arith.constant 0 : i32
    return %arg1, %c0_i32, %c0_i32_0 : i32, i32, i32
  }
  func.func @transform_7(%arg0: i32, %arg1: i32) -> (i32, i32, i32) {
    %c0_i32 = arith.constant 0 : i32
    %c0_i32_0 = arith.constant 0 : i32
    %c0_i32_1 = arith.constant 0 : i32
    return %arg1, %c0_i32, %c0_i32_0 : i32, i32, i32
  }
  func.func @transform_8(%arg0: i32, %arg1: i32) -> (i32, i32, i32) {
    %c0_i32 = arith.constant 0 : i32
    %c0_i32_0 = arith.constant 0 : i32
    %c0_i32_1 = arith.constant 0 : i32
    return %arg1, %c0_i32, %c0_i32_0 : i32, i32, i32
  }
  func.func @transform_9(%arg0: i32, %arg1: i32) -> (i32, i32, i32) {
    %c0_i32 = arith.constant 0 : i32
    %c0_i32_0 = arith.constant 0 : i32
    %c0_i32_1 = arith.constant 0 : i32
    return %arg1, %c0_i32, %c0_i32_0 : i32, i32, i32
  }
  func.func @transform_10(%arg0: i32, %arg1: i32) -> (i32, i32, i32) {
    %c0_i32 = arith.constant 0 : i32
    %c0_i32_0 = arith.constant 0 : i32
    %c0_i32_1 = arith.constant 0 : i32
    return %arg1, %c0_i32, %c0_i32_0 : i32, i32, i32
  }
  func.func @transform_11(%arg0: i32, %arg1: i32) -> (i32, i32, i32) {
    %c0_i32 = arith.constant 0 : i32
    %c0_i32_0 = arith.constant 0 : i32
    %c0_i32_1 = arith.constant 0 : i32
    return %arg1, %c0_i32, %c0_i32_0 : i32, i32, i32
  }
  func.func @transform_12(%arg0: i32, %arg1: i32) -> (i32, i32, i32) {
    %c0_i32 = arith.constant 0 : i32
    %c0_i32_0 = arith.constant 0 : i32
    %c0_i32_1 = arith.constant 0 : i32
    return %arg1, %c0_i32, %c0_i32_0 : i32, i32, i32
  }
  func.func @transform_13(%arg0: i32, %arg1: i32) -> (i32, i32, i32) {
    %c0_i32 = arith.constant 0 : i32
    %c0_i32_0 = arith.constant 0 : i32
    %c0_i32_1 = arith.constant 0 : i32
    return %arg1, %c0_i32, %c0_i32_0 : i32, i32, i32
  }
  func.func @transform_14(%arg0: i32, %arg1: i32) -> (i32, i32, i32) {
    %c0_i32 = arith.constant 0 : i32
    %c0_i32_0 = arith.constant 0 : i32
    %c0_i32_1 = arith.constant 0 : i32
    return %arg1, %c0_i32, %c0_i32_0 : i32, i32, i32
  }
  func.func @transform_15(%arg0: i32, %arg1: i32) -> (i32, i32, i32) {
    %c0_i32 = arith.constant 0 : i32
    %c0_i32_0 = arith.constant 0 : i32
    %c0_i32_1 = arith.constant 0 : i32
    return %arg1, %c0_i32, %c0_i32_0 : i32, i32, i32
  }
  func.func @transform_16(%arg0: i32, %arg1: i32) -> (i32, i32) {
    %c0_i32 = arith.constant 0 : i32
    %c0_i32_0 = arith.constant 0 : i32
    %c0_i32_1 = arith.constant 0 : i32
    return %c0_i32, %c0_i32_0 : i32, i32
  }
  func.func @transform_17(%arg0: i32, %arg1: i32) -> (i32, i32) {
    %c0_i32 = arith.constant 0 : i32
    %c0_i32_0 = arith.constant 0 : i32
    %c0_i32_1 = arith.constant 0 : i32
    return %c0_i32, %c0_i32_0 : i32, i32
  }
  func.func @transform_18(%arg0: i32, %arg1: i32) -> (i32, i32) {
    %c0_i32 = arith.constant 0 : i32
    %c0_i32_0 = arith.constant 0 : i32
    %c0_i32_1 = arith.constant 0 : i32
    return %c0_i32, %c0_i32_0 : i32, i32
  }
  func.func @transform_19(%arg0: i32, %arg1: i32) -> (i32, i32) {
    %c0_i32 = arith.constant 0 : i32
    %c0_i32_0 = arith.constant 0 : i32
    %c0_i32_1 = arith.constant 0 : i32
    return %c0_i32, %c0_i32_0 : i32, i32
  }
  func.func @transform_20(%arg0: i32, %arg1: i32) -> (i32, i32, i32) {
    %c0_i32 = arith.constant 0 : i32
    %c0_i32_0 = arith.constant 0 : i32
    %c0_i32_1 = arith.constant 0 : i32
    return %arg0, %c0_i32, %c0_i32_0 : i32, i32, i32
  }
}

module attributes {stable_mosaic.version = 11 : i64} {
  func.func @kernel(%arg0: i32, %arg1: i32, %arg2: memref<1x8x32xf32, #tpu.memory_space<vmem>>, %arg3: memref<32x64xbf16, #tpu.memory_space<vmem>>, %arg4: memref<1x64xf32, #tpu.memory_space<vmem>>, %arg5: memref<8x64xf32, #tpu.memory_space<vmem>>, %arg6: memref<1x1x64xf32, #tpu.memory_space<vmem>>, %arg7: memref<1x1x64xf32, #tpu.memory_space<vmem>>, %arg8: memref<1x64x192xbf16, #tpu.memory_space<vmem>>, %arg9: memref<1x1x192xf32, #tpu.memory_space<vmem>>, %arg10: memref<1x64x64xbf16, #tpu.memory_space<vmem>>, %arg11: memref<1x1x64xf32, #tpu.memory_space<vmem>>, %arg12: memref<1x1x64xf32, #tpu.memory_space<vmem>>, %arg13: memref<1x1x64xf32, #tpu.memory_space<vmem>>, %arg14: memref<1x64x256xbf16, #tpu.memory_space<vmem>>, %arg15: memref<1x1x256xf32, #tpu.memory_space<vmem>>, %arg16: memref<1x256x64xbf16, #tpu.memory_space<vmem>>, %arg17: memref<1x1x64xf32, #tpu.memory_space<vmem>>, %arg18: memref<1x64xf32, #tpu.memory_space<vmem>>, %arg19: memref<1x64xf32, #tpu.memory_space<vmem>>, %arg20: memref<64x128xbf16, #tpu.memory_space<vmem>>, %arg21: memref<1x128xf32, #tpu.memory_space<vmem>>, %arg22: memref<1x8x128xbf16, #tpu.memory_space<vmem>>, %arg23: memref<1x8x64xf32, #tpu.memory_space<vmem>>) attributes {dimension_semantics = [#tpu.dimension_semantics<parallel>, #tpu.dimension_semantics<arbitrary>], iteration_bounds = array<i64: 2, 2>, scalar_prefetch = 0 : i64, scratch_operands = 1 : i64, tpu.core_type = #tpu.core_type<tc>, window_params = [{transform_indices = @transform_0, window_bounds = array<i64: 1, 8, 32>}, {pipeline_mode = #tpu.pipeline_mode<synchronous>, transform_indices = @transform_1, window_bounds = array<i64: 32, 64>}, {pipeline_mode = #tpu.pipeline_mode<synchronous>, transform_indices = @transform_2, window_bounds = array<i64: 1, 64>}, {pipeline_mode = #tpu.pipeline_mode<synchronous>, transform_indices = @transform_3, window_bounds = array<i64: 8, 64>}, {transform_indices = @transform_4, window_bounds = array<i64: 1, 1, 64>}, {transform_indices = @transform_5, window_bounds = array<i64: 1, 1, 64>}, {transform_indices = @transform_6, window_bounds = array<i64: 1, 64, 192>}, {transform_indices = @transform_7, window_bounds = array<i64: 1, 1, 192>}, {transform_indices = @transform_8, window_bounds = array<i64: 1, 64, 64>}, {transform_indices = @transform_9, window_bounds = array<i64: 1, 1, 64>}, {transform_indices = @transform_10, window_bounds = array<i64: 1, 1, 64>}, {transform_indices = @transform_11, window_bounds = array<i64: 1, 1, 64>}, {transform_indices = @transform_12, window_bounds = array<i64: 1, 64, 256>}, {transform_indices = @transform_13, window_bounds = array<i64: 1, 1, 256>}, {transform_indices = @transform_14, window_bounds = array<i64: 1, 256, 64>}, {transform_indices = @transform_15, window_bounds = array<i64: 1, 1, 64>}, {pipeline_mode = #tpu.pipeline_mode<synchronous>, transform_indices = @transform_16, window_bounds = array<i64: 1, 64>}, {pipeline_mode = #tpu.pipeline_mode<synchronous>, transform_indices = @transform_17, window_bounds = array<i64: 1, 64>}, {pipeline_mode = #tpu.pipeline_mode<synchronous>, transform_indices = @transform_18, window_bounds = array<i64: 64, 128>}, {pipeline_mode = #tpu.pipeline_mode<synchronous>, transform_indices = @transform_19, window_bounds = array<i64: 1, 128>}, {transform_indices = @transform_20, window_bounds = array<i64: 1, 8, 128>}]} {
    %c0_i32 = arith.constant 0 : i32
    %0 = arith.cmpi eq, %arg1, %c0_i32 : i32
    %1 = arith.extui %0 : i1 to i32
    %c0_i32_0 = arith.constant 0 : i32
    %2 = arith.cmpi ne, %1, %c0_i32_0 : i32
    scf.if %2 {
      %c0_76 = arith.constant 0 : index
      %c0_77 = arith.constant 0 : index
      %c0_78 = arith.constant 0 : index
      %173 = vector.load %arg2[%c0_76, %c0_77, %c0_78] : memref<1x8x32xf32, #tpu.memory_space<vmem>>, vector<1x8x32xf32>
      %174 = vector.shape_cast %173 : vector<1x8x32xf32> to vector<8x32xf32>
      %c0_79 = arith.constant 0 : index
      %c0_80 = arith.constant 0 : index
      %175 = vector.load %arg3[%c0_79, %c0_80] : memref<32x64xbf16, #tpu.memory_space<vmem>>, vector<32x64xbf16>
      %176 = arith.truncf %174 : vector<8x32xf32> to vector<8x32xbf16>
      %cst_81 = arith.constant dense<0.000000e+00> : vector<8x64xf32>
      %177 = tpu.matmul %176, %175, %cst_81 {dimension_numbers = #tpu.dot_dimension_numbers<[1], [0], [0], [1], [0, 0, 1, 1], [], []>} : vector<8x32xbf16>, vector<32x64xbf16>, vector<8x64xf32> -> vector<8x64xf32>
      %c0_82 = arith.constant 0 : index
      %c0_83 = arith.constant 0 : index
      %178 = vector.load %arg4[%c0_82, %c0_83] : memref<1x64xf32, #tpu.memory_space<vmem>>, vector<1x64xf32>
      %179 = vector.broadcast %178 : vector<1x64xf32> to vector<8x64xf32>
      %180 = arith.addf %177, %179 : vector<8x64xf32>
      %181 = vector.shape_cast %180 : vector<8x64xf32> to vector<1x8x64xf32>
      %c0_84 = arith.constant 0 : index
      %c0_85 = arith.constant 0 : index
      %182 = vector.load %arg5[%c0_84, %c0_85] : memref<8x64xf32, #tpu.memory_space<vmem>>, vector<8x64xf32>
      %183 = vector.shape_cast %182 : vector<8x64xf32> to vector<1x8x64xf32>
      %184 = arith.addf %181, %183 : vector<1x8x64xf32>
      %c0_86 = arith.constant 0 : index
      %c0_87 = arith.constant 0 : index
      %c0_88 = arith.constant 0 : index
      %185 = vector.load %arg23[%c0_86, %c0_87, %c0_88] : memref<1x8x64xf32, #tpu.memory_space<vmem>>, vector<1x8x64xf32>
      tpu.vector_store %arg23[%c0_86, %c0_87, %c0_88], %184 {strides = array<i32>} : memref<1x8x64xf32, #tpu.memory_space<vmem>>, vector<1x8x64xf32>,
    } else {
    }
    %c0 = arith.constant 0 : index
    %c0_1 = arith.constant 0 : index
    %c0_2 = arith.constant 0 : index
    %3 = vector.load %arg23[%c0, %c0_1, %c0_2] : memref<1x8x64xf32, #tpu.memory_space<vmem>>, vector<1x8x64xf32>
    %4 = vector.shape_cast %3 : vector<1x8x64xf32> to vector<8x64xf32>
    %c0_3 = arith.constant 0 : index
    %c0_4 = arith.constant 0 : index
    %c0_5 = arith.constant 0 : index
    %5 = vector.load %arg6[%c0_3, %c0_4, %c0_5] : memref<1x1x64xf32, #tpu.memory_space<vmem>>, vector<1x1x64xf32>
    %6 = vector.shape_cast %5 : vector<1x1x64xf32> to vector<1x64xf32>
    %c0_6 = arith.constant 0 : index
    %c0_7 = arith.constant 0 : index
    %c0_8 = arith.constant 0 : index
    %7 = vector.load %arg7[%c0_6, %c0_7, %c0_8] : memref<1x1x64xf32, #tpu.memory_space<vmem>>, vector<1x1x64xf32>
    %8 = vector.shape_cast %7 : vector<1x1x64xf32> to vector<1x64xf32>
    %cst = arith.constant dense<0.000000e+00> : vector<8xf32>
    %9 = vector.multi_reduction <add>, %4, %cst [1] : vector<8x64xf32> to vector<8xf32>
    %10 = vector.shape_cast %9 : vector<8xf32> to vector<8x1xf32>
    %cst_9 = arith.constant 6.400000e+01 : f32
    %11 = vector.broadcast %cst_9 : f32 to vector<8x1xf32>
    %12 = arith.divf %10, %11 : vector<8x1xf32>
    %13 = vector.broadcast %12 : vector<8x1xf32> to vector<8x64xf32>
    %14 = arith.subf %4, %13 : vector<8x64xf32>
    %15 = arith.mulf %14, %14 : vector<8x64xf32>
    %cst_10 = arith.constant dense<0.000000e+00> : vector<8xf32>
    %16 = vector.multi_reduction <add>, %15, %cst_10 [1] : vector<8x64xf32> to vector<8xf32>
    %17 = vector.shape_cast %16 : vector<8xf32> to vector<8x1xf32>
    %cst_11 = arith.constant 6.400000e+01 : f32
    %18 = vector.broadcast %cst_11 : f32 to vector<8x1xf32>
    %19 = arith.divf %17, %18 : vector<8x1xf32>
    %cst_12 = arith.constant 9.99999974E-6 : f32
    %20 = vector.broadcast %cst_12 : f32 to vector<8x1xf32>
    %21 = arith.addf %19, %20 : vector<8x1xf32>
    %22 = math.rsqrt %21 : vector<8x1xf32>
    %23 = vector.broadcast %22 : vector<8x1xf32> to vector<8x64xf32>
    %24 = arith.mulf %14, %23 : vector<8x64xf32>
    %25 = vector.broadcast %6 : vector<1x64xf32> to vector<8x64xf32>
    %26 = arith.mulf %24, %25 : vector<8x64xf32>
    %27 = vector.broadcast %8 : vector<1x64xf32> to vector<8x64xf32>
    %28 = arith.addf %26, %27 : vector<8x64xf32>
    %c0_13 = arith.constant 0 : index
    %c0_14 = arith.constant 0 : index
    %c0_15 = arith.constant 0 : index
    %29 = vector.load %arg8[%c0_13, %c0_14, %c0_15] : memref<1x64x192xbf16, #tpu.memory_space<vmem>>, vector<1x64x192xbf16>
    %30 = vector.shape_cast %29 : vector<1x64x192xbf16> to vector<64x192xbf16>
    %31 = arith.truncf %28 : vector<8x64xf32> to vector<8x64xbf16>
    %cst_16 = arith.constant dense<0.000000e+00> : vector<8x192xf32>
    %32 = tpu.matmul %31, %30, %cst_16 {dimension_numbers = #tpu.dot_dimension_numbers<[1], [0], [0], [1], [0, 0, 1, 1], [], []>} : vector<8x64xbf16>, vector<64x192xbf16>, vector<8x192xf32> -> vector<8x192xf32>
    %c0_17 = arith.constant 0 : index
    %c0_18 = arith.constant 0 : index
    %c0_19 = arith.constant 0 : index
    %33 = vector.load %arg9[%c0_17, %c0_18, %c0_19] : memref<1x1x192xf32, #tpu.memory_space<vmem>>, vector<1x1x192xf32>
    %34 = vector.shape_cast %33 : vector<1x1x192xf32> to vector<1x192xf32>
    %35 = vector.broadcast %34 : vector<1x192xf32> to vector<8x192xf32>
    %36 = arith.addf %32, %35 : vector<8x192xf32>
    %37 = arith.truncf %36 : vector<8x192xf32> to vector<8x192xbf16>
    %38 = vector.shape_cast %37 : vector<8x192xbf16> to vector<1x8x192xbf16>
    %39 = vector.extract_strided_slice %38 {offsets = [0, 0, 0], sizes = [1, 8, 16], strides = [1, 1, 1]} : vector<1x8x192xbf16> to vector<1x8x16xbf16>
    %40 = vector.extract_strided_slice %38 {offsets = [0, 0, 64], sizes = [1, 8, 16], strides = [1, 1, 1]} : vector<1x8x192xbf16> to vector<1x8x16xbf16>
    %41 = vector.extract_strided_slice %38 {offsets = [0, 0, 128], sizes = [1, 8, 16], strides = [1, 1, 1]} : vector<1x8x192xbf16> to vector<1x8x16xbf16>
    "tpu.trace_start"() <{level = 10 : i32, message = "bnd,bmd->bnm"}> : () -> ()
    %cst_20 = arith.constant dense<0.000000e+00> : vector<1x8x8xf32>
    %42 = tpu.matmul %39, %40, %cst_20 {dimension_numbers = #tpu.dot_dimension_numbers<[2], [2], [1], [1], [0, 0, 0, 1, 1, 1], [0], [0]>} : vector<1x8x16xbf16>, vector<1x8x16xbf16>, vector<1x8x8xf32> -> vector<1x8x8xf32>
    "tpu.trace_stop"() : () -> ()
    %cst_21 = arith.constant dense<0xFF800000> : vector<1x8xf32>
    %43 = vector.multi_reduction <maximumf>, %42, %cst_21 [2] : vector<1x8x8xf32> to vector<1x8xf32>
    %44 = vector.shape_cast %43 : vector<1x8xf32> to vector<1x8x1xf32>
    %45 = vector.broadcast %44 : vector<1x8x1xf32> to vector<1x8x8xf32>
    %46 = arith.subf %42, %45 : vector<1x8x8xf32>
    %47 = math.exp %46 : vector<1x8x8xf32>
    %cst_22 = arith.constant dense<0.000000e+00> : vector<1x8xf32>
    %48 = vector.multi_reduction <add>, %47, %cst_22 [2] : vector<1x8x8xf32> to vector<1x8xf32>
    %49 = vector.shape_cast %48 : vector<1x8xf32> to vector<1x8x1xf32>
    %50 = tpu.reciprocal %49 {approx = true} : vector<1x8x1xf32> -> vector<1x8x1xf32>
    %51 = arith.truncf %47 : vector<1x8x8xf32> to vector<1x8x8xbf16>
    "tpu.trace_start"() <{level = 10 : i32, message = "bnm,bmd->bnd"}> : () -> ()
    %cst_23 = arith.constant dense<0.000000e+00> : vector<1x8x16xf32>
    %52 = tpu.matmul %51, %41, %cst_23 {dimension_numbers = #tpu.dot_dimension_numbers<[2], [1], [1], [2], [0, 0, 0, 1, 1, 2], [0], [0]>} : vector<1x8x8xbf16>, vector<1x8x16xbf16>, vector<1x8x16xf32> -> vector<1x8x16xf32>
    "tpu.trace_stop"() : () -> ()
    %53 = vector.broadcast %50 : vector<1x8x1xf32> to vector<1x8x16xf32>
    %54 = arith.mulf %52, %53 : vector<1x8x16xf32>
    %55 = vector.extract_strided_slice %38 {offsets = [0, 0, 16], sizes = [1, 8, 16], strides = [1, 1, 1]} : vector<1x8x192xbf16> to vector<1x8x16xbf16>
    %56 = vector.extract_strided_slice %38 {offsets = [0, 0, 80], sizes = [1, 8, 16], strides = [1, 1, 1]} : vector<1x8x192xbf16> to vector<1x8x16xbf16>
    %57 = vector.extract_strided_slice %38 {offsets = [0, 0, 144], sizes = [1, 8, 16], strides = [1, 1, 1]} : vector<1x8x192xbf16> to vector<1x8x16xbf16>
    "tpu.trace_start"() <{level = 10 : i32, message = "bnd,bmd->bnm"}> : () -> ()
    %cst_24 = arith.constant dense<0.000000e+00> : vector<1x8x8xf32>
    %58 = tpu.matmul %55, %56, %cst_24 {dimension_numbers = #tpu.dot_dimension_numbers<[2], [2], [1], [1], [0, 0, 0, 1, 1, 1], [0], [0]>} : vector<1x8x16xbf16>, vector<1x8x16xbf16>, vector<1x8x8xf32> -> vector<1x8x8xf32>
    "tpu.trace_stop"() : () -> ()
    %cst_25 = arith.constant dense<0xFF800000> : vector<1x8xf32>
    %59 = vector.multi_reduction <maximumf>, %58, %cst_25 [2] : vector<1x8x8xf32> to vector<1x8xf32>
    %60 = vector.shape_cast %59 : vector<1x8xf32> to vector<1x8x1xf32>
    %61 = vector.broadcast %60 : vector<1x8x1xf32> to vector<1x8x8xf32>
    %62 = arith.subf %58, %61 : vector<1x8x8xf32>
    %63 = math.exp %62 : vector<1x8x8xf32>
    %cst_26 = arith.constant dense<0.000000e+00> : vector<1x8xf32>
    %64 = vector.multi_reduction <add>, %63, %cst_26 [2] : vector<1x8x8xf32> to vector<1x8xf32>
    %65 = vector.shape_cast %64 : vector<1x8xf32> to vector<1x8x1xf32>
    %66 = tpu.reciprocal %65 {approx = true} : vector<1x8x1xf32> -> vector<1x8x1xf32>
    %67 = arith.truncf %63 : vector<1x8x8xf32> to vector<1x8x8xbf16>
    "tpu.trace_start"() <{level = 10 : i32, message = "bnm,bmd->bnd"}> : () -> ()
    %cst_27 = arith.constant dense<0.000000e+00> : vector<1x8x16xf32>
    %68 = tpu.matmul %67, %57, %cst_27 {dimension_numbers = #tpu.dot_dimension_numbers<[2], [1], [1], [2], [0, 0, 0, 1, 1, 2], [0], [0]>} : vector<1x8x8xbf16>, vector<1x8x16xbf16>, vector<1x8x16xf32> -> vector<1x8x16xf32>
    "tpu.trace_stop"() : () -> ()
    %69 = vector.broadcast %66 : vector<1x8x1xf32> to vector<1x8x16xf32>
    %70 = arith.mulf %68, %69 : vector<1x8x16xf32>
    %71 = vector.extract_strided_slice %38 {offsets = [0, 0, 32], sizes = [1, 8, 16], strides = [1, 1, 1]} : vector<1x8x192xbf16> to vector<1x8x16xbf16>
    %72 = vector.extract_strided_slice %38 {offsets = [0, 0, 96], sizes = [1, 8, 16], strides = [1, 1, 1]} : vector<1x8x192xbf16> to vector<1x8x16xbf16>
    %73 = vector.extract_strided_slice %38 {offsets = [0, 0, 160], sizes = [1, 8, 16], strides = [1, 1, 1]} : vector<1x8x192xbf16> to vector<1x8x16xbf16>
    "tpu.trace_start"() <{level = 10 : i32, message = "bnd,bmd->bnm"}> : () -> ()
    %cst_28 = arith.constant dense<0.000000e+00> : vector<1x8x8xf32>
    %74 = tpu.matmul %71, %72, %cst_28 {dimension_numbers = #tpu.dot_dimension_numbers<[2], [2], [1], [1], [0, 0, 0, 1, 1, 1], [0], [0]>} : vector<1x8x16xbf16>, vector<1x8x16xbf16>, vector<1x8x8xf32> -> vector<1x8x8xf32>
    "tpu.trace_stop"() : () -> ()
    %cst_29 = arith.constant dense<0xFF800000> : vector<1x8xf32>
    %75 = vector.multi_reduction <maximumf>, %74, %cst_29 [2] : vector<1x8x8xf32> to vector<1x8xf32>
    %76 = vector.shape_cast %75 : vector<1x8xf32> to vector<1x8x1xf32>
    %77 = vector.broadcast %76 : vector<1x8x1xf32> to vector<1x8x8xf32>
    %78 = arith.subf %74, %77 : vector<1x8x8xf32>
    %79 = math.exp %78 : vector<1x8x8xf32>
    %cst_30 = arith.constant dense<0.000000e+00> : vector<1x8xf32>
    %80 = vector.multi_reduction <add>, %79, %cst_30 [2] : vector<1x8x8xf32> to vector<1x8xf32>
    %81 = vector.shape_cast %80 : vector<1x8xf32> to vector<1x8x1xf32>
    %82 = tpu.reciprocal %81 {approx = true} : vector<1x8x1xf32> -> vector<1x8x1xf32>
    %83 = arith.truncf %79 : vector<1x8x8xf32> to vector<1x8x8xbf16>
    "tpu.trace_start"() <{level = 10 : i32, message = "bnm,bmd->bnd"}> : () -> ()
    %cst_31 = arith.constant dense<0.000000e+00> : vector<1x8x16xf32>
    %84 = tpu.matmul %83, %73, %cst_31 {dimension_numbers = #tpu.dot_dimension_numbers<[2], [1], [1], [2], [0, 0, 0, 1, 1, 2], [0], [0]>} : vector<1x8x8xbf16>, vector<1x8x16xbf16>, vector<1x8x16xf32> -> vector<1x8x16xf32>
    "tpu.trace_stop"() : () -> ()
    %85 = vector.broadcast %82 : vector<1x8x1xf32> to vector<1x8x16xf32>
    %86 = arith.mulf %84, %85 : vector<1x8x16xf32>
    %87 = vector.extract_strided_slice %38 {offsets = [0, 0, 48], sizes = [1, 8, 16], strides = [1, 1, 1]} : vector<1x8x192xbf16> to vector<1x8x16xbf16>
    %88 = vector.extract_strided_slice %38 {offsets = [0, 0, 112], sizes = [1, 8, 16], strides = [1, 1, 1]} : vector<1x8x192xbf16> to vector<1x8x16xbf16>
    %89 = vector.extract_strided_slice %38 {offsets = [0, 0, 176], sizes = [1, 8, 16], strides = [1, 1, 1]} : vector<1x8x192xbf16> to vector<1x8x16xbf16>
    "tpu.trace_start"() <{level = 10 : i32, message = "bnd,bmd->bnm"}> : () -> ()
    %cst_32 = arith.constant dense<0.000000e+00> : vector<1x8x8xf32>
    %90 = tpu.matmul %87, %88, %cst_32 {dimension_numbers = #tpu.dot_dimension_numbers<[2], [2], [1], [1], [0, 0, 0, 1, 1, 1], [0], [0]>} : vector<1x8x16xbf16>, vector<1x8x16xbf16>, vector<1x8x8xf32> -> vector<1x8x8xf32>
    "tpu.trace_stop"() : () -> ()
    %cst_33 = arith.constant dense<0xFF800000> : vector<1x8xf32>
    %91 = vector.multi_reduction <maximumf>, %90, %cst_33 [2] : vector<1x8x8xf32> to vector<1x8xf32>
    %92 = vector.shape_cast %91 : vector<1x8xf32> to vector<1x8x1xf32>
    %93 = vector.broadcast %92 : vector<1x8x1xf32> to vector<1x8x8xf32>
    %94 = arith.subf %90, %93 : vector<1x8x8xf32>
    %95 = math.exp %94 : vector<1x8x8xf32>
    %cst_34 = arith.constant dense<0.000000e+00> : vector<1x8xf32>
    %96 = vector.multi_reduction <add>, %95, %cst_34 [2] : vector<1x8x8xf32> to vector<1x8xf32>
    %97 = vector.shape_cast %96 : vector<1x8xf32> to vector<1x8x1xf32>
    %98 = tpu.reciprocal %97 {approx = true} : vector<1x8x1xf32> -> vector<1x8x1xf32>
    %99 = arith.truncf %95 : vector<1x8x8xf32> to vector<1x8x8xbf16>
    "tpu.trace_start"() <{level = 10 : i32, message = "bnm,bmd->bnd"}> : () -> ()
    %cst_35 = arith.constant dense<0.000000e+00> : vector<1x8x16xf32>
    %100 = tpu.matmul %99, %89, %cst_35 {dimension_numbers = #tpu.dot_dimension_numbers<[2], [1], [1], [2], [0, 0, 0, 1, 1, 2], [0], [0]>} : vector<1x8x8xbf16>, vector<1x8x16xbf16>, vector<1x8x16xf32> -> vector<1x8x16xf32>
    "tpu.trace_stop"() : () -> ()
    %101 = vector.broadcast %98 : vector<1x8x1xf32> to vector<1x8x16xf32>
    %102 = arith.mulf %100, %101 : vector<1x8x16xf32>
    %103 = tpu.concatenate %54, %70, %86, %102 in 2 : vector<1x8x16xf32>, vector<1x8x16xf32>, vector<1x8x16xf32>, vector<1x8x16xf32> -> vector<1x8x64xf32>
    %104 = vector.shape_cast %103 : vector<1x8x64xf32> to vector<8x64xf32>
    %c0_36 = arith.constant 0 : index
    %c0_37 = arith.constant 0 : index
    %c0_38 = arith.constant 0 : index
    %105 = vector.load %arg10[%c0_36, %c0_37, %c0_38] : memref<1x64x64xbf16, #tpu.memory_space<vmem>>, vector<1x64x64xbf16>
    %106 = vector.shape_cast %105 : vector<1x64x64xbf16> to vector<64x64xbf16>
    %107 = arith.truncf %104 : vector<8x64xf32> to vector<8x64xbf16>
    %cst_39 = arith.constant dense<0.000000e+00> : vector<8x64xf32>
    %108 = tpu.matmul %107, %106, %cst_39 {dimension_numbers = #tpu.dot_dimension_numbers<[1], [0], [0], [1], [0, 0, 1, 1], [], []>} : vector<8x64xbf16>, vector<64x64xbf16>, vector<8x64xf32> -> vector<8x64xf32>
    %109 = arith.addf %4, %108 : vector<8x64xf32>
    %c0_40 = arith.constant 0 : index
    %c0_41 = arith.constant 0 : index
    %c0_42 = arith.constant 0 : index
    %110 = vector.load %arg11[%c0_40, %c0_41, %c0_42] : memref<1x1x64xf32, #tpu.memory_space<vmem>>, vector<1x1x64xf32>
    %111 = vector.shape_cast %110 : vector<1x1x64xf32> to vector<1x64xf32>
    %112 = vector.broadcast %111 : vector<1x64xf32> to vector<8x64xf32>
    %113 = arith.addf %109, %112 : vector<8x64xf32>
    %c0_43 = arith.constant 0 : index
    %c0_44 = arith.constant 0 : index
    %c0_45 = arith.constant 0 : index
    %114 = vector.load %arg12[%c0_43, %c0_44, %c0_45] : memref<1x1x64xf32, #tpu.memory_space<vmem>>, vector<1x1x64xf32>
    %115 = vector.shape_cast %114 : vector<1x1x64xf32> to vector<1x64xf32>
    %c0_46 = arith.constant 0 : index
    %c0_47 = arith.constant 0 : index
    %c0_48 = arith.constant 0 : index
    %116 = vector.load %arg13[%c0_46, %c0_47, %c0_48] : memref<1x1x64xf32, #tpu.memory_space<vmem>>, vector<1x1x64xf32>
    %117 = vector.shape_cast %116 : vector<1x1x64xf32> to vector<1x64xf32>
    %cst_49 = arith.constant dense<0.000000e+00> : vector<8xf32>
    %118 = vector.multi_reduction <add>, %113, %cst_49 [1] : vector<8x64xf32> to vector<8xf32>
    %119 = vector.shape_cast %118 : vector<8xf32> to vector<8x1xf32>
    %cst_50 = arith.constant 6.400000e+01 : f32
    %120 = vector.broadcast %cst_50 : f32 to vector<8x1xf32>
    %121 = arith.divf %119, %120 : vector<8x1xf32>
    %122 = vector.broadcast %121 : vector<8x1xf32> to vector<8x64xf32>
    %123 = arith.subf %113, %122 : vector<8x64xf32>
    %124 = arith.mulf %123, %123 : vector<8x64xf32>
    %cst_51 = arith.constant dense<0.000000e+00> : vector<8xf32>
    %125 = vector.multi_reduction <add>, %124, %cst_51 [1] : vector<8x64xf32> to vector<8xf32>
    %126 = vector.shape_cast %125 : vector<8xf32> to vector<8x1xf32>
    %cst_52 = arith.constant 6.400000e+01 : f32
    %127 = vector.broadcast %cst_52 : f32 to vector<8x1xf32>
    %128 = arith.divf %126, %127 : vector<8x1xf32>
    %cst_53 = arith.constant 9.99999974E-6 : f32
    %129 = vector.broadcast %cst_53 : f32 to vector<8x1xf32>
    %130 = arith.addf %128, %129 : vector<8x1xf32>
    %131 = math.rsqrt %130 : vector<8x1xf32>
    %132 = vector.broadcast %131 : vector<8x1xf32> to vector<8x64xf32>
    %133 = arith.mulf %123, %132 : vector<8x64xf32>
    %134 = vector.broadcast %115 : vector<1x64xf32> to vector<8x64xf32>
    %135 = arith.mulf %133, %134 : vector<8x64xf32>
    %136 = vector.broadcast %117 : vector<1x64xf32> to vector<8x64xf32>
    %137 = arith.addf %135, %136 : vector<8x64xf32>
    %138 = arith.truncf %137 : vector<8x64xf32> to vector<8x64xbf16>
    %c0_54 = arith.constant 0 : index
    %c0_55 = arith.constant 0 : index
    %c0_56 = arith.constant 0 : index
    %139 = vector.load %arg17[%c0_54, %c0_55, %c0_56] : memref<1x1x64xf32, #tpu.memory_space<vmem>>, vector<1x1x64xf32>
    %140 = vector.shape_cast %139 : vector<1x1x64xf32> to vector<1x64xf32>
    %141 = vector.broadcast %140 : vector<1x64xf32> to vector<8x64xf32>
    %142 = arith.addf %113, %141 : vector<8x64xf32>
    %c0_57 = arith.constant 0 : index
    %c0_58 = arith.constant 0 : index
    %c0_59 = arith.constant 0 : index
    %143 = vector.load %arg14[%c0_57, %c0_58, %c0_59] : memref<1x64x256xbf16, #tpu.memory_space<vmem>>, vector<1x64x256xbf16>
    %144 = vector.shape_cast %143 : vector<1x64x256xbf16> to vector<64x256xbf16>
    %cst_60 = arith.constant dense<0.000000e+00> : vector<8x256xf32>
    %145 = tpu.matmul %138, %144, %cst_60 {dimension_numbers = #tpu.dot_dimension_numbers<[1], [0], [0], [1], [0, 0, 1, 1], [], []>} : vector<8x64xbf16>, vector<64x256xbf16>, vector<8x256xf32> -> vector<8x256xf32>
    %c0_61 = arith.constant 0 : index
    %c0_62 = arith.constant 0 : index
    %c0_63 = arith.constant 0 : index
    %146 = vector.load %arg15[%c0_61, %c0_62, %c0_63] : memref<1x1x256xf32, #tpu.memory_space<vmem>>, vector<1x1x256xf32>
    %147 = vector.shape_cast %146 : vector<1x1x256xf32> to vector<1x256xf32>
    %148 = vector.broadcast %147 : vector<1x256xf32> to vector<8x256xf32>
    %149 = arith.addf %145, %148 : vector<8x256xf32>
    %150 = arith.mulf %149, %149 : vector<8x256xf32>
    %151 = arith.mulf %149, %150 : vector<8x256xf32>
    %cst_64 = arith.constant 4.471500e-02 : f32
    %152 = vector.broadcast %cst_64 : f32 to vector<8x256xf32>
    %153 = arith.mulf %152, %151 : vector<8x256xf32>
    %154 = arith.addf %149, %153 : vector<8x256xf32>
    %cst_65 = arith.constant 0.797884583 : f32
    %155 = vector.broadcast %cst_65 : f32 to vector<8x256xf32>
    %156 = arith.mulf %155, %154 : vector<8x256xf32>
    %157 = math.tanh %156 : vector<8x256xf32>
    %cst_66 = arith.constant 1.000000e+00 : f32
    %158 = vector.broadcast %cst_66 : f32 to vector<8x256xf32>
    %159 = arith.addf %158, %157 : vector<8x256xf32>
    %cst_67 = arith.constant 5.000000e-01 : f32
    %160 = vector.broadcast %cst_67 : f32 to vector<8x256xf32>
    %161 = arith.mulf %160, %159 : vector<8x256xf32>
    %162 = arith.mulf %149, %161 : vector<8x256xf32>
    %163 = arith.truncf %162 : vector<8x256xf32> to vector<8x256xbf16>
    %c0_68 = arith.constant 0 : index
    %c0_69 = arith.constant 0 : index
    %c0_70 = arith.constant 0 : index
    %164 = vector.load %arg16[%c0_68, %c0_69, %c0_70] : memref<1x256x64xbf16, #tpu.memory_space<vmem>>, vector<1x256x64xbf16>
    %165 = vector.shape_cast %164 : vector<1x256x64xbf16> to vector<256x64xbf16>
    %cst_71 = arith.constant dense<0.000000e+00> : vector<8x64xf32>
    %166 = tpu.matmul %163, %165, %cst_71 {dimension_numbers = #tpu.dot_dimension_numbers<[1], [0], [0], [1], [0, 0, 1, 1], [], []>} : vector<8x256xbf16>, vector<256x64xbf16>, vector<8x64xf32> -> vector<8x64xf32>
    %167 = arith.addf %142, %166 : vector<8x64xf32>
    %168 = vector.shape_cast %167 : vector<8x64xf32> to vector<1x8x64xf32>
    %c0_72 = arith.constant 0 : index
    %c0_73 = arith.constant 0 : index
    %c0_74 = arith.constant 0 : index
    %169 = vector.load %arg23[%c0_72, %c0_73, %c0_74] : memref<1x8x64xf32, #tpu.memory_space<vmem>>, vector<1x8x64xf32>
    tpu.vector_store %arg23[%c0_72, %c0_73, %c0_74], %168 {strides = array<i32>} : memref<1x8x64xf32, #tpu.memory_space<vmem>>, vector<1x8x64xf32>,
    %c1_i32 = arith.constant 1 : i32
    %170 = arith.cmpi eq, %arg1, %c1_i32 : i32
    %171 = arith.extui %170 : i1 to i32
    %c0_i32_75 = arith.constant 0 : i32
    %172 = arith.cmpi ne, %171, %c0_i32_75 : i32
    scf.if %172 {
      %c0_76 = arith.constant 0 : index
      %c0_77 = arith.constant 0 : index
      %173 = vector.load %arg18[%c0_76, %c0_77] : memref<1x64xf32, #tpu.memory_space<vmem>>, vector<1x64xf32>
      %c0_78 = arith.constant 0 : index
      %c0_79 = arith.constant 0 : index
      %174 = vector.load %arg19[%c0_78, %c0_79] : memref<1x64xf32, #tpu.memory_space<vmem>>, vector<1x64xf32>
      %cst_80 = arith.constant dense<0.000000e+00> : vector<8xf32>
      %175 = vector.multi_reduction <add>, %167, %cst_80 [1] : vector<8x64xf32> to vector<8xf32>
      %176 = vector.shape_cast %175 : vector<8xf32> to vector<8x1xf32>
      %cst_81 = arith.constant 6.400000e+01 : f32
      %177 = vector.broadcast %cst_81 : f32 to vector<8x1xf32>
      %178 = arith.divf %176, %177 : vector<8x1xf32>
      %179 = vector.broadcast %178 : vector<8x1xf32> to vector<8x64xf32>
      %180 = arith.subf %167, %179 : vector<8x64xf32>
      %181 = arith.mulf %180, %180 : vector<8x64xf32>
      %cst_82 = arith.constant dense<0.000000e+00> : vector<8xf32>
      %182 = vector.multi_reduction <add>, %181, %cst_82 [1] : vector<8x64xf32> to vector<8xf32>
      %183 = vector.shape_cast %182 : vector<8xf32> to vector<8x1xf32>
      %cst_83 = arith.constant 6.400000e+01 : f32
      %184 = vector.broadcast %cst_83 : f32 to vector<8x1xf32>
      %185 = arith.divf %183, %184 : vector<8x1xf32>
      %cst_84 = arith.constant 9.99999974E-6 : f32
      %186 = vector.broadcast %cst_84 : f32 to vector<8x1xf32>
      %187 = arith.addf %185, %186 : vector<8x1xf32>
      %188 = math.rsqrt %187 : vector<8x1xf32>
      %189 = vector.broadcast %188 : vector<8x1xf32> to vector<8x64xf32>
      %190 = arith.mulf %180, %189 : vector<8x64xf32>
      %191 = vector.broadcast %173 : vector<1x64xf32> to vector<8x64xf32>
      %192 = arith.mulf %190, %191 : vector<8x64xf32>
      %193 = vector.broadcast %174 : vector<1x64xf32> to vector<8x64xf32>
      %194 = arith.addf %192, %193 : vector<8x64xf32>
      %c0_85 = arith.constant 0 : index
      %c0_86 = arith.constant 0 : index
      %195 = vector.load %arg20[%c0_85, %c0_86] : memref<64x128xbf16, #tpu.memory_space<vmem>>, vector<64x128xbf16>
      %196 = arith.truncf %194 : vector<8x64xf32> to vector<8x64xbf16>
      %cst_87 = arith.constant dense<0.000000e+00> : vector<8x128xf32>
      %197 = tpu.matmul %196, %195, %cst_87 {dimension_numbers = #tpu.dot_dimension_numbers<[1], [0], [0], [1], [0, 0, 1, 1], [], []>} : vector<8x64xbf16>, vector<64x128xbf16>, vector<8x128xf32> -> vector<8x128xf32>
      %c0_88 = arith.constant 0 : index
      %c0_89 = arith.constant 0 : index
      %198 = vector.load %arg21[%c0_88, %c0_89] : memref<1x128xf32, #tpu.memory_space<vmem>>, vector<1x128xf32>
      %199 = vector.broadcast %198 : vector<1x128xf32> to vector<8x128xf32>
      %200 = arith.addf %197, %199 : vector<8x128xf32>
      %201 = vector.shape_cast %200 : vector<8x128xf32> to vector<1x8x128xf32>
      %202 = arith.truncf %201 : vector<1x8x128xf32> to vector<1x8x128xbf16>
      %c0_90 = arith.constant 0 : index
      %c0_91 = arith.constant 0 : index
      %c0_92 = arith.constant 0 : index
      %203 = vector.load %arg22[%c0_90, %c0_91, %c0_92] : memref<1x8x128xbf16, #tpu.memory_space<vmem>>, vector<1x8x128xbf16>
      tpu.vector_store %arg22[%c0_90, %c0_91, %c0_92], %202 {strides = array<i32>} : memref<1x8x128xbf16, #tpu.memory_space<vmem>>, vector<1x8x128xbf16>,
    } else {
    }
    return
  }
  func.func @transform_0(%arg0: i32, %arg1: i32) -> (i32, i32, i32) {
    %c0_i32 = arith.constant 0 : i32
    %c0_i32_0 = arith.constant 0 : i32
    %c0_i32_1 = arith.constant 0 : i32
    return %arg0, %c0_i32, %c0_i32_0 : i32, i32, i32
  }
  func.func @transform_1(%arg0: i32, %arg1: i32) -> (i32, i32) {
    %c0_i32 = arith.constant 0 : i32
    %c0_i32_0 = arith.constant 0 : i32
    %c0_i32_1 = arith.constant 0 : i32
    return %c0_i32, %c0_i32_0 : i32, i32
  }
  func.func @transform_2(%arg0: i32, %arg1: i32) -> (i32, i32) {
    %c0_i32 = arith.constant 0 : i32
    %c0_i32_0 = arith.constant 0 : i32
    %c0_i32_1 = arith.constant 0 : i32
    return %c0_i32, %c0_i32_0 : i32, i32
  }
  func.func @transform_3(%arg0: i32, %arg1: i32) -> (i32, i32) {
    %c0_i32 = arith.constant 0 : i32
    %c0_i32_0 = arith.constant 0 : i32
    %c0_i32_1 = arith.constant 0 : i32
    return %c0_i32, %c0_i32_0 : i32, i32
  }
  func.func @transform_4(%arg0: i32, %arg1: i32) -> (i32, i32, i32) {
    %c0_i32 = arith.constant 0 : i32
    %c0_i32_0 = arith.constant 0 : i32
    %c0_i32_1 = arith.constant 0 : i32
    return %arg1, %c0_i32, %c0_i32_0 : i32, i32, i32
  }
  func.func @transform_5(%arg0: i32, %arg1: i32) -> (i32, i32, i32) {
    %c0_i32 = arith.constant 0 : i32
    %c0_i32_0 = arith.constant 0 : i32
    %c0_i32_1 = arith.constant 0 : i32
    return %arg1, %c0_i32, %c0_i32_0 : i32, i32, i32
  }
  func.func @transform_6(%arg0: i32, %arg1: i32) -> (i32, i32, i32) {
    %c0_i32 = arith.constant 0 : i32
    %c0_i32_0 = arith.constant 0 : i32
    %c0_i32_1 = arith.constant 0 : i32
    return %arg1, %c0_i32, %c0_i32_0 : i32, i32, i32
  }
  func.func @transform_7(%arg0: i32, %arg1: i32) -> (i32, i32, i32) {
    %c0_i32 = arith.constant 0 : i32
    %c0_i32_0 = arith.constant 0 : i32
    %c0_i32_1 = arith.constant 0 : i32
    return %arg1, %c0_i32, %c0_i32_0 : i32, i32, i32
  }
  func.func @transform_8(%arg0: i32, %arg1: i32) -> (i32, i32, i32) {
    %c0_i32 = arith.constant 0 : i32
    %c0_i32_0 = arith.constant 0 : i32
    %c0_i32_1 = arith.constant 0 : i32
    return %arg1, %c0_i32, %c0_i32_0 : i32, i32, i32
  }
  func.func @transform_9(%arg0: i32, %arg1: i32) -> (i32, i32, i32) {
    %c0_i32 = arith.constant 0 : i32
    %c0_i32_0 = arith.constant 0 : i32
    %c0_i32_1 = arith.constant 0 : i32
    return %arg1, %c0_i32, %c0_i32_0 : i32, i32, i32
  }
  func.func @transform_10(%arg0: i32, %arg1: i32) -> (i32, i32, i32) {
    %c0_i32 = arith.constant 0 : i32
    %c0_i32_0 = arith.constant 0 : i32
    %c0_i32_1 = arith.constant 0 : i32
    return %arg1, %c0_i32, %c0_i32_0 : i32, i32, i32
  }
  func.func @transform_11(%arg0: i32, %arg1: i32) -> (i32, i32, i32) {
    %c0_i32 = arith.constant 0 : i32
    %c0_i32_0 = arith.constant 0 : i32
    %c0_i32_1 = arith.constant 0 : i32
    return %arg1, %c0_i32, %c0_i32_0 : i32, i32, i32
  }
  func.func @transform_12(%arg0: i32, %arg1: i32) -> (i32, i32, i32) {
    %c0_i32 = arith.constant 0 : i32
    %c0_i32_0 = arith.constant 0 : i32
    %c0_i32_1 = arith.constant 0 : i32
    return %arg1, %c0_i32, %c0_i32_0 : i32, i32, i32
  }
  func.func @transform_13(%arg0: i32, %arg1: i32) -> (i32, i32, i32) {
    %c0_i32 = arith.constant 0 : i32
    %c0_i32_0 = arith.constant 0 : i32
    %c0_i32_1 = arith.constant 0 : i32
    return %arg1, %c0_i32, %c0_i32_0 : i32, i32, i32
  }
  func.func @transform_14(%arg0: i32, %arg1: i32) -> (i32, i32, i32) {
    %c0_i32 = arith.constant 0 : i32
    %c0_i32_0 = arith.constant 0 : i32
    %c0_i32_1 = arith.constant 0 : i32
    return %arg1, %c0_i32, %c0_i32_0 : i32, i32, i32
  }
  func.func @transform_15(%arg0: i32, %arg1: i32) -> (i32, i32, i32) {
    %c0_i32 = arith.constant 0 : i32
    %c0_i32_0 = arith.constant 0 : i32
    %c0_i32_1 = arith.constant 0 : i32
    return %arg1, %c0_i32, %c0_i32_0 : i32, i32, i32
  }
  func.func @transform_16(%arg0: i32, %arg1: i32) -> (i32, i32) {
    %c0_i32 = arith.constant 0 : i32
    %c0_i32_0 = arith.constant 0 : i32
    %c0_i32_1 = arith.constant 0 : i32
    return %c0_i32, %c0_i32_0 : i32, i32
  }
  func.func @transform_17(%arg0: i32, %arg1: i32) -> (i32, i32) {
    %c0_i32 = arith.constant 0 : i32
    %c0_i32_0 = arith.constant 0 : i32
    %c0_i32_1 = arith.constant 0 : i32
    return %c0_i32, %c0_i32_0 : i32, i32
  }
  func.func @transform_18(%arg0: i32, %arg1: i32) -> (i32, i32) {
    %c0_i32 = arith.constant 0 : i32
    %c0_i32_0 = arith.constant 0 : i32
    %c0_i32_1 = arith.constant 0 : i32
    return %c0_i32, %c0_i32_0 : i32, i32
  }
  func.func @transform_19(%arg0: i32, %arg1: i32) -> (i32, i32) {
    %c0_i32 = arith.constant 0 : i32
    %c0_i32_0 = arith.constant 0 : i32
    %c0_i32_1 = arith.constant 0 : i32
    return %c0_i32, %c0_i32_0 : i32, i32
  }
  func.func @transform_20(%arg0: i32, %arg1: i32) -> (i32, i32, i32) {
    %c0_i32 = arith.constant 0 : i32
    %c0_i32_0 = arith.constant 0 : i32
    %c0_i32_1 = arith.constant 0 : i32
    return %arg0, %c0_i32, %c0_i32_0 : i32, i32, i32
  }
}

</mosaic_0001>

<llo_original>
// kernel: tpu_custom_call.1
$region0: #{tpu_custom_call.1}
  #allocation0 [shape = 'u32[]', space=smem, size = 0x4, offset = 0x4, fixed_abs, tag = 'smem constant byte address 0x4 - core index']
  #allocation1 [shape = 'u32[144,128]{1,0:T(1,128)}', space=vmem, size = 0x12000, scoped, tag = 'internal scratch']
  #allocation2 [shape = 'f32[1,8,64]{2,1,0:T(8,128)}', space=vmem, size = 0x1000, scoped, tag = 'scratch operand']
  %s0 = inlined_call_operand.vmem [shape: f32[2,8,32], index: 0, kind: input, shape index: {}]
  %s1 = inlined_call_operand.vmem [shape: bf16[32,64], index: 1, kind: input, shape index: {}]
  %s2 = inlined_call_operand.hbm [shape: f32[1,64], index: 2, kind: input, shape index: {}]
  %s3 = inlined_call_operand.hbm [shape: f32[8,64], index: 3, kind: input, shape index: {}]
  %s4 = inlined_call_operand.hbm [shape: f32[2,1,64], index: 4, kind: input, shape index: {}]
  %s5 = inlined_call_operand.hbm [shape: f32[2,1,64], index: 5, kind: input, shape index: {}]
  %s6 = inlined_call_operand.vmem [shape: bf16[2,64,192], index: 6, kind: input, shape index: {}]
  %s7 = inlined_call_operand.vmem [shape: f32[2,1,192], index: 7, kind: input, shape index: {}]
  %s8 = inlined_call_operand.vmem [shape: bf16[2,64,64], index: 8, kind: input, shape index: {}]
  %s9 = inlined_call_operand.vmem [shape: f32[2,1,64], index: 9, kind: input, shape index: {}]
  %s10 = inlined_call_operand.vmem [shape: f32[2,1,64], index: 10, kind: input, shape index: {}]
  %s11 = inlined_call_operand.vmem [shape: f32[2,1,64], index: 11, kind: input, shape index: {}]
  %s12 = inlined_call_operand.vmem [shape: bf16[2,64,256], index: 12, kind: input, shape index: {}]
  %s13 = inlined_call_operand.vmem [shape: f32[2,1,256], index: 13, kind: input, shape index: {}]
  %s14 = inlined_call_operand.vmem [shape: bf16[2,256,64], index: 14, kind: input, shape index: {}]
  %s15 = inlined_call_operand.vmem [shape: f32[2,1,64], index: 15, kind: input, shape index: {}]
  %s16 = inlined_call_operand.vmem [shape: f32[1,64], index: 16, kind: input, shape index: {}]
  %s17 = inlined_call_operand.vmem [shape: f32[1,64], index: 17, kind: input, shape index: {}]
  %s18 = inlined_call_operand.vmem [shape: bf16[64,128], index: 18, kind: input, shape index: {}]
  %s19 = inlined_call_operand.vmem [shape: f32[1,128], index: 19, kind: input, shape index: {}]
  %s20 = inlined_call_operand.hbm [shape: bf16[2,8,128], index: 20, kind: output, shape index: {}]
  %s21 = sld [smem:[#allocation0]]
  $region137: #{tpu_custom_call.1} parent=0
    _
  %s23 = ssub.s32 1, %s21
  %s24 = scalar_select 0, %s23, %s21
  $region1: #{tpu_custom_call.1} parent=0
    #allocation3 [shape = 'u8[512]{0}', space=vmem, size = 0x400, scoped, tag = 'input window, operand 2, single buffered']
    #allocation4 [shape = 's32[2]{0}', space=sflag, size = 0x8, scoped, tag = 'scoped memory for tpu_custom_call.1']
    #allocation5 [shape = 's32[2]{0}', space=sflag, size = 0x8, scoped, tag = 'scoped memory for tpu_custom_call.1']
    #allocation6 [shape = 'u8[4096]{0}', space=vmem, size = 0x1000, scoped, tag = 'input window, operand 3, single buffered']
    #allocation7 [shape = 's32[1]{0}', space=sflag, size = 0x4, scoped, tag = 'scoped memory for tpu_custom_call.1']
    #allocation8 [shape = 'u8[1024]{0}', space=vmem, size = 0x400, scoped, tag = 'input window, operand 4']
    #allocation9 [shape = 'u8[1024]{0}', space=vmem, size = 0x400, scoped, tag = 'input window, operand 5']
    #allocation10 [shape = 'u8[4096]{0}', space=vmem, size = 0x1000, scoped, tag = 'output window, operand 0']
    %25 = vsyncpa [#allocation4], 0
    %26 = vsyncpa [#allocation7], 0
    %27 = vsyncpa [#allocation5], 0
    %s28 = scalar_lea.sflag [#allocation5], 1
    %29 = vsyncpa %s28, 0
    loop: start=0, step=1, limit=6
    $region2: #{tpu_custom_call.1} parent=1 // loop_pre_header
      _
    $region3: #{tpu_custom_call.1} parent=1 // loop_header
      %s31 = sphi 0, %s35
      %p32 = scmp.ge.s32.totalorder %s31, 6
      %s38 = sphi 0, %s50
      %s39 = sphi 0, %s46
      %s40 = sphi 0, %s38
      %s41 = sphi 0, %s39
      %s42 = sphi 0, %s40
      %s43 = sphi 0, %s41
      %s53 = sphi 0, %s55
      %s56 = sphi 0, %s53
      %s57 = sphi 0, %s56
      %s73 = sphi 0, %s57
      %s77 = sphi 0, %s77
      %s79 = sphi 0, %s77
      %s80 = sphi 0, %s79
      %s94 = sphi 0, %s80
      %s98 = sphi 0, %s98
      %s100 = sphi 0, %s98
      %s101 = sphi 0, %s100
      %s115 = sphi 0, %s101
      %s119 = sphi 0, %s119
      %s121 = sphi 0, %s119
      %s122 = sphi 0, %s121
      %s136 = sphi 0, %s122
      %s142 = sphi 0, %s144
      %s145 = sphi 0, %s142
      %s146 = sphi 0, %s145
      %s162 = sphi 0, %s146
      %s168 = sphi 0, %s170
      %s171 = sphi 0, %s168
      %s172 = sphi 0, %s171
      %s188 = sphi 0, %s172
      %s194 = sphi 0, %s196
      %s197 = sphi 0, %s194
      %s198 = sphi 0, %s197
      %s214 = sphi 0, %s198
      %s220 = sphi 0, %s222
      %s223 = sphi 0, %s220
      %s224 = sphi 0, %s223
      %s240 = sphi 0, %s224
      %s246 = sphi 0, %s248
      %s249 = sphi 0, %s246
      %s250 = sphi 0, %s249
      %s266 = sphi 0, %s250
      %s272 = sphi 0, %s274
      %s275 = sphi 0, %s272
      %s276 = sphi 0, %s275
      %s292 = sphi 0, %s276
      %s298 = sphi 0, %s300
      %s301 = sphi 0, %s298
      %s302 = sphi 0, %s301
      %s318 = sphi 0, %s302
      %s324 = sphi 0, %s326
      %s327 = sphi 0, %s324
      %s328 = sphi 0, %s327
      %s344 = sphi 0, %s328
      %s350 = sphi 0, %s352
      %s353 = sphi 0, %s350
      %s354 = sphi 0, %s353
      %s370 = sphi 0, %s354
      %s376 = sphi 0, %s378
      %s379 = sphi 0, %s376
      %s380 = sphi 0, %s379
      %s396 = sphi 0, %s380
      %s402 = sphi 0, %s404
      %s405 = sphi 0, %s402
      %s406 = sphi 0, %s405
      %s422 = sphi 0, %s406
      %s428 = sphi 0, %s430
      %s431 = sphi 0, %s428
      %s432 = sphi 0, %s431
      %s448 = sphi 0, %s432
      %s452 = sphi 0, %s452
      %s454 = sphi 0, %s452
      %s455 = sphi 0, %s454
      %s469 = sphi 0, %s455
      %s473 = sphi 0, %s473
      %s475 = sphi 0, %s473
      %s476 = sphi 0, %s475
      %s490 = sphi 0, %s476
      %s494 = sphi 0, %s494
      %s496 = sphi 0, %s494
      %s497 = sphi 0, %s496
      %s511 = sphi 0, %s497
      %s515 = sphi 0, %s515
      %s517 = sphi 0, %s515
      %s518 = sphi 0, %s517
      %s532 = sphi 0, %s518
      %s538 = sphi 0, %s540
      %s541 = sphi 0, %s538
      %s542 = sphi 0, %s541
      %s558 = sphi 0, %s542
    $region4: #{tpu_custom_call.1} parent=1 // loop_header_branch
      %34 = sbr.rel (%p32) target = $region8
    $region5: #{tpu_custom_call.1} parent=1 // loop_body
      %s36 = ssub.s32 %s31, 1
      %s37 = ssub.s32 %s31, 2
      %s44 = sadd.s32 1, %s39
      %p45 = scmp.ge.s32.totalorder %s44, 2
      %s46 = scalar_select %p45, 0, %s44
      %s47 = sadd.s32 1, %s38
      %s48 = scalar_select %p45, %s47, %s38
      %p49 = scmp.ge.s32.totalorder %s48, 2
      %s50 = scalar_select %p49, 0, %s48
      %s51 = ssub.s32 %s38, %s50
      %p52 = scmp.eq.s32.totalorder %s51, 0
      %s54 = sadd.s32 %s53, 1
      %s55 = scalar_select %p52, %s53, %s54
      %p58 = pneg %p52
      %p59 = scmp.eq.s32.totalorder %s31, 3
      %p60 = por %p58, %p59
      %p61 = scmp.ne.s32.totalorder %s53, %s56
      %p62 = scmp.eq.s32.totalorder %s31, 0
      %p63 = por %p61, %p62
      %p64 = scmp.ne.s32.totalorder %s53, %s56
      %p65 = scmp.eq.s32.totalorder %s36, 3
      %p66 = por %p64, %p65
      %p67 = scmp.ne.s32.totalorder %s56, %s57
      %p68 = scmp.eq.s32.totalorder %s36, 0
      %p69 = por %p67, %p68
      %p70 = scmp.ne.s32.totalorder %s56, %s57
      %p71 = scmp.eq.s32.totalorder %s37, 3
      %p72 = por %p70, %p71
      %p74 = scmp.ne.s32.totalorder %s57, %s73
      %p75 = scmp.eq.s32.totalorder %s37, 0
      %p76 = por %p74, %p75
      %s78 = sadd.s32 %s77, 1
      %p81 = scmp.eq.s32.totalorder %s31, 3
      %p82 = scmp.ne.s32.totalorder %s77, %s79
      %p83 = scmp.eq.s32.totalorder %s31, 0
      %p84 = por %p82, %p83
      %p85 = scmp.ne.s32.totalorder %s77, %s79
      %p86 = scmp.eq.s32.totalorder %s36, 3
      %p87 = por %p85, %p86
      %p88 = scmp.ne.s32.totalorder %s79, %s80
      %p89 = scmp.eq.s32.totalorder %s36, 0
      %p90 = por %p88, %p89
      %p91 = scmp.ne.s32.totalorder %s79, %s80
      %p92 = scmp.eq.s32.totalorder %s37, 3
      %p93 = por %p91, %p92
      %p95 = scmp.ne.s32.totalorder %s80, %s94
      %p96 = scmp.eq.s32.totalorder %s37, 0
      %p97 = por %p95, %p96
      %s99 = sadd.s32 %s98, 1
      %p102 = scmp.eq.s32.totalorder %s31, 3
      %p103 = scmp.ne.s32.totalorder %s98, %s100
      %p104 = scmp.eq.s32.totalorder %s31, 0
      %p105 = por %p103, %p104
      %p106 = scmp.ne.s32.totalorder %s98, %s100
      %p107 = scmp.eq.s32.totalorder %s36, 3
      %p108 = por %p106, %p107
      %p109 = scmp.ne.s32.totalorder %s100, %s101
      %p110 = scmp.eq.s32.totalorder %s36, 0
      %p111 = por %p109, %p110
      %p112 = scmp.ne.s32.totalorder %s100, %s101
      %p113 = scmp.eq.s32.totalorder %s37, 3
      %p114 = por %p112, %p113
      %p116 = scmp.ne.s32.totalorder %s101, %s115
      %p117 = scmp.eq.s32.totalorder %s37, 0
      %p118 = por %p116, %p117
      %s120 = sadd.s32 %s119, 1
      %p123 = scmp.eq.s32.totalorder %s31, 3
      %p124 = scmp.ne.s32.totalorder %s119, %s121
      %p125 = scmp.eq.s32.totalorder %s31, 0
      %p126 = por %p124, %p125
      %p127 = scmp.ne.s32.totalorder %s119, %s121
      %p128 = scmp.eq.s32.totalorder %s36, 3
      %p129 = por %p127, %p128
      %p130 = scmp.ne.s32.totalorder %s121, %s122
      %p131 = scmp.eq.s32.totalorder %s36, 0
      %p132 = por %p130, %p131
      %p133 = scmp.ne.s32.totalorder %s121, %s122
      %p134 = scmp.eq.s32.totalorder %s37, 3
      %p135 = por %p133, %p134
      %p137 = scmp.ne.s32.totalorder %s122, %s136
      %p138 = scmp.eq.s32.totalorder %s37, 0
      %p139 = por %p137, %p138
      %s140 = ssub.s32 %s39, %s46
      %p141 = scmp.eq.s32.totalorder %s140, 0
      %s143 = sadd.s32 %s142, 1
      %s144 = scalar_select %p141, %s142, %s143
      %p147 = pneg %p141
      %p148 = scmp.eq.s32.totalorder %s31, 3
      %p149 = por %p147, %p148
      %p150 = scmp.ne.s32.totalorder %s142, %s145
      %p151 = scmp.eq.s32.totalorder %s31, 0
      %p152 = por %p150, %p151
      %p153 = scmp.ne.s32.totalorder %s142, %s145
      %p154 = scmp.eq.s32.totalorder %s36, 3
      %p155 = por %p153, %p154
      %p156 = scmp.ne.s32.totalorder %s145, %s146
      %p157 = scmp.eq.s32.totalorder %s36, 0
      %p158 = por %p156, %p157
      %p159 = scmp.ne.s32.totalorder %s145, %s146
      %p160 = scmp.eq.s32.totalorder %s37, 3
      %p161 = por %p159, %p160
      %p163 = scmp.ne.s32.totalorder %s146, %s162
      %p164 = scmp.eq.s32.totalorder %s37, 0
      %p165 = por %p163, %p164
      %s166 = ssub.s32 %s39, %s46
      %p167 = scmp.eq.s32.totalorder %s166, 0
      %s169 = sadd.s32 %s168, 1
      %s170 = scalar_select %p167, %s168, %s169
      %p173 = pneg %p167
      %p174 = scmp.eq.s32.totalorder %s31, 3
      %p175 = por %p173, %p174
      %p176 = scmp.ne.s32.totalorder %s168, %s171
      %p177 = scmp.eq.s32.totalorder %s31, 0
      %p178 = por %p176, %p177
      %p179 = scmp.ne.s32.totalorder %s168, %s171
      %p180 = scmp.eq.s32.totalorder %s36, 3
      %p181 = por %p179, %p180
      %p182 = scmp.ne.s32.totalorder %s171, %s172
      %p183 = scmp.eq.s32.totalorder %s36, 0
      %p184 = por %p182, %p183
      %p185 = scmp.ne.s32.totalorder %s171, %s172
      %p186 = scmp.eq.s32.totalorder %s37, 3
      %p187 = por %p185, %p186
      %p189 = scmp.ne.s32.totalorder %s172, %s188
      %p190 = scmp.eq.s32.totalorder %s37, 0
      %p191 = por %p189, %p190
      %s192 = ssub.s32 %s39, %s46
      %p193 = scmp.eq.s32.totalorder %s192, 0
      %s195 = sadd.s32 %s194, 1
      %s196 = scalar_select %p193, %s194, %s195
      %p199 = pneg %p193
      %p200 = scmp.eq.s32.totalorder %s31, 3
      %p201 = por %p199, %p200
      %p202 = scmp.ne.s32.totalorder %s194, %s197
      %p203 = scmp.eq.s32.totalorder %s31, 0
      %p204 = por %p202, %p203
      %p205 = scmp.ne.s32.totalorder %s194, %s197
      %p206 = scmp.eq.s32.totalorder %s36, 3
      %p207 = por %p205, %p206
      %p208 = scmp.ne.s32.totalorder %s197, %s198
      %p209 = scmp.eq.s32.totalorder %s36, 0
      %p210 = por %p208, %p209
      %p211 = scmp.ne.s32.totalorder %s197, %s198
      %p212 = scmp.eq.s32.totalorder %s37, 3
      %p213 = por %p211, %p212
      %p215 = scmp.ne.s32.totalorder %s198, %s214
      %p216 = scmp.eq.s32.totalorder %s37, 0
      %p217 = por %p215, %p216
      %s218 = ssub.s32 %s39, %s46
      %p219 = scmp.eq.s32.totalorder %s218, 0
      %s221 = sadd.s32 %s220, 1
      %s222 = scalar_select %p219, %s220, %s221
      %p225 = pneg %p219
      %p226 = scmp.eq.s32.totalorder %s31, 3
      %p227 = por %p225, %p226
      %p228 = scmp.ne.s32.totalorder %s220, %s223
      %p229 = scmp.eq.s32.totalorder %s31, 0
      %p230 = por %p228, %p229
      %p231 = scmp.ne.s32.totalorder %s220, %s223
      %p232 = scmp.eq.s32.totalorder %s36, 3
      %p233 = por %p231, %p232
      %p234 = scmp.ne.s32.totalorder %s223, %s224
      %p235 = scmp.eq.s32.totalorder %s36, 0
      %p236 = por %p234, %p235
      %p237 = scmp.ne.s32.totalorder %s223, %s224
      %p238 = scmp.eq.s32.totalorder %s37, 3
      %p239 = por %p237, %p238
      %p241 = scmp.ne.s32.totalorder %s224, %s240
      %p242 = scmp.eq.s32.totalorder %s37, 0
      %p243 = por %p241, %p242
      %s244 = ssub.s32 %s39, %s46
      %p245 = scmp.eq.s32.totalorder %s244, 0
      %s247 = sadd.s32 %s246, 1
      %s248 = scalar_select %p245, %s246, %s247
      %p251 = pneg %p245
      %p252 = scmp.eq.s32.totalorder %s31, 3
      %p253 = por %p251, %p252
      %p254 = scmp.ne.s32.totalorder %s246, %s249
      %p255 = scmp.eq.s32.totalorder %s31, 0
      %p256 = por %p254, %p255
      %p257 = scmp.ne.s32.totalorder %s246, %s249
      %p258 = scmp.eq.s32.totalorder %s36, 3
      %p259 = por %p257, %p258
      %p260 = scmp.ne.s32.totalorder %s249, %s250
      %p261 = scmp.eq.s32.totalorder %s36, 0
      %p262 = por %p260, %p261
      %p263 = scmp.ne.s32.totalorder %s249, %s250
      %p264 = scmp.eq.s32.totalorder %s37, 3
      %p265 = por %p263, %p264
      %p267 = scmp.ne.s32.totalorder %s250, %s266
      %p268 = scmp.eq.s32.totalorder %s37, 0
      %p269 = por %p267, %p268
      %s270 = ssub.s32 %s39, %s46
      %p271 = scmp.eq.s32.totalorder %s270, 0
      %s273 = sadd.s32 %s272, 1
      %s274 = scalar_select %p271, %s272, %s273
      %p277 = pneg %p271
      %p278 = scmp.eq.s32.totalorder %s31, 3
      %p279 = por %p277, %p278
      %p280 = scmp.ne.s32.totalorder %s272, %s275
      %p281 = scmp.eq.s32.totalorder %s31, 0
      %p282 = por %p280, %p281
      %p283 = scmp.ne.s32.totalorder %s272, %s275
      %p284 = scmp.eq.s32.totalorder %s36, 3
      %p285 = por %p283, %p284
      %p286 = scmp.ne.s32.totalorder %s275, %s276
      %p287 = scmp.eq.s32.totalorder %s36, 0
      %p288 = por %p286, %p287
      %p289 = scmp.ne.s32.totalorder %s275, %s276
      %p290 = scmp.eq.s32.totalorder %s37, 3
      %p291 = por %p289, %p290
      %p293 = scmp.ne.s32.totalorder %s276, %s292
      %p294 = scmp.eq.s32.totalorder %s37, 0
      %p295 = por %p293, %p294
      %s296 = ssub.s32 %s39, %s46
      %p297 = scmp.eq.s32.totalorder %s296, 0
      %s299 = sadd.s32 %s298, 1
      %s300 = scalar_select %p297, %s298, %s299
      %p303 = pneg %p297
      %p304 = scmp.eq.s32.totalorder %s31, 3
      %p305 = por %p303, %p304
      %p306 = scmp.ne.s32.totalorder %s298, %s301
      %p307 = scmp.eq.s32.totalorder %s31, 0
      %p308 = por %p306, %p307
      %p309 = scmp.ne.s32.totalorder %s298, %s301
      %p310 = scmp.eq.s32.totalorder %s36, 3
      %p311 = por %p309, %p310
      %p312 = scmp.ne.s32.totalorder %s301, %s302
      %p313 = scmp.eq.s32.totalorder %s36, 0
      %p314 = por %p312, %p313
      %p315 = scmp.ne.s32.totalorder %s301, %s302
      %p316 = scmp.eq.s32.totalorder %s37, 3
      %p317 = por %p315, %p316
      %p319 = scmp.ne.s32.totalorder %s302, %s318
      %p320 = scmp.eq.s32.totalorder %s37, 0
      %p321 = por %p319, %p320
      %s322 = ssub.s32 %s39, %s46
      %p323 = scmp.eq.s32.totalorder %s322, 0
      %s325 = sadd.s32 %s324, 1
      %s326 = scalar_select %p323, %s324, %s325
      %p329 = pneg %p323
      %p330 = scmp.eq.s32.totalorder %s31, 3
      %p331 = por %p329, %p330
      %p332 = scmp.ne.s32.totalorder %s324, %s327
      %p333 = scmp.eq.s32.totalorder %s31, 0
      %p334 = por %p332, %p333
      %p335 = scmp.ne.s32.totalorder %s324, %s327
      %p336 = scmp.eq.s32.totalorder %s36, 3
      %p337 = por %p335, %p336
      %p338 = scmp.ne.s32.totalorder %s327, %s328
      %p339 = scmp.eq.s32.totalorder %s36, 0
      %p340 = por %p338, %p339
      %p341 = scmp.ne.s32.totalorder %s327, %s328
      %p342 = scmp.eq.s32.totalorder %s37, 3
      %p343 = por %p341, %p342
      %p345 = scmp.ne.s32.totalorder %s328, %s344
      %p346 = scmp.eq.s32.totalorder %s37, 0
      %p347 = por %p345, %p346
      %s348 = ssub.s32 %s39, %s46
      %p349 = scmp.eq.s32.totalorder %s348, 0
      %s351 = sadd.s32 %s350, 1
      %s352 = scalar_select %p349, %s350, %s351
      %p355 = pneg %p349
      %p356 = scmp.eq.s32.totalorder %s31, 3
      %p357 = por %p355, %p356
      %p358 = scmp.ne.s32.totalorder %s350, %s353
      %p359 = scmp.eq.s32.totalorder %s31, 0
      %p360 = por %p358, %p359
      %p361 = scmp.ne.s32.totalorder %s350, %s353
      %p362 = scmp.eq.s32.totalorder %s36, 3
      %p363 = por %p361, %p362
      %p364 = scmp.ne.s32.totalorder %s353, %s354
      %p365 = scmp.eq.s32.totalorder %s36, 0
      %p366 = por %p364, %p365
      %p367 = scmp.ne.s32.totalorder %s353, %s354
      %p368 = scmp.eq.s32.totalorder %s37, 3
      %p369 = por %p367, %p368
      %p371 = scmp.ne.s32.totalorder %s354, %s370
      %p372 = scmp.eq.s32.totalorder %s37, 0
      %p373 = por %p371, %p372
      %s374 = ssub.s32 %s39, %s46
      %p375 = scmp.eq.s32.totalorder %s374, 0
      %s377 = sadd.s32 %s376, 1
      %s378 = scalar_select %p375, %s376, %s377
      %p381 = pneg %p375
      %p382 = scmp.eq.s32.totalorder %s31, 3
      %p383 = por %p381, %p382
      %p384 = scmp.ne.s32.totalorder %s376, %s379
      %p385 = scmp.eq.s32.totalorder %s31, 0
      %p386 = por %p384, %p385
      %p387 = scmp.ne.s32.totalorder %s376, %s379
      %p388 = scmp.eq.s32.totalorder %s36, 3
      %p389 = por %p387, %p388
      %p390 = scmp.ne.s32.totalorder %s379, %s380
      %p391 = scmp.eq.s32.totalorder %s36, 0
      %p392 = por %p390, %p391
      %p393 = scmp.ne.s32.totalorder %s379, %s380
      %p394 = scmp.eq.s32.totalorder %s37, 3
      %p395 = por %p393, %p394
      %p397 = scmp.ne.s32.totalorder %s380, %s396
      %p398 = scmp.eq.s32.totalorder %s37, 0
      %p399 = por %p397, %p398
      %s400 = ssub.s32 %s39, %s46
      %p401 = scmp.eq.s32.totalorder %s400, 0
      %s403 = sadd.s32 %s402, 1
      %s404 = scalar_select %p401, %s402, %s403
      %p407 = pneg %p401
      %p408 = scmp.eq.s32.totalorder %s31, 3
      %p409 = por %p407, %p408
      %p410 = scmp.ne.s32.totalorder %s402, %s405
      %p411 = scmp.eq.s32.totalorder %s31, 0
      %p412 = por %p410, %p411
      %p413 = scmp.ne.s32.totalorder %s402, %s405
      %p414 = scmp.eq.s32.totalorder %s36, 3
      %p415 = por %p413, %p414
      %p416 = scmp.ne.s32.totalorder %s405, %s406
      %p417 = scmp.eq.s32.totalorder %s36, 0
      %p418 = por %p416, %p417
      %p419 = scmp.ne.s32.totalorder %s405, %s406
      %p420 = scmp.eq.s32.totalorder %s37, 3
      %p421 = por %p419, %p420
      %p423 = scmp.ne.s32.totalorder %s406, %s422
      %p424 = scmp.eq.s32.totalorder %s37, 0
      %p425 = por %p423, %p424
      %s426 = ssub.s32 %s39, %s46
      %p427 = scmp.eq.s32.totalorder %s426, 0
      %s429 = sadd.s32 %s428, 1
      %s430 = scalar_select %p427, %s428, %s429
      %p433 = pneg %p427
      %p434 = scmp.eq.s32.totalorder %s31, 3
      %p435 = por %p433, %p434
      %p436 = scmp.ne.s32.totalorder %s428, %s431
      %p437 = scmp.eq.s32.totalorder %s31, 0
      %p438 = por %p436, %p437
      %p439 = scmp.ne.s32.totalorder %s428, %s431
      %p440 = scmp.eq.s32.totalorder %s36, 3
      %p441 = por %p439, %p440
      %p442 = scmp.ne.s32.totalorder %s431, %s432
      %p443 = scmp.eq.s32.totalorder %s36, 0
      %p444 = por %p442, %p443
      %p445 = scmp.ne.s32.totalorder %s431, %s432
      %p446 = scmp.eq.s32.totalorder %s37, 3
      %p447 = por %p445, %p446
      %p449 = scmp.ne.s32.totalorder %s432, %s448
      %p450 = scmp.eq.s32.totalorder %s37, 0
      %p451 = por %p449, %p450
      %s453 = sadd.s32 %s452, 1
      %p456 = scmp.eq.s32.totalorder %s31, 3
      %p457 = scmp.ne.s32.totalorder %s452, %s454
      %p458 = scmp.eq.s32.totalorder %s31, 0
      %p459 = por %p457, %p458
      %p460 = scmp.ne.s32.totalorder %s452, %s454
      %p461 = scmp.eq.s32.totalorder %s36, 3
      %p462 = por %p460, %p461
      %p463 = scmp.ne.s32.totalorder %s454, %s455
      %p464 = scmp.eq.s32.totalorder %s36, 0
      %p465 = por %p463, %p464
      %p466 = scmp.ne.s32.totalorder %s454, %s455
      %p467 = scmp.eq.s32.totalorder %s37, 3
      %p468 = por %p466, %p467
      %p470 = scmp.ne.s32.totalorder %s455, %s469
      %p471 = scmp.eq.s32.totalorder %s37, 0
      %p472 = por %p470, %p471
      %s474 = sadd.s32 %s473, 1
      %p477 = scmp.eq.s32.totalorder %s31, 3
      %p478 = scmp.ne.s32.totalorder %s473, %s475
      %p479 = scmp.eq.s32.totalorder %s31, 0
      %p480 = por %p478, %p479
      %p481 = scmp.ne.s32.totalorder %s473, %s475
      %p482 = scmp.eq.s32.totalorder %s36, 3
      %p483 = por %p481, %p482
      %p484 = scmp.ne.s32.totalorder %s475, %s476
      %p485 = scmp.eq.s32.totalorder %s36, 0
      %p486 = por %p484, %p485
      %p487 = scmp.ne.s32.totalorder %s475, %s476
      %p488 = scmp.eq.s32.totalorder %s37, 3
      %p489 = por %p487, %p488
      %p491 = scmp.ne.s32.totalorder %s476, %s490
      %p492 = scmp.eq.s32.totalorder %s37, 0
      %p493 = por %p491, %p492
      %s495 = sadd.s32 %s494, 1
      %p498 = scmp.eq.s32.totalorder %s31, 3
      %p499 = scmp.ne.s32.totalorder %s494, %s496
      %p500 = scmp.eq.s32.totalorder %s31, 0
      %p501 = por %p499, %p500
      %p502 = scmp.ne.s32.totalorder %s494, %s496
      %p503 = scmp.eq.s32.totalorder %s36, 3
      %p504 = por %p502, %p503
      %p505 = scmp.ne.s32.totalorder %s496, %s497
      %p506 = scmp.eq.s32.totalorder %s36, 0
      %p507 = por %p505, %p506
      %p508 = scmp.ne.s32.totalorder %s496, %s497
      %p509 = scmp.eq.s32.totalorder %s37, 3
      %p510 = por %p508, %p509
      %p512 = scmp.ne.s32.totalorder %s497, %s511
      %p513 = scmp.eq.s32.totalorder %s37, 0
      %p514 = por %p512, %p513
      %s516 = sadd.s32 %s515, 1
      %p519 = scmp.eq.s32.totalorder %s31, 3
      %p520 = scmp.ne.s32.totalorder %s515, %s517
      %p521 = scmp.eq.s32.totalorder %s31, 0
      %p522 = por %p520, %p521
      %p523 = scmp.ne.s32.totalorder %s515, %s517
      %p524 = scmp.eq.s32.totalorder %s36, 3
      %p525 = por %p523, %p524
      %p526 = scmp.ne.s32.totalorder %s517, %s518
      %p527 = scmp.eq.s32.totalorder %s36, 0
      %p528 = por %p526, %p527
      %p529 = scmp.ne.s32.totalorder %s517, %s518
      %p530 = scmp.eq.s32.totalorder %s37, 3
      %p531 = por %p529, %p530
      %p533 = scmp.ne.s32.totalorder %s518, %s532
      %p534 = scmp.eq.s32.totalorder %s37, 0
      %p535 = por %p533, %p534
      %s536 = ssub.s32 %s38, %s50
      %p537 = scmp.eq.s32.totalorder %s536, 0
      %s539 = sadd.s32 %s538, 1
      %s540 = scalar_select %p537, %s538, %s539
      %p543 = pneg %p537
      %p544 = scmp.eq.s32.totalorder %s31, 3
      %p545 = por %p543, %p544
      %p546 = scmp.ne.s32.totalorder %s538, %s541
      %p547 = scmp.eq.s32.totalorder %s31, 0
      %p548 = por %p546, %p547
      %p549 = scmp.ne.s32.totalorder %s538, %s541
      %p550 = scmp.eq.s32.totalorder %s36, 3
      %p551 = por %p549, %p550
      %p552 = scmp.ne.s32.totalorder %s541, %s542
      %p553 = scmp.eq.s32.totalorder %s36, 0
      %p554 = por %p552, %p553
      %p555 = scmp.ne.s32.totalorder %s541, %s542
      %p556 = scmp.eq.s32.totalorder %s37, 3
      %p557 = por %p555, %p556
      %p559 = scmp.ne.s32.totalorder %s542, %s558
      %p560 = scmp.eq.s32.totalorder %s37, 0
      %p561 = por %p559, %p560
      %p562 = scmp.le.s32.totalorder 1, %s31
      %p563 = scmp.lt.s32.totalorder %s31, 5
      %p564 = pnand %p562, %p563
      %p565 = pneg %p564
      // Predicated region
      $region9: #{tpu_custom_call.1} parent=5 // pred_check
        _
      $region10: #{tpu_custom_call.1} parent=5 // pred_check_branch
        %567 = sbr.rel (%p564) target = $region12
      $region11: #{tpu_custom_call.1} parent=5 // pred_region
        %s568 = ssub.s32 %s31, 1
        // Predicated region
        $region13: #{tpu_custom_call.1} parent=11 // pred_check
          %p569 = pneg %p90
        $region14: #{tpu_custom_call.1} parent=11 // pred_check_branch
          %571 = sbr.rel (%p569) target = $region16
        $region15: #{tpu_custom_call.1} parent=11 // pred_region
          _
        $region16: #{tpu_custom_call.1} parent=11 // pred_fallthru
          _
        // Predicated region
        $region17: #{tpu_custom_call.1} parent=11 // pred_check
          %p572 = pneg %p111
        $region18: #{tpu_custom_call.1} parent=11 // pred_check_branch
          %574 = sbr.rel (%p572) target = $region20
        $region19: #{tpu_custom_call.1} parent=11 // pred_region
          %s576 = ssub.s32 16, 16
          %577 = vsyncadd [#allocation4], %s576
          %s579 = sshll.u32 [#allocation3], 4
          %s580 = int_to_ptr.vmem [resolvable:$true] %s579
          %582 = dma.hbm_to_vmem [thread:$0]  %s2, 16, %s580, [#allocation4]
        $region20: #{tpu_custom_call.1} parent=11 // pred_fallthru
          _
        // Predicated region
        $region21: #{tpu_custom_call.1} parent=11 // pred_check
          %p583 = pneg %p132
        $region22: #{tpu_custom_call.1} parent=11 // pred_check_branch
          %585 = sbr.rel (%p583) target = $region24
        $region23: #{tpu_custom_call.1} parent=11 // pred_region
          %s587 = ssub.s32 128, 128
          %588 = vsyncadd [#allocation7], %s587
          %s590 = sshll.u32 [#allocation6], 4
          %s591 = int_to_ptr.vmem [resolvable:$true] %s590
          %593 = dma.hbm_to_vmem [thread:$0]  %s3, 128, %s591, [#allocation7]
        $region24: #{tpu_custom_call.1} parent=11 // pred_fallthru
          _
        // Predicated region
        $region25: #{tpu_custom_call.1} parent=11 // pred_check
          %p594 = pneg %p465
        $region26: #{tpu_custom_call.1} parent=11 // pred_check_branch
          %596 = sbr.rel (%p594) target = $region28
        $region27: #{tpu_custom_call.1} parent=11 // pred_region
          _
        $region28: #{tpu_custom_call.1} parent=11 // pred_fallthru
          _
        // Predicated region
        $region29: #{tpu_custom_call.1} parent=11 // pred_check
          %p597 = pneg %p486
        $region30: #{tpu_custom_call.1} parent=11 // pred_check_branch
          %599 = sbr.rel (%p597) target = $region32
        $region31: #{tpu_custom_call.1} parent=11 // pred_region
          _
        $region32: #{tpu_custom_call.1} parent=11 // pred_fallthru
          _
        // Predicated region
        $region33: #{tpu_custom_call.1} parent=11 // pred_check
          %p600 = pneg %p507
        $region34: #{tpu_custom_call.1} parent=11 // pred_check_branch
          %602 = sbr.rel (%p600) target = $region36
        $region35: #{tpu_custom_call.1} parent=11 // pred_region
          _
        $region36: #{tpu_custom_call.1} parent=11 // pred_fallthru
          _
        // Predicated region
        $region37: #{tpu_custom_call.1} parent=11 // pred_check
          %p603 = pneg %p528
        $region38: #{tpu_custom_call.1} parent=11 // pred_check_branch
          %605 = sbr.rel (%p603) target = $region40
        $region39: #{tpu_custom_call.1} parent=11 // pred_region
          _
        $region40: #{tpu_custom_call.1} parent=11 // pred_fallthru
          _
      $region12: #{tpu_custom_call.1} parent=5 // pred_fallthru
        _
      %p606 = scmp.lt.s32.totalorder %s31, 4
      // Predicated region
      $region41: #{tpu_custom_call.1} parent=5 // pred_check
        %p607 = pneg %p606
      $region42: #{tpu_custom_call.1} parent=5 // pred_check_branch
        %609 = sbr.rel (%p607) target = $region44
      $region43: #{tpu_custom_call.1} parent=5 // pred_region
        // Predicated region
        $region45: #{tpu_custom_call.1} parent=43 // pred_check
          %p610 = pneg %p63
        $region46: #{tpu_custom_call.1} parent=43 // pred_check_branch
          %612 = sbr.rel (%p610) target = $region48
        $region47: #{tpu_custom_call.1} parent=43 // pred_region
          %p613 = scmp.lt.s32.totalorder %s38, 1
          %s614 = scalar_select %p613, %s38, 1
          %s615 = smul.addr %s614, 8
          %s616 = scalar_lea.vmem %s0, %s615
        $region48: #{tpu_custom_call.1} parent=43 // pred_fallthru
          _
        // Predicated region
        $region49: #{tpu_custom_call.1} parent=43 // pred_check
          %p617 = pneg %p152
        $region50: #{tpu_custom_call.1} parent=43 // pred_check_branch
          %619 = sbr.rel (%p617) target = $region52
        $region51: #{tpu_custom_call.1} parent=43 // pred_region
          %s620 = sand.u32 %s31, 1
          %s621 = scalar_lea.sflag [#allocation4], %s620
          %s622 = sand.u32 %s142, 1
          %s623 = scalar_lea.vmem [#allocation8], %s622
          %s625 = ssub.s32 16, 16
          %626 = vsyncadd %s621, %s625
          %s627 = smul.addr %s39, 16
          %s628 = scalar_lea.hbm %s4, %s627
          %s630 = sshll.u32 %s623, 4
          %s631 = int_to_ptr.vmem [resolvable:$true] %s630
          %633 = dma.hbm_to_vmem [thread:$0]  %s628, 16, %s631, %s621
        $region52: #{tpu_custom_call.1} parent=43 // pred_fallthru
          _
        // Predicated region
        $region53: #{tpu_custom_call.1} parent=43 // pred_check
          %p634 = pneg %p178
        $region54: #{tpu_custom_call.1} parent=43 // pred_check_branch
          %636 = sbr.rel (%p634) target = $region56
        $region55: #{tpu_custom_call.1} parent=43 // pred_region
          %s637 = sand.u32 %s31, 1
          %s638 = scalar_lea.sflag [#allocation4], %s637
          %s639 = sand.u32 %s168, 1
          %s640 = scalar_lea.vmem [#allocation9], %s639
          %s642 = ssub.s32 16, 16
          %643 = vsyncadd %s638, %s642
          %s644 = smul.addr %s39, 16
          %s645 = scalar_lea.hbm %s5, %s644
          %s647 = sshll.u32 %s640, 4
          %s648 = int_to_ptr.vmem [resolvable:$true] %s647
          %650 = dma.hbm_to_vmem [thread:$0]  %s645, 16, %s648, %s638
        $region56: #{tpu_custom_call.1} parent=43 // pred_fallthru
          _
        // Predicated region
        $region57: #{tpu_custom_call.1} parent=43 // pred_check
          %p651 = pneg %p204
        $region58: #{tpu_custom_call.1} parent=43 // pred_check_branch
          %653 = sbr.rel (%p651) target = $region60
        $region59: #{tpu_custom_call.1} parent=43 // pred_region
          %p654 = scmp.lt.s32.totalorder %s39, 1
          %s655 = scalar_select %p654, %s39, 1
          %s656 = smul.addr %s655, 16
          %s657 = smul.addr %s656, 4
          %s658 = scalar_lea.vmem %s6, %s657
        $region60: #{tpu_custom_call.1} parent=43 // pred_fallthru
          _
        // Predicated region
        $region61: #{tpu_custom_call.1} parent=43 // pred_check
          %p659 = pneg %p230
        $region62: #{tpu_custom_call.1} parent=43 // pred_check_branch
          %661 = sbr.rel (%p659) target = $region64
        $region63: #{tpu_custom_call.1} parent=43 // pred_region
          %p662 = scmp.lt.s32.totalorder %s39, 1
          %s663 = scalar_select %p662, %s39, 1
          %s664 = smul.addr %s663, 2
          %s665 = scalar_lea.vmem %s7, %s664
        $region64: #{tpu_custom_call.1} parent=43 // pred_fallthru
          _
        // Predicated region
        $region65: #{tpu_custom_call.1} parent=43 // pred_check
          %p666 = pneg %p256
        $region66: #{tpu_custom_call.1} parent=43 // pred_check_branch
          %668 = sbr.rel (%p666) target = $region68
        $region67: #{tpu_custom_call.1} parent=43 // pred_region
          %p669 = scmp.lt.s32.totalorder %s39, 1
          %s670 = scalar_select %p669, %s39, 1
          %s671 = smul.addr %s670, 8
          %s672 = smul.addr %s671, 4
          %s673 = scalar_lea.vmem %s8, %s672
        $region68: #{tpu_custom_call.1} parent=43 // pred_fallthru
          _
        // Predicated region
        $region69: #{tpu_custom_call.1} parent=43 // pred_check
          %p674 = pneg %p282
        $region70: #{tpu_custom_call.1} parent=43 // pred_check_branch
          %676 = sbr.rel (%p674) target = $region72
        $region71: #{tpu_custom_call.1} parent=43 // pred_region
          %p677 = scmp.lt.s32.totalorder %s39, 1
          %s678 = scalar_select %p677, %s39, 1
          %s679 = scalar_lea.vmem %s9, %s678
        $region72: #{tpu_custom_call.1} parent=43 // pred_fallthru
          _
        // Predicated region
        $region73: #{tpu_custom_call.1} parent=43 // pred_check
          %p680 = pneg %p308
        $region74: #{tpu_custom_call.1} parent=43 // pred_check_branch
          %682 = sbr.rel (%p680) target = $region76
        $region75: #{tpu_custom_call.1} parent=43 // pred_region
          %p683 = scmp.lt.s32.totalorder %s39, 1
          %s684 = scalar_select %p683, %s39, 1
          %s685 = scalar_lea.vmem %s10, %s684
        $region76: #{tpu_custom_call.1} parent=43 // pred_fallthru
          _
        // Predicated region
        $region77: #{tpu_custom_call.1} parent=43 // pred_check
          %p686 = pneg %p334
        $region78: #{tpu_custom_call.1} parent=43 // pred_check_branch
          %688 = sbr.rel (%p686) target = $region80
        $region79: #{tpu_custom_call.1} parent=43 // pred_region
          %p689 = scmp.lt.s32.totalorder %s39, 1
          %s690 = scalar_select %p689, %s39, 1
          %s691 = scalar_lea.vmem %s11, %s690
        $region80: #{tpu_custom_call.1} parent=43 // pred_fallthru
          _
        // Predicated region
        $region81: #{tpu_custom_call.1} parent=43 // pred_check
          %p692 = pneg %p360
        $region82: #{tpu_custom_call.1} parent=43 // pred_check_branch
          %694 = sbr.rel (%p692) target = $region84
        $region83: #{tpu_custom_call.1} parent=43 // pred_region
          %p695 = scmp.lt.s32.totalorder %s39, 1
          %s696 = scalar_select %p695, %s39, 1
          %s697 = smul.addr %s696, 16
          %s698 = smul.addr %s697, 4
          %s699 = scalar_lea.vmem %s12, %s698
        $region84: #{tpu_custom_call.1} parent=43 // pred_fallthru
          _
        // Predicated region
        $region85: #{tpu_custom_call.1} parent=43 // pred_check
          %p700 = pneg %p386
        $region86: #{tpu_custom_call.1} parent=43 // pred_check_branch
          %702 = sbr.rel (%p700) target = $region88
        $region87: #{tpu_custom_call.1} parent=43 // pred_region
          %p703 = scmp.lt.s32.totalorder %s39, 1
          %s704 = scalar_select %p703, %s39, 1
          %s705 = smul.addr %s704, 2
          %s706 = scalar_lea.vmem %s13, %s705
        $region88: #{tpu_custom_call.1} parent=43 // pred_fallthru
          _
        // Predicated region
        $region89: #{tpu_custom_call.1} parent=43 // pred_check
          %p707 = pneg %p412
        $region90: #{tpu_custom_call.1} parent=43 // pred_check_branch
          %709 = sbr.rel (%p707) target = $region92
        $region91: #{tpu_custom_call.1} parent=43 // pred_region
          %p710 = scmp.lt.s32.totalorder %s39, 1
          %s711 = scalar_select %p710, %s39, 1
          %s712 = smul.addr %s711, 32
          %s713 = smul.addr %s712, 4
          %s714 = scalar_lea.vmem %s14, %s713
        $region92: #{tpu_custom_call.1} parent=43 // pred_fallthru
          _
        // Predicated region
        $region93: #{tpu_custom_call.1} parent=43 // pred_check
          %p715 = pneg %p438
        $region94: #{tpu_custom_call.1} parent=43 // pred_check_branch
          %717 = sbr.rel (%p715) target = $region96
        $region95: #{tpu_custom_call.1} parent=43 // pred_region
          %p718 = scmp.lt.s32.totalorder %s39, 1
          %s719 = scalar_select %p718, %s39, 1
          %s720 = scalar_lea.vmem %s15, %s719
        $region96: #{tpu_custom_call.1} parent=43 // pred_fallthru
          _
      $region44: #{tpu_custom_call.1} parent=5 // pred_fallthru
        _
      %p721 = scmp.le.s32.totalorder 1, %s31
      %p722 = scmp.lt.s32.totalorder %s31, 5
      %p723 = pnand %p721, %p722
      %p724 = pneg %p723
      // Predicated region
      $region97: #{tpu_custom_call.1} parent=5 // pred_check
        _
      $region98: #{tpu_custom_call.1} parent=5 // pred_check_branch
        %726 = sbr.rel (%p723) target = $region100
      $region99: #{tpu_custom_call.1} parent=5 // pred_region
        %s727 = ssub.s32 %s31, 1
        // Predicated region
        $region101: #{tpu_custom_call.1} parent=99 // pred_check
          %p728 = pneg %p111
        $region102: #{tpu_custom_call.1} parent=99 // pred_check_branch
          %730 = sbr.rel (%p728) target = $region104
        $region103: #{tpu_custom_call.1} parent=99 // pred_region
          %731 = dma.done [#allocation4], 16
        $region104: #{tpu_custom_call.1} parent=99 // pred_fallthru
          _
        // Predicated region
        $region105: #{tpu_custom_call.1} parent=99 // pred_check
          %p732 = pneg %p132
        $region106: #{tpu_custom_call.1} parent=99 // pred_check_branch
          %734 = sbr.rel (%p732) target = $region108
        $region107: #{tpu_custom_call.1} parent=99 // pred_region
          %735 = dma.done [#allocation7], 128
        $region108: #{tpu_custom_call.1} parent=99 // pred_fallthru
          _
        %s736 = sand.u32 %s36, 1
        %s737 = scalar_lea.sflag [#allocation4], %s736
        %s738 = sand.u32 %s145, 1
        %s739 = scalar_lea.vmem [#allocation8], %s738
        // Predicated region
        $region109: #{tpu_custom_call.1} parent=99 // pred_check
          %p740 = pneg %p158
        $region110: #{tpu_custom_call.1} parent=99 // pred_check_branch
          %742 = sbr.rel (%p740) target = $region112
        $region111: #{tpu_custom_call.1} parent=99 // pred_region
          %743 = dma.done %s737, 16
        $region112: #{tpu_custom_call.1} parent=99 // pred_fallthru
          _
        %s744 = sand.u32 %s36, 1
        %s745 = scalar_lea.sflag [#allocation4], %s744
        %s746 = sand.u32 %s171, 1
        %s747 = scalar_lea.vmem [#allocation9], %s746
        // Predicated region
        $region113: #{tpu_custom_call.1} parent=99 // pred_check
          %p748 = pneg %p184
        $region114: #{tpu_custom_call.1} parent=99 // pred_check_branch
          %750 = sbr.rel (%p748) target = $region116
        $region115: #{tpu_custom_call.1} parent=99 // pred_region
          %751 = dma.done %s745, 16
        $region116: #{tpu_custom_call.1} parent=99 // pred_fallthru
          _
        %p752 = scmp.lt.s32.totalorder %s40, 1
        %s753 = scalar_select %p752, %s40, 1
        %s754 = smul.addr %s753, 8
        %s755 = scalar_lea.vmem %s0, %s754
        %p756 = pneg %p69
        %p757 = pneg %p66
        %p758 = pneg %p90
        %p759 = pneg %p87
        %p760 = pneg %p111
        %p761 = pneg %p108
        %p762 = pneg %p132
        %p763 = pneg %p129
        %s764 = sand.u32 %s36, 1
        %s765 = scalar_lea.sflag [#allocation4], %s764
        %s766 = sand.u32 %s145, 1
        %s767 = scalar_lea.vmem [#allocation8], %s766
        %p768 = pneg %p158
        %p769 = pneg %p155
        %s770 = sand.u32 %s36, 1
        %s771 = scalar_lea.sflag [#allocation4], %s770
        %s772 = sand.u32 %s171, 1
        %s773 = scalar_lea.vmem [#allocation9], %s772
        %p774 = pneg %p184
        %p775 = pneg %p181
        %p776 = scmp.lt.s32.totalorder %s41, 1
        %s777 = scalar_select %p776, %s41, 1
        %s778 = smul.addr %s777, 16
        %s779 = smul.addr %s778, 4
        %s780 = scalar_lea.vmem %s6, %s779
        %p781 = pneg %p210
        %p782 = pneg %p207
        %p783 = scmp.lt.s32.totalorder %s41, 1
        %s784 = scalar_select %p783, %s41, 1
        %s785 = smul.addr %s784, 2
        %s786 = scalar_lea.vmem %s7, %s785
        %p787 = pneg %p236
        %p788 = pneg %p233
        %p789 = scmp.lt.s32.totalorder %s41, 1
        %s790 = scalar_select %p789, %s41, 1
        %s791 = smul.addr %s790, 8
        %s792 = smul.addr %s791, 4
        %s793 = scalar_lea.vmem %s8, %s792
        %p794 = pneg %p262
        %p795 = pneg %p259
        %p796 = scmp.lt.s32.totalorder %s41, 1
        %s797 = scalar_select %p796, %s41, 1
        %s798 = scalar_lea.vmem %s9, %s797
        %p799 = pneg %p288
        %p800 = pneg %p285
        %p801 = scmp.lt.s32.totalorder %s41, 1
        %s802 = scalar_select %p801, %s41, 1
        %s803 = scalar_lea.vmem %s10, %s802
        %p804 = pneg %p314
        %p805 = pneg %p311
        %p806 = scmp.lt.s32.totalorder %s41, 1
        %s807 = scalar_select %p806, %s41, 1
        %s808 = scalar_lea.vmem %s11, %s807
        %p809 = pneg %p340
        %p810 = pneg %p337
        %p811 = scmp.lt.s32.totalorder %s41, 1
        %s812 = scalar_select %p811, %s41, 1
        %s813 = smul.addr %s812, 16
        %s814 = smul.addr %s813, 4
        %s815 = scalar_lea.vmem %s12, %s814
        %p816 = pneg %p366
        %p817 = pneg %p363
        %p818 = scmp.lt.s32.totalorder %s41, 1
        %s819 = scalar_select %p818, %s41, 1
        %s820 = smul.addr %s819, 2
        %s821 = scalar_lea.vmem %s13, %s820
        %p822 = pneg %p392
        %p823 = pneg %p389
        %p824 = scmp.lt.s32.totalorder %s41, 1
        %s825 = scalar_select %p824, %s41, 1
        %s826 = smul.addr %s825, 32
        %s827 = smul.addr %s826, 4
        %s828 = scalar_lea.vmem %s14, %s827
        %p829 = pneg %p418
        %p830 = pneg %p415
        %p831 = scmp.lt.s32.totalorder %s41, 1
        %s832 = scalar_select %p831, %s41, 1
        %s833 = scalar_lea.vmem %s15, %s832
        %p834 = pneg %p444
        %p835 = pneg %p441
        %p836 = pneg %p465
        %p837 = pneg %p462
        %p838 = pneg %p486
        %p839 = pneg %p483
        %p840 = pneg %p507
        %p841 = pneg %p504
        %p842 = pneg %p528
        %p843 = pneg %p525
        %p844 = pneg %p554
        %p845 = pneg %p551
        %s846 = sand.u32 %s541, 1
        %s847 = scalar_lea.sflag [#allocation5], %s846
        %s848 = sand.u32 %s541, 1
        %s849 = smul.addr %s848, 4
        %s850 = scalar_lea.vmem [#allocation10], %s849
        %p851 = scmp.lt.s32.totalorder %s40, 1
        %s852 = scalar_select %p851, %s40, 1
        %s853 = smul.addr %s852, 8
        %s854 = scalar_lea.vmem %s0, %s853
        %p855 = scmp.lt.s32.totalorder %s41, 1
        %s856 = scalar_select %p855, %s41, 1
        %s857 = smul.addr %s856, 16
        %s858 = smul.addr %s857, 4
        %s859 = scalar_lea.vmem %s6, %s858
        %p860 = scmp.lt.s32.totalorder %s41, 1
        %s861 = scalar_select %p860, %s41, 1
        %s862 = smul.addr %s861, 2
        %s863 = scalar_lea.vmem %s7, %s862
        %p864 = scmp.lt.s32.totalorder %s41, 1
        %s865 = scalar_select %p864, %s41, 1
        %s866 = smul.addr %s865, 8
        %s867 = smul.addr %s866, 4
        %s868 = scalar_lea.vmem %s8, %s867
        %p869 = scmp.lt.s32.totalorder %s41, 1
        %s870 = scalar_select %p869, %s41, 1
        %s871 = scalar_lea.vmem %s9, %s870
        %p872 = scmp.lt.s32.totalorder %s41, 1
        %s873 = scalar_select %p872, %s41, 1
        %s874 = scalar_lea.vmem %s10, %s873
        %p875 = scmp.lt.s32.totalorder %s41, 1
        %s876 = scalar_select %p875, %s41, 1
        %s877 = scalar_lea.vmem %s11, %s876
        %p878 = scmp.lt.s32.totalorder %s41, 1
        %s879 = scalar_select %p878, %s41, 1
        %s880 = smul.addr %s879, 16
        %s881 = smul.addr %s880, 4
        %s882 = scalar_lea.vmem %s12, %s881
        %p883 = scmp.lt.s32.totalorder %s41, 1
        %s884 = scalar_select %p883, %s41, 1
        %s885 = smul.addr %s884, 2
        %s886 = scalar_lea.vmem %s13, %s885
        %p887 = scmp.lt.s32.totalorder %s41, 1
        %s888 = scalar_select %p887, %s41, 1
        %s889 = smul.addr %s888, 32
        %s890 = smul.addr %s889, 4
        %s891 = scalar_lea.vmem %s14, %s890
        %p892 = scmp.lt.s32.totalorder %s41, 1
        %s893 = scalar_select %p892, %s41, 1
        %s894 = scalar_lea.vmem %s15, %s893
        %p896 = scmp.eq.s32.totalorder %s41, 0
        // Predicated region
        $region117: #{tpu_custom_call.1} parent=99 // pred_check
          %p897 = pneg %p896
        $region118: #{tpu_custom_call.1} parent=99 // pred_check_branch
          %899 = sbr.rel (%p897) target = $region120
        $region119: #{tpu_custom_call.1} parent=99 // pred_region
          %v900 = vld [vmem:[%s854] sm:$0xff]
          %v901 = vld [vmem:[%s1] sm:$0xf]
          %v902 = vld [vmem:[%s1 + $0x4] sm:$0xf]
          %v903 = vld [vmem:[%s1 + $0x8] sm:$0xf]
          %v904 = vld [vmem:[%s1 + $0xc] sm:$0xf]
          %v905 = vpack.c.bf16 %v900, %v900
          %v906 = vld [vmem:[#allocation3] sm:$0x1]
          %v908 = vlaneseq
          %v909 = vshrl.u32 %v908, 7
          %v910 = vsub.s32 0, %v909
          %v911 = vrot.slane %v906, %v910
          %v917 = vunpack.c.l.b16 %v901
          %v918 = vunpack.c.l.b16 %v902
          %v919 = vunpack.c.l.b16 %v903
          %v920 = vunpack.c.l.b16 %v904
          %v921 = vpack.c.b16 %v918, %v917
          %v922 = vpack.c.b16 %v920, %v919
          %vm925 = vcmask 261120
          %v927 = vsel %vm925, %v905, 0
          %929 = vmatprep.subr.bf16.mxu0 0
          %930 = vmatpush1.bf16.msra.mxu0 0
          %931 = vmatprep.subr.bf16.mxu0 0
          %932 = vmatpush1.bf16.msra.mxu0 0
          %933 = vmatprep.subr.bf16.mxu0 0
          %934 = vmatpush1.bf16.msra.mxu0 0
          %935 = vmatprep.subr.bf16.mxu0 0
          %936 = vmatpush1.bf16.msra.mxu0 0
          %937 = vmatprep.subr.bf16.mxu0 0
          %938 = vmatpush1.bf16.msra.mxu0 0
          %939 = vmatprep.subr.bf16.mxu0 0
          %940 = vmatpush1.bf16.msra.mxu0 0
          %941 = vmatprep.subr.bf16.mxu0 0
          %942 = vmatpush1.bf16.msra.mxu0 %v922
          %943 = vmatprep.subr.bf16.mxu0 0
          %944 = vmatpush1.bf16.msra.mxu0 %v921
          %945 = vmatprep.subr.bf16.mxu0 0
          %946 = vmatpush2.bf16.msra.mxu0 0
          %947 = vmatprep.subr.bf16.mxu0 0
          %948 = vmatpush2.bf16.msra.mxu0 0
          %949 = vmatprep.subr.bf16.mxu0 0
          %950 = vmatpush2.bf16.msra.mxu0 0
          %951 = vmatprep.subr.bf16.mxu0 0
          %952 = vmatpush2.bf16.msra.mxu0 0
          %953 = vmatprep.subr.bf16.mxu0 0
          %954 = vmatpush2.bf16.msra.mxu0 0
          %955 = vmatprep.subr.bf16.mxu0 0
          %956 = vmatpush2.bf16.msra.mxu0 0
          %957 = vmatprep.subr.bf16.mxu0 0
          %958 = vmatpush2.bf16.msra.mxu0 0
          %959 = vmatprep.subr.bf16.mxu0 0
          %960 = vmatpush2.bf16.msra.mxu0 0
          %961 = vmatprep.mubr.bf16.mxu0 0
          %962 = vmatmul.mubr.bf16.gmra.mxu0 %v927
          %v963 = vpop.f32.mrf.mxu0
          %v964 = vadd.f32 %v911, %v963
          %v965 = vpop.f32.mrf.mxu0
          %v966 = vpop.f32.mrf.mxu0
          %v967 = vpop.f32.mrf.mxu0
          %968 = vdwg.mxu0
          %v969 = vld [vmem:[#allocation6] sm:$0xff]
          %v970 = vadd.f32 %v964, %v969
          %vm971 = vcmask 523264
          %972 = vst.msk [vmem:[#allocation2] sm:$0xff] %vm971, %v970
        $region120: #{tpu_custom_call.1} parent=99 // pred_fallthru
          _
        %v973 = vld [vmem:[#allocation2] sm:$0xff]
        %v974 = vld [vmem:[%s739] sm:$0x1]
        %v975 = vld [vmem:[%s747] sm:$0x1]
        %vm976 = vcmask 523264
        %v977 = vsel %vm976, %v973, 0.0
        %978 = vadd.xlane.f32.xlu0 %v977
        %v979 = vpop.xlane.xlu0 %978
        %v980 = vrcp.pop 64.0
        %v981 = vmul.f32 %v979, %v980
        %v982 = vsub.f32 %v973, %v981
        %v983 = vmul.f32 %v982, %v982
        %v984 = vsel %vm976, %v983, 0.0
        %985 = vadd.xlane.f32.xlu0 %v984
        %v986 = vpop.xlane.xlu0 %985
        %v987 = vmul.f32 %v986, %v980
        %v988 = vadd.f32 %v987, 1e-05
        %v989 = vrsqrt.pop %v988
        %v990 = vmul.f32 %v982, %v989
        %v992 = vlaneseq
        %v993 = vshrl.u32 %v992, 7
        %v994 = vsub.s32 0, %v993
        %v995 = vrot.slane %v974, %v994
        %v997 = vmul.f32 %v990, %v995
        %v999 = vlaneseq
        %v1000 = vshrl.u32 %v999, 7
        %v1001 = vsub.s32 0, %v1000
        %v1002 = vrot.slane %v975, %v1001
        %v1004 = vadd.f32 %v997, %v1002
        %v1005 = vld [vmem:[%s859] sm:$0xff]
        %v1006 = vld [vmem:[%s859 + $0x8] sm:$0xff]
        %v1007 = vld [vmem:[%s859 + $0x10] sm:$0xff]
        %v1008 = vld [vmem:[%s859 + $0x18] sm:$0xff]
        %v1009 = vld [vmem:[%s859 + $0x20] sm:$0xff]
        %v1010 = vld [vmem:[%s859 + $0x28] sm:$0xff]
        %v1011 = vld [vmem:[%s859 + $0x30] sm:$0xff]
        %v1012 = vld [vmem:[%s859 + $0x38] sm:$0xff]
        %v1013 = vpack.c.bf16 %v1004, %v1004
        %v1014 = vld [vmem:[%s863] sm:$0x3]
        %v1016 = vlaneseq
        %v1017 = vshrl.u32 %v1016, 7
        %v1018 = vsub.s32 0, %v1017
        %v1019 = vrot.slane %v1014, %v1018
        %v1020 = vlaneseq
        %v1021 = vshrl.u32 %v1020, 7
        %v1022 = vsub.s32 1, %v1021
        %v1023 = vrot.slane %v1014, %v1022
        %v1034 = vunpack.c.l.b16 %v1005
        %v1035 = vunpack.c.h.b16 %v1005
        %v1036 = vunpack.c.l.b16 %v1006
        %v1037 = vunpack.c.h.b16 %v1006
        %v1038 = vunpack.c.l.b16 %v1007
        %v1039 = vunpack.c.h.b16 %v1007
        %v1040 = vunpack.c.l.b16 %v1008
        %v1041 = vunpack.c.h.b16 %v1008
        %v1042 = vunpack.c.l.b16 %v1009
        %v1043 = vunpack.c.h.b16 %v1009
        %v1044 = vunpack.c.l.b16 %v1010
        %v1045 = vunpack.c.h.b16 %v1010
        %v1046 = vunpack.c.l.b16 %v1011
        %v1047 = vunpack.c.h.b16 %v1011
        %v1048 = vunpack.c.l.b16 %v1012
        %v1049 = vunpack.c.h.b16 %v1012
        %v1050 = vpack.c.b16 %v1036, %v1034
        %v1051 = vpack.c.b16 %v1037, %v1035
        %v1052 = vpack.c.b16 %v1040, %v1038
        %v1053 = vpack.c.b16 %v1041, %v1039
        %v1054 = vpack.c.b16 %v1044, %v1042
        %v1055 = vpack.c.b16 %v1045, %v1043
        %v1056 = vpack.c.b16 %v1048, %v1046
        %v1057 = vpack.c.b16 %v1049, %v1047
        %v1067 = vsel %vm976, %v1013, 0
        %1069 = vmatprep.subr.bf16.mxu0 0
        %1070 = vmatpush1.bf16.msra.mxu0 0
        %1071 = vmatprep.subr.bf16.mxu0 0
        %1072 = vmatpush1.bf16.msra.mxu0 0
        %1073 = vmatprep.subr.bf16.mxu0 0
        %1074 = vmatpush1.bf16.msra.mxu0 0
        %1075 = vmatprep.subr.bf16.mxu0 0
        %1076 = vmatpush1.bf16.msra.mxu0 0
        %1077 = vmatprep.subr.bf16.mxu0 %v1057
        %1078 = vmatpush1.bf16.msra.mxu0 %v1056
        %1079 = vmatprep.subr.bf16.mxu0 %v1055
        %1080 = vmatpush1.bf16.msra.mxu0 %v1054
        %1081 = vmatprep.subr.bf16.mxu0 %v1053
        %1082 = vmatpush1.bf16.msra.mxu0 %v1052
        %1083 = vmatprep.subr.bf16.mxu0 %v1051
        %1084 = vmatpush1.bf16.msra.mxu0 %v1050
        %1085 = vmatprep.subr.bf16.mxu0 0
        %1086 = vmatpush2.bf16.msra.mxu0 0
        %1087 = vmatprep.subr.bf16.mxu0 0
        %1088 = vmatpush2.bf16.msra.mxu0 0
        %1089 = vmatprep.subr.bf16.mxu0 0
        %1090 = vmatpush2.bf16.msra.mxu0 0
        %1091 = vmatprep.subr.bf16.mxu0 0
        %1092 = vmatpush2.bf16.msra.mxu0 0
        %1093 = vmatprep.subr.bf16.mxu0 0
        %1094 = vmatpush2.bf16.msra.mxu0 0
        %1095 = vmatprep.subr.bf16.mxu0 0
        %1096 = vmatpush2.bf16.msra.mxu0 0
        %1097 = vmatprep.subr.bf16.mxu0 0
        %1098 = vmatpush2.bf16.msra.mxu0 0
        %1099 = vmatprep.subr.bf16.mxu0 0
        %1100 = vmatpush2.bf16.msra.mxu0 0
        %1101 = vmatprep.mubr.bf16.mxu0 0
        %1102 = vmatmul.mubr.bf16.gmra.mxu0 %v1067
        %v1103 = vpop.f32.mrf.mxu0
        %v1104 = vadd.f32 %v1019, %v1103
        %v1105 = vpop.f32.mrf.mxu0
        %v1106 = vadd.f32 %v1023, %v1105
        %v1107 = vpop.f32.mrf.mxu0
        %v1108 = vpop.f32.mrf.mxu0
        %1109 = vdwg.mxu0
        %v1110 = vpack.c.bf16 %v1104, %v1104
        %v1111 = vpack.c.bf16 %v1106, %v1106
        %1113 = vrot.lane.b32.xlu0 %v1110, 64
        %v1114 = vpop.permute.xlu0 %1113
        %vm1115 = vcmask 130048
        %v1117 = vsel %vm1115, %v1110, 0
        %v1120 = vsel %vm1115, %v1114, 0
        %1122 = vmatprep.subr.bf16.mxu0 0
        %1123 = vmatpush1.bf16.xpose.msra.mxu0 0
        %1124 = vmatprep.subr.bf16.mxu0 0
        %1125 = vmatpush1.bf16.xpose.msra.mxu0 0
        %1126 = vmatprep.subr.bf16.mxu0 0
        %1127 = vmatpush1.bf16.xpose.msra.mxu0 0
        %1128 = vmatprep.subr.bf16.mxu0 0
        %1129 = vmatpush1.bf16.xpose.msra.mxu0 0
        %1130 = vmatprep.subr.bf16.mxu0 0
        %1131 = vmatpush1.bf16.xpose.msra.mxu0 0
        %1132 = vmatprep.subr.bf16.mxu0 0
        %1133 = vmatpush1.bf16.xpose.msra.mxu0 0
        %1134 = vmatprep.subr.bf16.mxu0 0
        %1135 = vmatpush1.bf16.xpose.msra.mxu0 0
        %1136 = vmatprep.subr.bf16.mxu0 0
        %1137 = vmatpush1.bf16.xpose.msra.mxu0 %v1120
        %1138 = vmatprep.subr.bf16.mxu0 0
        %1139 = vmatpush2.bf16.xpose.msra.mxu0 0
        %1140 = vmatprep.subr.bf16.mxu0 0
        %1141 = vmatpush2.bf16.xpose.msra.mxu0 0
        %1142 = vmatprep.subr.bf16.mxu0 0
        %1143 = vmatpush2.bf16.xpose.msra.mxu0 0
        %1144 = vmatprep.subr.bf16.mxu0 0
        %1145 = vmatpush2.bf16.xpose.msra.mxu0 0
        %1146 = vmatprep.subr.bf16.mxu0 0
        %1147 = vmatpush2.bf16.xpose.msra.mxu0 0
        %1148 = vmatprep.subr.bf16.mxu0 0
        %1149 = vmatpush2.bf16.xpose.msra.mxu0 0
        %1150 = vmatprep.subr.bf16.mxu0 0
        %1151 = vmatpush2.bf16.xpose.msra.mxu0 0
        %1152 = vmatprep.subr.bf16.mxu0 0
        %1153 = vmatpush2.bf16.xpose.msra.mxu0 0
        %1154 = vmatprep.mubr.bf16.mxu0 0
        %1155 = vmatmul.mubr.bf16.gmra.mxu0 %v1117
        %v1156 = vpop.f32.mrf.mxu0
        %v1157 = vadd.f32 0.0, %v1156
        %v1158 = vpop.f32.mrf.mxu0
        %v1159 = vpop.f32.mrf.mxu0
        %v1160 = vpop.f32.mrf.mxu0
        %1161 = vdwg.mxu0
        %vm1162 = vcmask 64512
        %v1163 = vsel %vm1162, %v1157, -inf
        %1164 = vmax.xlane.f32.xlu0 %v1163
        %v1165 = vpop.xlane.xlu0 %1164
        %v1166 = vsub.f32 %v1157, %v1165
        %v1167 = vmul.f32 %v1166, 1.442695
        %v1168 = vpow.pop %v1167
        %v1169 = vsel %vm1162, %v1168, 0.0
        %1170 = vadd.xlane.f32.xlu0 %v1169
        %v1171 = vpop.xlane.xlu0 %1170
        %v1172 = vrcp.pop %v1171
        %v1173 = vpack.c.bf16 %v1168, %v1168
        %v1175 = vsel %vm1162, %v1173, 0
        %vm1177 = vcmask 1043456
        %v1179 = vsel %vm1177, %v1111, 0
        %1181 = vmatprep.subr.bf16.mxu0 0
        %1182 = vmatpush1.bf16.msra.mxu0 0
        %1183 = vmatprep.subr.bf16.mxu0 0
        %1184 = vmatpush1.bf16.msra.mxu0 0
        %1185 = vmatprep.subr.bf16.mxu0 0
        %1186 = vmatpush1.bf16.msra.mxu0 0
        %1187 = vmatprep.subr.bf16.mxu0 0
        %1188 = vmatpush1.bf16.msra.mxu0 0
        %1189 = vmatprep.subr.bf16.mxu0 0
        %1190 = vmatpush1.bf16.msra.mxu0 0
        %1191 = vmatprep.subr.bf16.mxu0 0
        %1192 = vmatpush1.bf16.msra.mxu0 0
        %1193 = vmatprep.subr.bf16.mxu0 0
        %1194 = vmatpush1.bf16.msra.mxu0 0
        %1195 = vmatprep.subr.bf16.mxu0 0
        %1196 = vmatpush1.bf16.msra.mxu0 %v1179
        %1197 = vmatprep.subr.bf16.mxu0 0
        %1198 = vmatpush2.bf16.msra.mxu0 0
        %1199 = vmatprep.subr.bf16.mxu0 0
        %1200 = vmatpush2.bf16.msra.mxu0 0
        %1201 = vmatprep.subr.bf16.mxu0 0
        %1202 = vmatpush2.bf16.msra.mxu0 0
        %1203 = vmatprep.subr.bf16.mxu0 0
        %1204 = vmatpush2.bf16.msra.mxu0 0
        %1205 = vmatprep.subr.bf16.mxu0 0
        %1206 = vmatpush2.bf16.msra.mxu0 0
        %1207 = vmatprep.subr.bf16.mxu0 0
        %1208 = vmatpush2.bf16.msra.mxu0 0
        %1209 = vmatprep.subr.bf16.mxu0 0
        %1210 = vmatpush2.bf16.msra.mxu0 0
        %1211 = vmatprep.subr.bf16.mxu0 0
        %1212 = vmatpush2.bf16.msra.mxu0 0
        %1213 = vmatprep.mubr.bf16.mxu0 0
        %1214 = vmatmul.mubr.bf16.gmra.mxu0 %v1175
        %v1215 = vpop.f32.mrf.mxu0
        %v1216 = vadd.f32 0.0, %v1215
        %v1217 = vpop.f32.mrf.mxu0
        %v1218 = vpop.f32.mrf.mxu0
        %v1219 = vpop.f32.mrf.mxu0
        %1220 = vdwg.mxu0
        %v1221 = vmul.f32 %v1216, %v1172
        %1222 = vrot.lane.b32.xlu0 %v1110, 112
        %v1223 = vpop.permute.xlu0 %1222
        %1224 = vrot.lane.b32.xlu0 %v1110, 48
        %v1225 = vpop.permute.xlu0 %1224
        %v1227 = vsel %vm1115, %v1223, 0
        %v1230 = vsel %vm1115, %v1225, 0
        %1232 = vmatprep.subr.bf16.mxu0 0
        %1233 = vmatpush1.bf16.xpose.msra.mxu0 0
        %1234 = vmatprep.subr.bf16.mxu0 0
        %1235 = vmatpush1.bf16.xpose.msra.mxu0 0
        %1236 = vmatprep.subr.bf16.mxu0 0
        %1237 = vmatpush1.bf16.xpose.msra.mxu0 0
        %1238 = vmatprep.subr.bf16.mxu0 0
        %1239 = vmatpush1.bf16.xpose.msra.mxu0 0
        %1240 = vmatprep.subr.bf16.mxu0 0
        %1241 = vmatpush1.bf16.xpose.msra.mxu0 0
        %1242 = vmatprep.subr.bf16.mxu0 0
        %1243 = vmatpush1.bf16.xpose.msra.mxu0 0
        %1244 = vmatprep.subr.bf16.mxu0 0
        %1245 = vmatpush1.bf16.xpose.msra.mxu0 0
        %1246 = vmatprep.subr.bf16.mxu0 0
        %1247 = vmatpush1.bf16.xpose.msra.mxu0 %v1230
        %1248 = vmatprep.subr.bf16.mxu0 0
        %1249 = vmatpush2.bf16.xpose.msra.mxu0 0
        %1250 = vmatprep.subr.bf16.mxu0 0
        %1251 = vmatpush2.bf16.xpose.msra.mxu0 0
        %1252 = vmatprep.subr.bf16.mxu0 0
        %1253 = vmatpush2.bf16.xpose.msra.mxu0 0
        %1254 = vmatprep.subr.bf16.mxu0 0
        %1255 = vmatpush2.bf16.xpose.msra.mxu0 0
        %1256 = vmatprep.subr.bf16.mxu0 0
        %1257 = vmatpush2.bf16.xpose.msra.mxu0 0
        %1258 = vmatprep.subr.bf16.mxu0 0
        %1259 = vmatpush2.bf16.xpose.msra.mxu0 0
        %1260 = vmatprep.subr.bf16.mxu0 0
        %1261 = vmatpush2.bf16.xpose.msra.mxu0 0
        %1262 = vmatprep.subr.bf16.mxu0 0
        %1263 = vmatpush2.bf16.xpose.msra.mxu0 0
        %1264 = vmatprep.mubr.bf16.mxu0 0
        %1265 = vmatmul.mubr.bf16.gmra.mxu0 %v1227
        %v1266 = vpop.f32.mrf.mxu0
        %v1267 = vadd.f32 0.0, %v1266
        %v1268 = vpop.f32.mrf.mxu0
        %v1269 = vpop.f32.mrf.mxu0
        %v1270 = vpop.f32.mrf.mxu0
        %1271 = vdwg.mxu0
        %v1272 = vsel %vm1162, %v1267, -inf
        %1273 = vmax.xlane.f32.xlu0 %v1272
        %v1274 = vpop.xlane.xlu0 %1273
        %v1275 = vsub.f32 %v1267, %v1274
        %v1276 = vmul.f32 %v1275, 1.442695
        %v1277 = vpow.pop %v1276
        %v1278 = vsel %vm1162, %v1277, 0.0
        %1279 = vadd.xlane.f32.xlu0 %v1278
        %v1280 = vpop.xlane.xlu0 %1279
        %v1281 = vrcp.pop %v1280
        %v1282 = vpack.c.bf16 %v1277, %v1277
        %1284 = vrot.lane.b32.xlu0 %v1111, 112
        %v1285 = vpop.permute.xlu0 %1284
        %v1287 = vsel %vm1162, %v1282, 0
        %v1290 = vsel %vm1177, %v1285, 0
        %1292 = vmatprep.subr.bf16.mxu0 0
        %1293 = vmatpush1.bf16.msra.mxu0 0
        %1294 = vmatprep.subr.bf16.mxu0 0
        %1295 = vmatpush1.bf16.msra.mxu0 0
        %1296 = vmatprep.subr.bf16.mxu0 0
        %1297 = vmatpush1.bf16.msra.mxu0 0
        %1298 = vmatprep.subr.bf16.mxu0 0
        %1299 = vmatpush1.bf16.msra.mxu0 0
        %1300 = vmatprep.subr.bf16.mxu0 0
        %1301 = vmatpush1.bf16.msra.mxu0 0
        %1302 = vmatprep.subr.bf16.mxu0 0
        %1303 = vmatpush1.bf16.msra.mxu0 0
        %1304 = vmatprep.subr.bf16.mxu0 0
        %1305 = vmatpush1.bf16.msra.mxu0 0
        %1306 = vmatprep.subr.bf16.mxu0 0
        %1307 = vmatpush1.bf16.msra.mxu0 %v1290
        %1308 = vmatprep.subr.bf16.mxu0 0
        %1309 = vmatpush2.bf16.msra.mxu0 0
        %1310 = vmatprep.subr.bf16.mxu0 0
        %1311 = vmatpush2.bf16.msra.mxu0 0
        %1312 = vmatprep.subr.bf16.mxu0 0
        %1313 = vmatpush2.bf16.msra.mxu0 0
        %1314 = vmatprep.subr.bf16.mxu0 0
        %1315 = vmatpush2.bf16.msra.mxu0 0
        %1316 = vmatprep.subr.bf16.mxu0 0
        %1317 = vmatpush2.bf16.msra.mxu0 0
        %1318 = vmatprep.subr.bf16.mxu0 0
        %1319 = vmatpush2.bf16.msra.mxu0 0
        %1320 = vmatprep.subr.bf16.mxu0 0
        %1321 = vmatpush2.bf16.msra.mxu0 0
        %1322 = vmatprep.subr.bf16.mxu0 0
        %1323 = vmatpush2.bf16.msra.mxu0 0
        %1324 = vmatprep.mubr.bf16.mxu0 0
        %1325 = vmatmul.mubr.bf16.gmra.mxu0 %v1287
        %v1326 = vpop.f32.mrf.mxu0
        %v1327 = vadd.f32 0.0, %v1326
        %v1328 = vpop.f32.mrf.mxu0
        %v1329 = vpop.f32.mrf.mxu0
        %v1330 = vpop.f32.mrf.mxu0
        %1331 = vdwg.mxu0
        %v1332 = vmul.f32 %v1327, %v1281
        %1333 = vrot.lane.b32.xlu0 %v1110, 96
        %v1334 = vpop.permute.xlu0 %1333
        %1335 = vrot.lane.b32.xlu0 %v1110, 32
        %v1336 = vpop.permute.xlu0 %1335
        %v1338 = vsel %vm1115, %v1334, 0
        %v1341 = vsel %vm1115, %v1336, 0
        %1343 = vmatprep.subr.bf16.mxu0 0
        %1344 = vmatpush1.bf16.xpose.msra.mxu0 0
        %1345 = vmatprep.subr.bf16.mxu0 0
        %1346 = vmatpush1.bf16.xpose.msra.mxu0 0
        %1347 = vmatprep.subr.bf16.mxu0 0
        %1348 = vmatpush1.bf16.xpose.msra.mxu0 0
        %1349 = vmatprep.subr.bf16.mxu0 0
        %1350 = vmatpush1.bf16.xpose.msra.mxu0 0
        %1351 = vmatprep.subr.bf16.mxu0 0
        %1352 = vmatpush1.bf16.xpose.msra.mxu0 0
        %1353 = vmatprep.subr.bf16.mxu0 0
        %1354 = vmatpush1.bf16.xpose.msra.mxu0 0
        %1355 = vmatprep.subr.bf16.mxu0 0
        %1356 = vmatpush1.bf16.xpose.msra.mxu0 0
        %1357 = vmatprep.subr.bf16.mxu0 0
        %1358 = vmatpush1.bf16.xpose.msra.mxu0 %v1341
        %1359 = vmatprep.subr.bf16.mxu0 0
        %1360 = vmatpush2.bf16.xpose.msra.mxu0 0
        %1361 = vmatprep.subr.bf16.mxu0 0
        %1362 = vmatpush2.bf16.xpose.msra.mxu0 0
        %1363 = vmatprep.subr.bf16.mxu0 0
        %1364 = vmatpush2.bf16.xpose.msra.mxu0 0
        %1365 = vmatprep.subr.bf16.mxu0 0
        %1366 = vmatpush2.bf16.xpose.msra.mxu0 0
        %1367 = vmatprep.subr.bf16.mxu0 0
        %1368 = vmatpush2.bf16.xpose.msra.mxu0 0
        %1369 = vmatprep.subr.bf16.mxu0 0
        %1370 = vmatpush2.bf16.xpose.msra.mxu0 0
        %1371 = vmatprep.subr.bf16.mxu0 0
        %1372 = vmatpush2.bf16.xpose.msra.mxu0 0
        %1373 = vmatprep.subr.bf16.mxu0 0
        %1374 = vmatpush2.bf16.xpose.msra.mxu0 0
        %1375 = vmatprep.mubr.bf16.mxu0 0
        %1376 = vmatmul.mubr.bf16.gmra.mxu0 %v1338
        %v1377 = vpop.f32.mrf.mxu0
        %v1378 = vadd.f32 0.0, %v1377
        %v1379 = vpop.f32.mrf.mxu0
        %v1380 = vpop.f32.mrf.mxu0
        %v1381 = vpop.f32.mrf.mxu0
        %1382 = vdwg.mxu0
        %v1383 = vsel %vm1162, %v1378, -inf
        %1384 = vmax.xlane.f32.xlu0 %v1383
        %v1385 = vpop.xlane.xlu0 %1384
        %v1386 = vsub.f32 %v1378, %v1385
        %v1387 = vmul.f32 %v1386, 1.442695
        %v1388 = vpow.pop %v1387
        %v1389 = vsel %vm1162, %v1388, 0.0
        %1390 = vadd.xlane.f32.xlu0 %v1389
        %v1391 = vpop.xlane.xlu0 %1390
        %v1392 = vrcp.pop %v1391
        %v1393 = vpack.c.bf16 %v1388, %v1388
        %1394 = vrot.lane.b32.xlu0 %v1111, 96
        %v1395 = vpop.permute.xlu0 %1394
        %v1397 = vsel %vm1162, %v1393, 0
        %v1400 = vsel %vm1177, %v1395, 0
        %1402 = vmatprep.subr.bf16.mxu0 0
        %1403 = vmatpush1.bf16.msra.mxu0 0
        %1404 = vmatprep.subr.bf16.mxu0 0
        %1405 = vmatpush1.bf16.msra.mxu0 0
        %1406 = vmatprep.subr.bf16.mxu0 0
        %1407 = vmatpush1.bf16.msra.mxu0 0
        %1408 = vmatprep.subr.bf16.mxu0 0
        %1409 = vmatpush1.bf16.msra.mxu0 0
        %1410 = vmatprep.subr.bf16.mxu0 0
        %1411 = vmatpush1.bf16.msra.mxu0 0
        %1412 = vmatprep.subr.bf16.mxu0 0
        %1413 = vmatpush1.bf16.msra.mxu0 0
        %1414 = vmatprep.subr.bf16.mxu0 0
        %1415 = vmatpush1.bf16.msra.mxu0 0
        %1416 = vmatprep.subr.bf16.mxu0 0
        %1417 = vmatpush1.bf16.msra.mxu0 %v1400
        %1418 = vmatprep.subr.bf16.mxu0 0
        %1419 = vmatpush2.bf16.msra.mxu0 0
        %1420 = vmatprep.subr.bf16.mxu0 0
        %1421 = vmatpush2.bf16.msra.mxu0 0
        %1422 = vmatprep.subr.bf16.mxu0 0
        %1423 = vmatpush2.bf16.msra.mxu0 0
        %1424 = vmatprep.subr.bf16.mxu0 0
        %1425 = vmatpush2.bf16.msra.mxu0 0
        %1426 = vmatprep.subr.bf16.mxu0 0
        %1427 = vmatpush2.bf16.msra.mxu0 0
        %1428 = vmatprep.subr.bf16.mxu0 0
        %1429 = vmatpush2.bf16.msra.mxu0 0
        %1430 = vmatprep.subr.bf16.mxu0 0
        %1431 = vmatpush2.bf16.msra.mxu0 0
        %1432 = vmatprep.subr.bf16.mxu0 0
        %1433 = vmatpush2.bf16.msra.mxu0 0
        %1434 = vmatprep.mubr.bf16.mxu0 0
        %1435 = vmatmul.mubr.bf16.gmra.mxu0 %v1397
        %v1436 = vpop.f32.mrf.mxu0
        %v1437 = vadd.f32 0.0, %v1436
        %v1438 = vpop.f32.mrf.mxu0
        %v1439 = vpop.f32.mrf.mxu0
        %v1440 = vpop.f32.mrf.mxu0
        %1441 = vdwg.mxu0
        %v1442 = vmul.f32 %v1437, %v1392
        %1443 = vrot.lane.b32.xlu0 %v1110, 80
        %v1444 = vpop.permute.xlu0 %1443
        %1445 = vrot.lane.b32.xlu0 %v1110, 16
        %v1446 = vpop.permute.xlu0 %1445
        %v1448 = vsel %vm1115, %v1444, 0
        %v1451 = vsel %vm1115, %v1446, 0
        %1453 = vmatprep.subr.bf16.mxu0 0
        %1454 = vmatpush1.bf16.xpose.msra.mxu0 0
        %1455 = vmatprep.subr.bf16.mxu0 0
        %1456 = vmatpush1.bf16.xpose.msra.mxu0 0
        %1457 = vmatprep.subr.bf16.mxu0 0
        %1458 = vmatpush1.bf16.xpose.msra.mxu0 0
        %1459 = vmatprep.subr.bf16.mxu0 0
        %1460 = vmatpush1.bf16.xpose.msra.mxu0 0
        %1461 = vmatprep.subr.bf16.mxu0 0
        %1462 = vmatpush1.bf16.xpose.msra.mxu0 0
        %1463 = vmatprep.subr.bf16.mxu0 0
        %1464 = vmatpush1.bf16.xpose.msra.mxu0 0
        %1465 = vmatprep.subr.bf16.mxu0 0
        %1466 = vmatpush1.bf16.xpose.msra.mxu0 0
        %1467 = vmatprep.subr.bf16.mxu0 0
        %1468 = vmatpush1.bf16.xpose.msra.mxu0 %v1451
        %1469 = vmatprep.subr.bf16.mxu0 0
        %1470 = vmatpush2.bf16.xpose.msra.mxu0 0
        %1471 = vmatprep.subr.bf16.mxu0 0
        %1472 = vmatpush2.bf16.xpose.msra.mxu0 0
        %1473 = vmatprep.subr.bf16.mxu0 0
        %1474 = vmatpush2.bf16.xpose.msra.mxu0 0
        %1475 = vmatprep.subr.bf16.mxu0 0
        %1476 = vmatpush2.bf16.xpose.msra.mxu0 0
        %1477 = vmatprep.subr.bf16.mxu0 0
        %1478 = vmatpush2.bf16.xpose.msra.mxu0 0
        %1479 = vmatprep.subr.bf16.mxu0 0
        %1480 = vmatpush2.bf16.xpose.msra.mxu0 0
        %1481 = vmatprep.subr.bf16.mxu0 0
        %1482 = vmatpush2.bf16.xpose.msra.mxu0 0
        %1483 = vmatprep.subr.bf16.mxu0 0
        %1484 = vmatpush2.bf16.xpose.msra.mxu0 0
        %1485 = vmatprep.mubr.bf16.mxu0 0
        %1486 = vmatmul.mubr.bf16.gmra.mxu0 %v1448
        %v1487 = vpop.f32.mrf.mxu0
        %v1488 = vadd.f32 0.0, %v1487
        %v1489 = vpop.f32.mrf.mxu0
        %v1490 = vpop.f32.mrf.mxu0
        %v1491 = vpop.f32.mrf.mxu0
        %1492 = vdwg.mxu0
        %v1493 = vsel %vm1162, %v1488, -inf
        %1494 = vmax.xlane.f32.xlu0 %v1493
        %v1495 = vpop.xlane.xlu0 %1494
        %v1496 = vsub.f32 %v1488, %v1495
        %v1497 = vmul.f32 %v1496, 1.442695
        %v1498 = vpow.pop %v1497
        %v1499 = vsel %vm1162, %v1498, 0.0
        %1500 = vadd.xlane.f32.xlu0 %v1499
        %v1501 = vpop.xlane.xlu0 %1500
        %v1502 = vrcp.pop %v1501
        %v1503 = vpack.c.bf16 %v1498, %v1498
        %1504 = vrot.lane.b32.xlu0 %v1111, 80
        %v1505 = vpop.permute.xlu0 %1504
        %v1507 = vsel %vm1162, %v1503, 0
        %v1510 = vsel %vm1177, %v1505, 0
        %1512 = vmatprep.subr.bf16.mxu0 0
        %1513 = vmatpush1.bf16.msra.mxu0 0
        %1514 = vmatprep.subr.bf16.mxu0 0
        %1515 = vmatpush1.bf16.msra.mxu0 0
        %1516 = vmatprep.subr.bf16.mxu0 0
        %1517 = vmatpush1.bf16.msra.mxu0 0
        %1518 = vmatprep.subr.bf16.mxu0 0
        %1519 = vmatpush1.bf16.msra.mxu0 0
        %1520 = vmatprep.subr.bf16.mxu0 0
        %1521 = vmatpush1.bf16.msra.mxu0 0
        %1522 = vmatprep.subr.bf16.mxu0 0
        %1523 = vmatpush1.bf16.msra.mxu0 0
        %1524 = vmatprep.subr.bf16.mxu0 0
        %1525 = vmatpush1.bf16.msra.mxu0 0
        %1526 = vmatprep.subr.bf16.mxu0 0
        %1527 = vmatpush1.bf16.msra.mxu0 %v1510
        %1528 = vmatprep.subr.bf16.mxu0 0
        %1529 = vmatpush2.bf16.msra.mxu0 0
        %1530 = vmatprep.subr.bf16.mxu0 0
        %1531 = vmatpush2.bf16.msra.mxu0 0
        %1532 = vmatprep.subr.bf16.mxu0 0
        %1533 = vmatpush2.bf16.msra.mxu0 0
        %1534 = vmatprep.subr.bf16.mxu0 0
        %1535 = vmatpush2.bf16.msra.mxu0 0
        %1536 = vmatprep.subr.bf16.mxu0 0
        %1537 = vmatpush2.bf16.msra.mxu0 0
        %1538 = vmatprep.subr.bf16.mxu0 0
        %1539 = vmatpush2.bf16.msra.mxu0 0
        %1540 = vmatprep.subr.bf16.mxu0 0
        %1541 = vmatpush2.bf16.msra.mxu0 0
        %1542 = vmatprep.subr.bf16.mxu0 0
        %1543 = vmatpush2.bf16.msra.mxu0 0
        %1544 = vmatprep.mubr.bf16.mxu0 0
        %1545 = vmatmul.mubr.bf16.gmra.mxu0 %v1507
        %v1546 = vpop.f32.mrf.mxu0
        %v1547 = vadd.f32 0.0, %v1546
        %v1548 = vpop.f32.mrf.mxu0
        %v1549 = vpop.f32.mrf.mxu0
        %v1550 = vpop.f32.mrf.mxu0
        %1551 = vdwg.mxu0
        %v1552 = vmul.f32 %v1547, %v1502
        %1554 = vrot.lane.b32.xlu0 %v1332, 16
        %v1555 = vpop.permute.xlu0 %1554
        %1558 = vrot.lane.b32.xlu0 %v1442, 32
        %v1559 = vpop.permute.xlu0 %1558
        %1562 = vrot.lane.b32.xlu0 %v1552, 48
        %v1563 = vpop.permute.xlu0 %1562
        %v1565 = vsel %vm1115, %v1221, %v1555
        %vm1566 = vcmask 261120
        %v1567 = vsel %vm1566, %v1565, %v1559
        %vm1568 = vcmask 392192
        %v1569 = vsel %vm1568, %v1567, %v1563
        %v1570 = vld [vmem:[%s868] sm:$0xf]
        %v1571 = vld [vmem:[%s868 + $0x4] sm:$0xf]
        %v1572 = vld [vmem:[%s868 + $0x8] sm:$0xf]
        %v1573 = vld [vmem:[%s868 + $0xc] sm:$0xf]
        %v1574 = vld [vmem:[%s868 + $0x10] sm:$0xf]
        %v1575 = vld [vmem:[%s868 + $0x14] sm:$0xf]
        %v1576 = vld [vmem:[%s868 + $0x18] sm:$0xf]
        %v1577 = vld [vmem:[%s868 + $0x1c] sm:$0xf]
        %v1578 = vpack.c.bf16 %v1569, %v1569
        %v1587 = vunpack.c.l.b16 %v1570
        %v1588 = vunpack.c.l.b16 %v1571
        %v1589 = vunpack.c.l.b16 %v1572
        %v1590 = vunpack.c.l.b16 %v1573
        %v1591 = vunpack.c.l.b16 %v1574
        %v1592 = vunpack.c.l.b16 %v1575
        %v1593 = vunpack.c.l.b16 %v1576
        %v1594 = vunpack.c.l.b16 %v1577
        %v1595 = vpack.c.b16 %v1588, %v1587
        %v1596 = vpack.c.b16 %v1590, %v1589
        %v1597 = vpack.c.b16 %v1592, %v1591
        %v1598 = vpack.c.b16 %v1594, %v1593
        %v1604 = vsel %vm976, %v1578, 0
        %1606 = vmatprep.subr.bf16.mxu0 0
        %1607 = vmatpush1.bf16.msra.mxu0 0
        %1608 = vmatprep.subr.bf16.mxu0 0
        %1609 = vmatpush1.bf16.msra.mxu0 0
        %1610 = vmatprep.subr.bf16.mxu0 0
        %1611 = vmatpush1.bf16.msra.mxu0 0
        %1612 = vmatprep.subr.bf16.mxu0 0
        %1613 = vmatpush1.bf16.msra.mxu0 0
        %1614 = vmatprep.subr.bf16.mxu0 0
        %1615 = vmatpush1.bf16.msra.mxu0 %v1598
        %1616 = vmatprep.subr.bf16.mxu0 0
        %1617 = vmatpush1.bf16.msra.mxu0 %v1597
        %1618 = vmatprep.subr.bf16.mxu0 0
        %1619 = vmatpush1.bf16.msra.mxu0 %v1596
        %1620 = vmatprep.subr.bf16.mxu0 0
        %1621 = vmatpush1.bf16.msra.mxu0 %v1595
        %1622 = vmatprep.subr.bf16.mxu0 0
        %1623 = vmatpush2.bf16.msra.mxu0 0
        %1624 = vmatprep.subr.bf16.mxu0 0
        %1625 = vmatpush2.bf16.msra.mxu0 0
        %1626 = vmatprep.subr.bf16.mxu0 0
        %1627 = vmatpush2.bf16.msra.mxu0 0
        %1628 = vmatprep.subr.bf16.mxu0 0
        %1629 = vmatpush2.bf16.msra.mxu0 0
        %1630 = vmatprep.subr.bf16.mxu0 0
        %1631 = vmatpush2.bf16.msra.mxu0 0
        %1632 = vmatprep.subr.bf16.mxu0 0
        %1633 = vmatpush2.bf16.msra.mxu0 0
        %1634 = vmatprep.subr.bf16.mxu0 0
        %1635 = vmatpush2.bf16.msra.mxu0 0
        %1636 = vmatprep.subr.bf16.mxu0 0
        %1637 = vmatpush2.bf16.msra.mxu0 0
        %1638 = vmatprep.mubr.bf16.mxu0 0
        %1639 = vmatmul.mubr.bf16.gmra.mxu0 %v1604
        %v1640 = vpop.f32.mrf.mxu0
        %v1641 = vadd.f32 0.0, %v1640
        %v1642 = vpop.f32.mrf.mxu0
        %v1643 = vpop.f32.mrf.mxu0
        %v1644 = vpop.f32.mrf.mxu0
        %1645 = vdwg.mxu0
        %v1646 = vadd.f32 %v973, %v1641
        %v1647 = vld [vmem:[%s871] sm:$0x1]
        %v1649 = vlaneseq
        %v1650 = vshrl.u32 %v1649, 7
        %v1651 = vsub.s32 0, %v1650
        %v1652 = vrot.slane %v1647, %v1651
        %v1654 = vadd.f32 %v1646, %v1652
        %v1655 = vld [vmem:[%s874] sm:$0x1]
        %v1656 = vld [vmem:[%s877] sm:$0x1]
        %v1657 = vsel %vm976, %v1654, 0.0
        %1658 = vadd.xlane.f32.xlu0 %v1657
        %v1659 = vpop.xlane.xlu0 %1658
        %v1660 = vmul.f32 %v1659, %v980
        %v1661 = vsub.f32 %v1654, %v1660
        %v1662 = vmul.f32 %v1661, %v1661
        %v1663 = vsel %vm976, %v1662, 0.0
        %1664 = vadd.xlane.f32.xlu0 %v1663
        %v1665 = vpop.xlane.xlu0 %1664
        %v1666 = vmul.f32 %v1665, %v980
        %v1667 = vadd.f32 %v1666, 1e-05
        %v1668 = vrsqrt.pop %v1667
        %v1669 = vmul.f32 %v1661, %v1668
        %v1671 = vlaneseq
        %v1672 = vshrl.u32 %v1671, 7
        %v1673 = vsub.s32 0, %v1672
        %v1674 = vrot.slane %v1655, %v1673
        %v1676 = vmul.f32 %v1669, %v1674
        %v1678 = vlaneseq
        %v1679 = vshrl.u32 %v1678, 7
        %v1680 = vsub.s32 0, %v1679
        %v1681 = vrot.slane %v1656, %v1680
        %v1683 = vadd.f32 %v1676, %v1681
        %v1684 = vpack.c.bf16 %v1683, %v1683
        %v1685 = vld [vmem:[%s894] sm:$0x1]
        %v1687 = vlaneseq
        %v1688 = vshrl.u32 %v1687, 7
        %v1689 = vsub.s32 0, %v1688
        %v1690 = vrot.slane %v1685, %v1689
        %v1692 = vadd.f32 %v1654, %v1690
        %v1693 = vld [vmem:[%s882] sm:$0xff]
        %v1694 = vld [vmem:[%s882 + $0x8] sm:$0xff]
        %v1695 = vld [vmem:[%s882 + $0x10] sm:$0xff]
        %v1696 = vld [vmem:[%s882 + $0x18] sm:$0xff]
        %v1697 = vld [vmem:[%s882 + $0x20] sm:$0xff]
        %v1698 = vld [vmem:[%s882 + $0x28] sm:$0xff]
        %v1699 = vld [vmem:[%s882 + $0x30] sm:$0xff]
        %v1700 = vld [vmem:[%s882 + $0x38] sm:$0xff]
        %v1701 = vld [vmem:[%s886] sm:$0x3]
        %v1703 = vlaneseq
        %v1704 = vshrl.u32 %v1703, 7
        %v1705 = vsub.s32 0, %v1704
        %v1706 = vrot.slane %v1701, %v1705
        %v1707 = vlaneseq
        %v1708 = vshrl.u32 %v1707, 7
        %v1709 = vsub.s32 1, %v1708
        %v1710 = vrot.slane %v1701, %v1709
        %v1721 = vunpack.c.l.b16 %v1693
        %v1722 = vunpack.c.h.b16 %v1693
        %v1723 = vunpack.c.l.b16 %v1694
        %v1724 = vunpack.c.h.b16 %v1694
        %v1725 = vunpack.c.l.b16 %v1695
        %v1726 = vunpack.c.h.b16 %v1695
        %v1727 = vunpack.c.l.b16 %v1696
        %v1728 = vunpack.c.h.b16 %v1696
        %v1729 = vunpack.c.l.b16 %v1697
        %v1730 = vunpack.c.h.b16 %v1697
        %v1731 = vunpack.c.l.b16 %v1698
        %v1732 = vunpack.c.h.b16 %v1698
        %v1733 = vunpack.c.l.b16 %v1699
        %v1734 = vunpack.c.h.b16 %v1699
        %v1735 = vunpack.c.l.b16 %v1700
        %v1736 = vunpack.c.h.b16 %v1700
        %v1737 = vpack.c.b16 %v1723, %v1721
        %v1738 = vpack.c.b16 %v1724, %v1722
        %v1739 = vpack.c.b16 %v1727, %v1725
        %v1740 = vpack.c.b16 %v1728, %v1726
        %v1741 = vpack.c.b16 %v1731, %v1729
        %v1742 = vpack.c.b16 %v1732, %v1730
        %v1743 = vpack.c.b16 %v1735, %v1733
        %v1744 = vpack.c.b16 %v1736, %v1734
        %v1754 = vsel %vm976, %v1684, 0
        %1756 = vmatprep.subr.bf16.mxu0 0
        %1757 = vmatpush1.bf16.msra.mxu0 0
        %1758 = vmatprep.subr.bf16.mxu0 0
        %1759 = vmatpush1.bf16.msra.mxu0 0
        %1760 = vmatprep.subr.bf16.mxu0 0
        %1761 = vmatpush1.bf16.msra.mxu0 0
        %1762 = vmatprep.subr.bf16.mxu0 0
        %1763 = vmatpush1.bf16.msra.mxu0 0
        %1764 = vmatprep.subr.bf16.mxu0 %v1744
        %1765 = vmatpush1.bf16.msra.mxu0 %v1743
        %1766 = vmatprep.subr.bf16.mxu0 %v1742
        %1767 = vmatpush1.bf16.msra.mxu0 %v1741
        %1768 = vmatprep.subr.bf16.mxu0 %v1740
        %1769 = vmatpush1.bf16.msra.mxu0 %v1739
        %1770 = vmatprep.subr.bf16.mxu0 %v1738
        %1771 = vmatpush1.bf16.msra.mxu0 %v1737
        %1772 = vmatprep.subr.bf16.mxu0 0
        %1773 = vmatpush2.bf16.msra.mxu0 0
        %1774 = vmatprep.subr.bf16.mxu0 0
        %1775 = vmatpush2.bf16.msra.mxu0 0
        %1776 = vmatprep.subr.bf16.mxu0 0
        %1777 = vmatpush2.bf16.msra.mxu0 0
        %1778 = vmatprep.subr.bf16.mxu0 0
        %1779 = vmatpush2.bf16.msra.mxu0 0
        %1780 = vmatprep.subr.bf16.mxu0 0
        %1781 = vmatpush2.bf16.msra.mxu0 0
        %1782 = vmatprep.subr.bf16.mxu0 0
        %1783 = vmatpush2.bf16.msra.mxu0 0
        %1784 = vmatprep.subr.bf16.mxu0 0
        %1785 = vmatpush2.bf16.msra.mxu0 0
        %1786 = vmatprep.subr.bf16.mxu0 0
        %1787 = vmatpush2.bf16.msra.mxu0 0
        %1788 = vmatprep.mubr.bf16.mxu0 0
        %1789 = vmatmul.mubr.bf16.gmra.mxu0 %v1754
        %v1790 = vpop.f32.mrf.mxu0
        %v1791 = vadd.f32 %v1706, %v1790
        %v1792 = vpop.f32.mrf.mxu0
        %v1793 = vadd.f32 %v1710, %v1792
        %v1794 = vpop.f32.mrf.mxu0
        %v1795 = vpop.f32.mrf.mxu0
        %1796 = vdwg.mxu0
        %v1797 = vmul.f32 %v1791, %v1791
        %v1798 = vmul.f32 %v1793, %v1793
        %v1799 = vmul.f32 %v1791, %v1797
        %v1800 = vmul.f32 %v1793, %v1798
        %v1801 = vmul.f32 %v1799, 0.044715
        %v1802 = vmul.f32 %v1800, 0.044715
        %v1803 = vadd.f32 %v1791, %v1801
        %v1804 = vadd.f32 %v1793, %v1802
        %v1805 = vmul.f32 %v1803, 0.7978846
        %v1806 = vmul.f32 %v1804, 0.7978846
        %v1807 = vtanh.pop %v1805
        %v1808 = vtanh.pop %v1806
        %v1809 = vadd.f32 %v1807, 1.0
        %v1810 = vadd.f32 %v1808, 1.0
        %v1811 = vmul.f32 %v1809, 0.5
        %v1812 = vmul.f32 %v1810, 0.5
        %v1813 = vmul.f32 %v1791, %v1811
        %v1814 = vmul.f32 %v1793, %v1812
        %v1815 = vpack.c.bf16 %v1813, %v1813
        %v1816 = vpack.c.bf16 %v1814, %v1814
        %v1817 = vld [vmem:[%s891] sm:$0xf]
        %v1818 = vld [vmem:[%s891 + $0x4] sm:$0xf]
        %v1819 = vld [vmem:[%s891 + $0x8] sm:$0xf]
        %v1820 = vld [vmem:[%s891 + $0xc] sm:$0xf]
        %v1821 = vld [vmem:[%s891 + $0x10] sm:$0xf]
        %v1822 = vld [vmem:[%s891 + $0x14] sm:$0xf]
        %v1823 = vld [vmem:[%s891 + $0x18] sm:$0xf]
        %v1824 = vld [vmem:[%s891 + $0x1c] sm:$0xf]
        %v1825 = vld [vmem:[%s891 + $0x20] sm:$0xf]
        %v1826 = vld [vmem:[%s891 + $0x24] sm:$0xf]
        %v1827 = vld [vmem:[%s891 + $0x28] sm:$0xf]
        %v1828 = vld [vmem:[%s891 + $0x2c] sm:$0xf]
        %v1829 = vld [vmem:[%s891 + $0x30] sm:$0xf]
        %v1830 = vld [vmem:[%s891 + $0x34] sm:$0xf]
        %v1831 = vld [vmem:[%s891 + $0x38] sm:$0xf]
        %v1832 = vld [vmem:[%s891 + $0x3c] sm:$0xf]
        %v1833 = vld [vmem:[%s891 + $0x40] sm:$0xf]
        %v1834 = vld [vmem:[%s891 + $0x44] sm:$0xf]
        %v1835 = vld [vmem:[%s891 + $0x48] sm:$0xf]
        %v1836 = vld [vmem:[%s891 + $0x4c] sm:$0xf]
        %v1837 = vld [vmem:[%s891 + $0x50] sm:$0xf]
        %v1838 = vld [vmem:[%s891 + $0x54] sm:$0xf]
        %v1839 = vld [vmem:[%s891 + $0x58] sm:$0xf]
        %v1840 = vld [vmem:[%s891 + $0x5c] sm:$0xf]
        %v1841 = vld [vmem:[%s891 + $0x60] sm:$0xf]
        %v1842 = vld [vmem:[%s891 + $0x64] sm:$0xf]
        %v1843 = vld [vmem:[%s891 + $0x68] sm:$0xf]
        %v1844 = vld [vmem:[%s891 + $0x6c] sm:$0xf]
        %v1845 = vld [vmem:[%s891 + $0x70] sm:$0xf]
        %v1846 = vld [vmem:[%s891 + $0x74] sm:$0xf]
        %v1847 = vld [vmem:[%s891 + $0x78] sm:$0xf]
        %v1848 = vld [vmem:[%s891 + $0x7c] sm:$0xf]
        %v1881 = vunpack.c.l.b16 %v1817
        %v1882 = vunpack.c.l.b16 %v1818
        %v1883 = vunpack.c.l.b16 %v1819
        %v1884 = vunpack.c.l.b16 %v1820
        %v1885 = vunpack.c.l.b16 %v1821
        %v1886 = vunpack.c.l.b16 %v1822
        %v1887 = vunpack.c.l.b16 %v1823
        %v1888 = vunpack.c.l.b16 %v1824
        %v1889 = vunpack.c.l.b16 %v1825
        %v1890 = vunpack.c.l.b16 %v1826
        %v1891 = vunpack.c.l.b16 %v1827
        %v1892 = vunpack.c.l.b16 %v1828
        %v1893 = vunpack.c.l.b16 %v1829
        %v1894 = vunpack.c.l.b16 %v1830
        %v1895 = vunpack.c.l.b16 %v1831
        %v1896 = vunpack.c.l.b16 %v1832
        %v1897 = vunpack.c.l.b16 %v1833
        %v1898 = vunpack.c.l.b16 %v1834
        %v1899 = vunpack.c.l.b16 %v1835
        %v1900 = vunpack.c.l.b16 %v1836
        %v1901 = vunpack.c.l.b16 %v1837
        %v1902 = vunpack.c.l.b16 %v1838
        %v1903 = vunpack.c.l.b16 %v1839
        %v1904 = vunpack.c.l.b16 %v1840
        %v1905 = vunpack.c.l.b16 %v1841
        %v1906 = vunpack.c.l.b16 %v1842
        %v1907 = vunpack.c.l.b16 %v1843
        %v1908 = vunpack.c.l.b16 %v1844
        %v1909 = vunpack.c.l.b16 %v1845
        %v1910 = vunpack.c.l.b16 %v1846
        %v1911 = vunpack.c.l.b16 %v1847
        %v1912 = vunpack.c.l.b16 %v1848
        %v1913 = vpack.c.b16 %v1882, %v1881
        %v1914 = vpack.c.b16 %v1884, %v1883
        %v1915 = vpack.c.b16 %v1886, %v1885
        %v1916 = vpack.c.b16 %v1888, %v1887
        %v1917 = vpack.c.b16 %v1890, %v1889
        %v1918 = vpack.c.b16 %v1892, %v1891
        %v1919 = vpack.c.b16 %v1894, %v1893
        %v1920 = vpack.c.b16 %v1896, %v1895
        %v1921 = vpack.c.b16 %v1898, %v1897
        %v1922 = vpack.c.b16 %v1900, %v1899
        %v1923 = vpack.c.b16 %v1902, %v1901
        %v1924 = vpack.c.b16 %v1904, %v1903
        %v1925 = vpack.c.b16 %v1906, %v1905
        %v1926 = vpack.c.b16 %v1908, %v1907
        %v1927 = vpack.c.b16 %v1910, %v1909
        %v1928 = vpack.c.b16 %v1912, %v1911
        %1945 = vmatprep.subr.bf16.mxu0 0
        %1946 = vmatpush1.bf16.msra.mxu0 %v1920
        %1947 = vmatprep.subr.bf16.mxu0 0
        %1948 = vmatpush1.bf16.msra.mxu0 %v1919
        %1949 = vmatprep.subr.bf16.mxu0 0
        %1950 = vmatpush1.bf16.msra.mxu0 %v1918
        %1951 = vmatprep.subr.bf16.mxu0 0
        %1952 = vmatpush1.bf16.msra.mxu0 %v1917
        %1953 = vmatprep.subr.bf16.mxu0 0
        %1954 = vmatpush1.bf16.msra.mxu0 %v1916
        %1955 = vmatprep.subr.bf16.mxu0 0
        %1956 = vmatpush1.bf16.msra.mxu0 %v1915
        %1957 = vmatprep.subr.bf16.mxu0 0
        %1958 = vmatpush1.bf16.msra.mxu0 %v1914
        %1959 = vmatprep.subr.bf16.mxu0 0
        %1960 = vmatpush1.bf16.msra.mxu0 %v1913
        %1961 = vmatprep.subr.bf16.mxu0 0
        %1962 = vmatpush2.bf16.msra.mxu0 %v1928
        %1963 = vmatprep.subr.bf16.mxu0 0
        %1964 = vmatpush2.bf16.msra.mxu0 %v1927
        %1965 = vmatprep.subr.bf16.mxu0 0
        %1966 = vmatpush2.bf16.msra.mxu0 %v1926
        %1967 = vmatprep.subr.bf16.mxu0 0
        %1968 = vmatpush2.bf16.msra.mxu0 %v1925
        %1969 = vmatprep.subr.bf16.mxu0 0
        %1970 = vmatpush2.bf16.msra.mxu0 %v1924
        %1971 = vmatprep.subr.bf16.mxu0 0
        %1972 = vmatpush2.bf16.msra.mxu0 %v1923
        %1973 = vmatprep.subr.bf16.mxu0 0
        %1974 = vmatpush2.bf16.msra.mxu0 %v1922
        %1975 = vmatprep.subr.bf16.mxu0 0
        %1976 = vmatpush2.bf16.msra.mxu0 %v1921
        %1977 = vmatprep.mubr.bf16.mxu0 %v1816
        %1978 = vmatmul.mubr.bf16.gmra.mxu0 %v1815
        %v1979 = vpop.f32.mrf.mxu0
        %v1980 = vadd.f32 0.0, %v1979
        %v1981 = vpop.f32.mrf.mxu0
        %v1982 = vpop.f32.mrf.mxu0
        %v1983 = vpop.f32.mrf.mxu0
        %1984 = vdwg.mxu0
        %v1985 = vadd.f32 %v1692, %v1980
        %1986 = vst.msk [vmem:[#allocation2] sm:$0xff] %vm976, %v1985
        %p1987 = scmp.eq.s32.totalorder %s41, 1
        // Predicated region
        $region121: #{tpu_custom_call.1} parent=99 // pred_check
          %p1988 = pneg %p1987
        $region122: #{tpu_custom_call.1} parent=99 // pred_check_branch
          %1990 = sbr.rel (%p1988) target = $region124
        $region123: #{tpu_custom_call.1} parent=99 // pred_region
          %v1991 = vld [vmem:[%s16] sm:$0x1]
          %v1992 = vld [vmem:[%s17] sm:$0x1]
          %v1993 = vsel %vm976, %v1985, 0.0
          %1994 = vadd.xlane.f32.xlu0 %v1993
          %v1995 = vpop.xlane.xlu0 %1994
          %v1996 = vmul.f32 %v1995, %v980
          %v1997 = vsub.f32 %v1985, %v1996
          %v1998 = vmul.f32 %v1997, %v1997
          %v1999 = vsel %vm976, %v1998, 0.0
          %2000 = vadd.xlane.f32.xlu0 %v1999
          %v2001 = vpop.xlane.xlu0 %2000
          %v2002 = vmul.f32 %v2001, %v980
          %v2003 = vadd.f32 %v2002, 1e-05
          %v2004 = vrsqrt.pop %v2003
          %v2005 = vmul.f32 %v1997, %v2004
          %v2007 = vlaneseq
          %v2008 = vshrl.u32 %v2007, 7
          %v2009 = vsub.s32 0, %v2008
          %v2010 = vrot.slane %v1991, %v2009
          %v2012 = vmul.f32 %v2005, %v2010
          %v2014 = vlaneseq
          %v2015 = vshrl.u32 %v2014, 7
          %v2016 = vsub.s32 0, %v2015
          %v2017 = vrot.slane %v1992, %v2016
          %v2019 = vadd.f32 %v2012, %v2017
          %v2020 = vld [vmem:[%s18] sm:$0xf]
          %v2021 = vld [vmem:[%s18 + $0x4] sm:$0xf]
          %v2022 = vld [vmem:[%s18 + $0x8] sm:$0xf]
          %v2023 = vld [vmem:[%s18 + $0xc] sm:$0xf]
          %v2024 = vld [vmem:[%s18 + $0x10] sm:$0xf]
          %v2025 = vld [vmem:[%s18 + $0x14] sm:$0xf]
          %v2026 = vld [vmem:[%s18 + $0x18] sm:$0xf]
          %v2027 = vld [vmem:[%s18 + $0x1c] sm:$0xf]
          %v2028 = vpack.c.bf16 %v2019, %v2019
          %v2029 = vld [vmem:[%s19] sm:$0x1]
          %v2031 = vlaneseq
          %v2032 = vshrl.u32 %v2031, 7
          %v2033 = vsub.s32 0, %v2032
          %v2034 = vrot.slane %v2029, %v2033
          %v2044 = vunpack.c.l.b16 %v2020
          %v2045 = vunpack.c.l.b16 %v2021
          %v2046 = vunpack.c.l.b16 %v2022
          %v2047 = vunpack.c.l.b16 %v2023
          %v2048 = vunpack.c.l.b16 %v2024
          %v2049 = vunpack.c.l.b16 %v2025
          %v2050 = vunpack.c.l.b16 %v2026
          %v2051 = vunpack.c.l.b16 %v2027
          %v2052 = vpack.c.b16 %v2045, %v2044
          %v2053 = vpack.c.b16 %v2047, %v2046
          %v2054 = vpack.c.b16 %v2049, %v2048
          %v2055 = vpack.c.b16 %v2051, %v2050
          %v2061 = vsel %vm976, %v2028, 0
          %2063 = vmatprep.subr.bf16.mxu0 0
          %2064 = vmatpush1.bf16.msra.mxu0 0
          %2065 = vmatprep.subr.bf16.mxu0 0
          %2066 = vmatpush1.bf16.msra.mxu0 0
          %2067 = vmatprep.subr.bf16.mxu0 0
          %2068 = vmatpush1.bf16.msra.mxu0 0
          %2069 = vmatprep.subr.bf16.mxu0 0
          %2070 = vmatpush1.bf16.msra.mxu0 0
          %2071 = vmatprep.subr.bf16.mxu0 0
          %2072 = vmatpush1.bf16.msra.mxu0 %v2055
          %2073 = vmatprep.subr.bf16.mxu0 0
          %2074 = vmatpush1.bf16.msra.mxu0 %v2054
          %2075 = vmatprep.subr.bf16.mxu0 0
          %2076 = vmatpush1.bf16.msra.mxu0 %v2053
          %2077 = vmatprep.subr.bf16.mxu0 0
          %2078 = vmatpush1.bf16.msra.mxu0 %v2052
          %2079 = vmatprep.subr.bf16.mxu0 0
          %2080 = vmatpush2.bf16.msra.mxu0 0
          %2081 = vmatprep.subr.bf16.mxu0 0
          %2082 = vmatpush2.bf16.msra.mxu0 0
          %2083 = vmatprep.subr.bf16.mxu0 0
          %2084 = vmatpush2.bf16.msra.mxu0 0
          %2085 = vmatprep.subr.bf16.mxu0 0
          %2086 = vmatpush2.bf16.msra.mxu0 0
          %2087 = vmatprep.subr.bf16.mxu0 0
          %2088 = vmatpush2.bf16.msra.mxu0 0
          %2089 = vmatprep.subr.bf16.mxu0 0
          %2090 = vmatpush2.bf16.msra.mxu0 0
          %2091 = vmatprep.subr.bf16.mxu0 0
          %2092 = vmatpush2.bf16.msra.mxu0 0
          %2093 = vmatprep.subr.bf16.mxu0 0
          %2094 = vmatpush2.bf16.msra.mxu0 0
          %2095 = vmatprep.mubr.bf16.mxu0 0
          %2096 = vmatmul.mubr.bf16.gmra.mxu0 %v2061
          %v2097 = vpop.f32.mrf.mxu0
          %v2098 = vadd.f32 %v2034, %v2097
          %v2099 = vpop.f32.mrf.mxu0
          %v2100 = vpop.f32.mrf.mxu0
          %v2101 = vpop.f32.mrf.mxu0
          %2102 = vdwg.mxu0
          %v2103 = vpack.c.bf16 %v2098, %v2098
          %2104 = vst [vmem:[%s850] sm:$0xf] %v2103
        $region124: #{tpu_custom_call.1} parent=99 // pred_fallthru
          _
        %s2105 = sand.u32 %s541, 1
        %s2106 = scalar_lea.sflag [#allocation5], %s2105
        %s2107 = sand.u32 %s541, 1
        %s2108 = smul.addr %s2107, 4
        %s2109 = scalar_lea.vmem [#allocation10], %s2108
        // Predicated region
        $region125: #{tpu_custom_call.1} parent=99 // pred_check
          %p2110 = pneg %p551
        $region126: #{tpu_custom_call.1} parent=99 // pred_check_branch
          %2112 = sbr.rel (%p2110) target = $region128
        $region127: #{tpu_custom_call.1} parent=99 // pred_region
          %s2114 = ssub.s32 64, 64
          %2115 = vsyncadd %s2106, %s2114
          %s2116 = smul.addr %s40, 64
          %s2117 = scalar_lea.hbm %s20, %s2116
          %s2119 = sshll.u32 %s2109, 4
          %s2120 = int_to_ptr.vmem [resolvable:$true] %s2119
          %2122 = dma.vmem_to_hbm [thread:$0]  %s2120, 64, %s2117, %s2106
        $region128: #{tpu_custom_call.1} parent=99 // pred_fallthru
          _
      $region100: #{tpu_custom_call.1} parent=5 // pred_fallthru
        _
      %p2123 = scmp.le.s32.totalorder 2, %s31
      // Predicated region
      $region129: #{tpu_custom_call.1} parent=5 // pred_check
        %p2124 = pneg %p2123
      $region130: #{tpu_custom_call.1} parent=5 // pred_check_branch
        %2126 = sbr.rel (%p2124) target = $region132
      $region131: #{tpu_custom_call.1} parent=5 // pred_region
        %s2127 = ssub.s32 %s31, 2
        // Predicated region
        $region133: #{tpu_custom_call.1} parent=131 // pred_check
          %p2128 = pneg %p557
        $region134: #{tpu_custom_call.1} parent=131 // pred_check_branch
          %2130 = sbr.rel (%p2128) target = $region136
        $region135: #{tpu_custom_call.1} parent=131 // pred_region
          %s2131 = sand.u32 %s542, 1
          %s2132 = scalar_lea.sflag [#allocation5], %s2131
          %s2133 = sand.u32 %s542, 1
          %s2134 = smul.addr %s2133, 4
          %s2135 = scalar_lea.vmem [#allocation10], %s2134
          %2136 = dma.done %s2132, 64
        $region136: #{tpu_custom_call.1} parent=131 // pred_fallthru
          _
      $region132: #{tpu_custom_call.1} parent=5 // pred_fallthru
        _
    $region6: #{tpu_custom_call.1} parent=1 // loop_footer
      %s35 = sadd.s32 1, %s31
    $region7: #{tpu_custom_call.1} parent=1 // loop_footer_branch
      %30 = sbr.rel target = $region3
    $region8: #{tpu_custom_call.1} parent=1 // loop_exit
      _
    %2137 = vsyncpa [#allocation4], 1
    %s2138 = scalar_lea.sflag [#allocation4], 1
    %2139 = vsyncpa %s2138, 1
    %2140 = vsyncpa [#allocation7], 1
    %2141 = vsyncpa [#allocation5], 1
    %s2142 = scalar_lea.sflag [#allocation5], 1
    %2143 = vsyncpa %s2142, 1

// kernel: tpu_custom_call.1
$region0: #{tpu_custom_call.1}
  #allocation0 [shape = 'u32[]', space=smem, size = 0x4, offset = 0x4, fixed_abs, tag = 'smem constant byte address 0x4 - core index']
  #allocation1 [shape = 'u32[144,128]{1,0:T(1,128)}', space=vmem, size = 0x12000, scoped, tag = 'internal scratch']
  #allocation2 [shape = 'f32[1,8,64]{2,1,0:T(8,128)}', space=vmem, size = 0x1000, scoped, tag = 'scratch operand']
  %s0 = inlined_call_operand.vmem [shape: f32[2,8,32], index: 0, kind: input, shape index: {}]
  %s1 = inlined_call_operand.vmem [shape: bf16[32,64], index: 1, kind: input, shape index: {}]
  %s2 = inlined_call_operand.hbm [shape: f32[1,64], index: 2, kind: input, shape index: {}]
  %s3 = inlined_call_operand.hbm [shape: f32[8,64], index: 3, kind: input, shape index: {}]
  %s4 = inlined_call_operand.hbm [shape: f32[2,1,64], index: 4, kind: input, shape index: {}]
  %s5 = inlined_call_operand.hbm [shape: f32[2,1,64], index: 5, kind: input, shape index: {}]
  %s6 = inlined_call_operand.vmem [shape: bf16[2,64,192], index: 6, kind: input, shape index: {}]
  %s7 = inlined_call_operand.vmem [shape: f32[2,1,192], index: 7, kind: input, shape index: {}]
  %s8 = inlined_call_operand.vmem [shape: bf16[2,64,64], index: 8, kind: input, shape index: {}]
  %s9 = inlined_call_operand.vmem [shape: f32[2,1,64], index: 9, kind: input, shape index: {}]
  %s10 = inlined_call_operand.vmem [shape: f32[2,1,64], index: 10, kind: input, shape index: {}]
  %s11 = inlined_call_operand.vmem [shape: f32[2,1,64], index: 11, kind: input, shape index: {}]
  %s12 = inlined_call_operand.vmem [shape: bf16[2,64,256], index: 12, kind: input, shape index: {}]
  %s13 = inlined_call_operand.vmem [shape: f32[2,1,256], index: 13, kind: input, shape index: {}]
  %s14 = inlined_call_operand.vmem [shape: bf16[2,256,64], index: 14, kind: input, shape index: {}]
  %s15 = inlined_call_operand.vmem [shape: f32[2,1,64], index: 15, kind: input, shape index: {}]
  %s16 = inlined_call_operand.vmem [shape: f32[1,64], index: 16, kind: input, shape index: {}]
  %s17 = inlined_call_operand.vmem [shape: f32[1,64], index: 17, kind: input, shape index: {}]
  %s18 = inlined_call_operand.vmem [shape: bf16[64,128], index: 18, kind: input, shape index: {}]
  %s19 = inlined_call_operand.vmem [shape: f32[1,128], index: 19, kind: input, shape index: {}]
  %s20 = inlined_call_operand.hbm [shape: bf16[2,8,128], index: 20, kind: output, shape index: {}]
  %s21 = sld [smem:[#allocation0]]
  $region137: #{tpu_custom_call.1} parent=0
    _
  %s23 = ssub.s32 1, %s21
  %s24 = scalar_select 0, %s23, %s21
  $region1: #{tpu_custom_call.1} parent=0
    #allocation3 [shape = 'u8[512]{0}', space=vmem, size = 0x400, scoped, tag = 'input window, operand 2, single buffered']
    #allocation4 [shape = 's32[2]{0}', space=sflag, size = 0x8, scoped, tag = 'scoped memory for tpu_custom_call.1']
    #allocation5 [shape = 's32[2]{0}', space=sflag, size = 0x8, scoped, tag = 'scoped memory for tpu_custom_call.1']
    #allocation6 [shape = 'u8[4096]{0}', space=vmem, size = 0x1000, scoped, tag = 'input window, operand 3, single buffered']
    #allocation7 [shape = 's32[1]{0}', space=sflag, size = 0x4, scoped, tag = 'scoped memory for tpu_custom_call.1']
    #allocation8 [shape = 'u8[1024]{0}', space=vmem, size = 0x400, scoped, tag = 'input window, operand 4']
    #allocation9 [shape = 'u8[1024]{0}', space=vmem, size = 0x400, scoped, tag = 'input window, operand 5']
    #allocation10 [shape = 'u8[4096]{0}', space=vmem, size = 0x1000, scoped, tag = 'output window, operand 0']
    %25 = vsyncpa [#allocation4], 0
    %26 = vsyncpa [#allocation7], 0
    %27 = vsyncpa [#allocation5], 0
    %s28 = scalar_lea.sflag [#allocation5], 1
    %29 = vsyncpa %s28, 0
    loop: start=0, step=1, limit=6
    $region2: #{tpu_custom_call.1} parent=1 // loop_pre_header
      _
    $region3: #{tpu_custom_call.1} parent=1 // loop_header
      %s31 = sphi 0, %s35
      %p32 = scmp.ge.s32.totalorder %s31, 6
      %s38 = sphi 0, %s50
      %s39 = sphi 0, %s46
      %s40 = sphi 0, %s38
      %s41 = sphi 0, %s39
      %s42 = sphi 0, %s40
      %s43 = sphi 0, %s41
      %s53 = sphi 0, %s55
      %s56 = sphi 0, %s53
      %s57 = sphi 0, %s56
      %s73 = sphi 0, %s57
      %s77 = sphi 0, %s77
      %s79 = sphi 0, %s77
      %s80 = sphi 0, %s79
      %s94 = sphi 0, %s80
      %s98 = sphi 0, %s98
      %s100 = sphi 0, %s98
      %s101 = sphi 0, %s100
      %s115 = sphi 0, %s101
      %s119 = sphi 0, %s119
      %s121 = sphi 0, %s119
      %s122 = sphi 0, %s121
      %s136 = sphi 0, %s122
      %s142 = sphi 0, %s144
      %s145 = sphi 0, %s142
      %s146 = sphi 0, %s145
      %s162 = sphi 0, %s146
      %s168 = sphi 0, %s170
      %s171 = sphi 0, %s168
      %s172 = sphi 0, %s171
      %s188 = sphi 0, %s172
      %s194 = sphi 0, %s196
      %s197 = sphi 0, %s194
      %s198 = sphi 0, %s197
      %s214 = sphi 0, %s198
      %s220 = sphi 0, %s222
      %s223 = sphi 0, %s220
      %s224 = sphi 0, %s223
      %s240 = sphi 0, %s224
      %s246 = sphi 0, %s248
      %s249 = sphi 0, %s246
      %s250 = sphi 0, %s249
      %s266 = sphi 0, %s250
      %s272 = sphi 0, %s274
      %s275 = sphi 0, %s272
      %s276 = sphi 0, %s275
      %s292 = sphi 0, %s276
      %s298 = sphi 0, %s300
      %s301 = sphi 0, %s298
      %s302 = sphi 0, %s301
      %s318 = sphi 0, %s302
      %s324 = sphi 0, %s326
      %s327 = sphi 0, %s324
      %s328 = sphi 0, %s327
      %s344 = sphi 0, %s328
      %s350 = sphi 0, %s352
      %s353 = sphi 0, %s350
      %s354 = sphi 0, %s353
      %s370 = sphi 0, %s354
      %s376 = sphi 0, %s378
      %s379 = sphi 0, %s376
      %s380 = sphi 0, %s379
      %s396 = sphi 0, %s380
      %s402 = sphi 0, %s404
      %s405 = sphi 0, %s402
      %s406 = sphi 0, %s405
      %s422 = sphi 0, %s406
      %s428 = sphi 0, %s430
      %s431 = sphi 0, %s428
      %s432 = sphi 0, %s431
      %s448 = sphi 0, %s432
      %s452 = sphi 0, %s452
      %s454 = sphi 0, %s452
      %s455 = sphi 0, %s454
      %s469 = sphi 0, %s455
      %s473 = sphi 0, %s473
      %s475 = sphi 0, %s473
      %s476 = sphi 0, %s475
      %s490 = sphi 0, %s476
      %s494 = sphi 0, %s494
      %s496 = sphi 0, %s494
      %s497 = sphi 0, %s496
      %s511 = sphi 0, %s497
      %s515 = sphi 0, %s515
      %s517 = sphi 0, %s515
      %s518 = sphi 0, %s517
      %s532 = sphi 0, %s518
      %s538 = sphi 0, %s540
      %s541 = sphi 0, %s538
      %s542 = sphi 0, %s541
      %s558 = sphi 0, %s542
    $region4: #{tpu_custom_call.1} parent=1 // loop_header_branch
      %34 = sbr.rel (%p32) target = $region8
    $region5: #{tpu_custom_call.1} parent=1 // loop_body
      %s36 = ssub.s32 %s31, 1
      %s37 = ssub.s32 %s31, 2
      %s44 = sadd.s32 1, %s39
      %p45 = scmp.ge.s32.totalorder %s44, 2
      %s46 = scalar_select %p45, 0, %s44
      %s47 = sadd.s32 1, %s38
      %s48 = scalar_select %p45, %s47, %s38
      %p49 = scmp.ge.s32.totalorder %s48, 2
      %s50 = scalar_select %p49, 0, %s48
      %s51 = ssub.s32 %s38, %s50
      %p52 = scmp.eq.s32.totalorder %s51, 0
      %s54 = sadd.s32 %s53, 1
      %s55 = scalar_select %p52, %s53, %s54
      %p58 = pneg %p52
      %p59 = scmp.eq.s32.totalorder %s31, 3
      %p60 = por %p58, %p59
      %p61 = scmp.ne.s32.totalorder %s53, %s56
      %p62 = scmp.eq.s32.totalorder %s31, 0
      %p63 = por %p61, %p62
      %p64 = scmp.ne.s32.totalorder %s53, %s56
      %p65 = scmp.eq.s32.totalorder %s36, 3
      %p66 = por %p64, %p65
      %p67 = scmp.ne.s32.totalorder %s56, %s57
      %p68 = scmp.eq.s32.totalorder %s36, 0
      %p69 = por %p67, %p68
      %p70 = scmp.ne.s32.totalorder %s56, %s57
      %p71 = scmp.eq.s32.totalorder %s37, 3
      %p72 = por %p70, %p71
      %p74 = scmp.ne.s32.totalorder %s57, %s73
      %p75 = scmp.eq.s32.totalorder %s37, 0
      %p76 = por %p74, %p75
      %s78 = sadd.s32 %s77, 1
      %p81 = scmp.eq.s32.totalorder %s31, 3
      %p82 = scmp.ne.s32.totalorder %s77, %s79
      %p83 = scmp.eq.s32.totalorder %s31, 0
      %p84 = por %p82, %p83
      %p85 = scmp.ne.s32.totalorder %s77, %s79
      %p86 = scmp.eq.s32.totalorder %s36, 3
      %p87 = por %p85, %p86
      %p88 = scmp.ne.s32.totalorder %s79, %s80
      %p89 = scmp.eq.s32.totalorder %s36, 0
      %p90 = por %p88, %p89
      %p91 = scmp.ne.s32.totalorder %s79, %s80
      %p92 = scmp.eq.s32.totalorder %s37, 3
      %p93 = por %p91, %p92
      %p95 = scmp.ne.s32.totalorder %s80, %s94
      %p96 = scmp.eq.s32.totalorder %s37, 0
      %p97 = por %p95, %p96
      %s99 = sadd.s32 %s98, 1
      %p102 = scmp.eq.s32.totalorder %s31, 3
      %p103 = scmp.ne.s32.totalorder %s98, %s100
      %p104 = scmp.eq.s32.totalorder %s31, 0
      %p105 = por %p103, %p104
      %p106 = scmp.ne.s32.totalorder %s98, %s100
      %p107 = scmp.eq.s32.totalorder %s36, 3
      %p108 = por %p106, %p107
      %p109 = scmp.ne.s32.totalorder %s100, %s101
      %p110 = scmp.eq.s32.totalorder %s36, 0
      %p111 = por %p109, %p110
      %p112 = scmp.ne.s32.totalorder %s100, %s101
      %p113 = scmp.eq.s32.totalorder %s37, 3
      %p114 = por %p112, %p113
      %p116 = scmp.ne.s32.totalorder %s101, %s115
      %p117 = scmp.eq.s32.totalorder %s37, 0
      %p118 = por %p116, %p117
      %s120 = sadd.s32 %s119, 1
      %p123 = scmp.eq.s32.totalorder %s31, 3
      %p124 = scmp.ne.s32.totalorder %s119, %s121
      %p125 = scmp.eq.s32.totalorder %s31, 0
      %p126 = por %p124, %p125
      %p127 = scmp.ne.s32.totalorder %s119, %s121
      %p128 = scmp.eq.s32.totalorder %s36, 3
      %p129 = por %p127, %p128
      %p130 = scmp.ne.s32.totalorder %s121, %s122
      %p131 = scmp.eq.s32.totalorder %s36, 0
      %p132 = por %p130, %p131
      %p133 = scmp.ne.s32.totalorder %s121, %s122
      %p134 = scmp.eq.s32.totalorder %s37, 3
      %p135 = por %p133, %p134
      %p137 = scmp.ne.s32.totalorder %s122, %s136
      %p138 = scmp.eq.s32.totalorder %s37, 0
      %p139 = por %p137, %p138
      %s140 = ssub.s32 %s39, %s46
      %p141 = scmp.eq.s32.totalorder %s140, 0
      %s143 = sadd.s32 %s142, 1
      %s144 = scalar_select %p141, %s142, %s143
      %p147 = pneg %p141
      %p148 = scmp.eq.s32.totalorder %s31, 3
      %p149 = por %p147, %p148
      %p150 = scmp.ne.s32.totalorder %s142, %s145
      %p151 = scmp.eq.s32.totalorder %s31, 0
      %p152 = por %p150, %p151
      %p153 = scmp.ne.s32.totalorder %s142, %s145
      %p154 = scmp.eq.s32.totalorder %s36, 3
      %p155 = por %p153, %p154
      %p156 = scmp.ne.s32.totalorder %s145, %s146
      %p157 = scmp.eq.s32.totalorder %s36, 0
      %p158 = por %p156, %p157
      %p159 = scmp.ne.s32.totalorder %s145, %s146
      %p160 = scmp.eq.s32.totalorder %s37, 3
      %p161 = por %p159, %p160
      %p163 = scmp.ne.s32.totalorder %s146, %s162
      %p164 = scmp.eq.s32.totalorder %s37, 0
      %p165 = por %p163, %p164
      %s166 = ssub.s32 %s39, %s46
      %p167 = scmp.eq.s32.totalorder %s166, 0
      %s169 = sadd.s32 %s168, 1
      %s170 = scalar_select %p167, %s168, %s169
      %p173 = pneg %p167
      %p174 = scmp.eq.s32.totalorder %s31, 3
      %p175 = por %p173, %p174
      %p176 = scmp.ne.s32.totalorder %s168, %s171
      %p177 = scmp.eq.s32.totalorder %s31, 0
      %p178 = por %p176, %p177
      %p179 = scmp.ne.s32.totalorder %s168, %s171
      %p180 = scmp.eq.s32.totalorder %s36, 3
      %p181 = por %p179, %p180
      %p182 = scmp.ne.s32.totalorder %s171, %s172
      %p183 = scmp.eq.s32.totalorder %s36, 0
      %p184 = por %p182, %p183
      %p185 = scmp.ne.s32.totalorder %s171, %s172
      %p186 = scmp.eq.s32.totalorder %s37, 3
      %p187 = por %p185, %p186
      %p189 = scmp.ne.s32.totalorder %s172, %s188
      %p190 = scmp.eq.s32.totalorder %s37, 0
      %p191 = por %p189, %p190
      %s192 = ssub.s32 %s39, %s46
      %p193 = scmp.eq.s32.totalorder %s192, 0
      %s195 = sadd.s32 %s194, 1
      %s196 = scalar_select %p193, %s194, %s195
      %p199 = pneg %p193
      %p200 = scmp.eq.s32.totalorder %s31, 3
      %p201 = por %p199, %p200
      %p202 = scmp.ne.s32.totalorder %s194, %s197
      %p203 = scmp.eq.s32.totalorder %s31, 0
      %p204 = por %p202, %p203
      %p205 = scmp.ne.s32.totalorder %s194, %s197
      %p206 = scmp.eq.s32.totalorder %s36, 3
      %p207 = por %p205, %p206
      %p208 = scmp.ne.s32.totalorder %s197, %s198
      %p209 = scmp.eq.s32.totalorder %s36, 0
      %p210 = por %p208, %p209
      %p211 = scmp.ne.s32.totalorder %s197, %s198
      %p212 = scmp.eq.s32.totalorder %s37, 3
      %p213 = por %p211, %p212
      %p215 = scmp.ne.s32.totalorder %s198, %s214
      %p216 = scmp.eq.s32.totalorder %s37, 0
      %p217 = por %p215, %p216
      %s218 = ssub.s32 %s39, %s46
      %p219 = scmp.eq.s32.totalorder %s218, 0
      %s221 = sadd.s32 %s220, 1
      %s222 = scalar_select %p219, %s220, %s221
      %p225 = pneg %p219
      %p226 = scmp.eq.s32.totalorder %s31, 3
      %p227 = por %p225, %p226
      %p228 = scmp.ne.s32.totalorder %s220, %s223
      %p229 = scmp.eq.s32.totalorder %s31, 0
      %p230 = por %p228, %p229
      %p231 = scmp.ne.s32.totalorder %s220, %s223
      %p232 = scmp.eq.s32.totalorder %s36, 3
      %p233 = por %p231, %p232
      %p234 = scmp.ne.s32.totalorder %s223, %s224
      %p235 = scmp.eq.s32.totalorder %s36, 0
      %p236 = por %p234, %p235
      %p237 = scmp.ne.s32.totalorder %s223, %s224
      %p238 = scmp.eq.s32.totalorder %s37, 3
      %p239 = por %p237, %p238
      %p241 = scmp.ne.s32.totalorder %s224, %s240
      %p242 = scmp.eq.s32.totalorder %s37, 0
      %p243 = por %p241, %p242
      %s244 = ssub.s32 %s39, %s46
      %p245 = scmp.eq.s32.totalorder %s244, 0
      %s247 = sadd.s32 %s246, 1
      %s248 = scalar_select %p245, %s246, %s247
      %p251 = pneg %p245
      %p252 = scmp.eq.s32.totalorder %s31, 3
      %p253 = por %p251, %p252
      %p254 = scmp.ne.s32.totalorder %s246, %s249
      %p255 = scmp.eq.s32.totalorder %s31, 0
      %p256 = por %p254, %p255
      %p257 = scmp.ne.s32.totalorder %s246, %s249
      %p258 = scmp.eq.s32.totalorder %s36, 3
      %p259 = por %p257, %p258
      %p260 = scmp.ne.s32.totalorder %s249, %s250
      %p261 = scmp.eq.s32.totalorder %s36, 0
      %p262 = por %p260, %p261
      %p263 = scmp.ne.s32.totalorder %s249, %s250
      %p264 = scmp.eq.s32.totalorder %s37, 3
      %p265 = por %p263, %p264
      %p267 = scmp.ne.s32.totalorder %s250, %s266
      %p268 = scmp.eq.s32.totalorder %s37, 0
      %p269 = por %p267, %p268
      %s270 = ssub.s32 %s39, %s46
      %p271 = scmp.eq.s32.totalorder %s270, 0
      %s273 = sadd.s32 %s272, 1
      %s274 = scalar_select %p271, %s272, %s273
      %p277 = pneg %p271
      %p278 = scmp.eq.s32.totalorder %s31, 3
      %p279 = por %p277, %p278
      %p280 = scmp.ne.s32.totalorder %s272, %s275
      %p281 = scmp.eq.s32.totalorder %s31, 0
      %p282 = por %p280, %p281
      %p283 = scmp.ne.s32.totalorder %s272, %s275
      %p284 = scmp.eq.s32.totalorder %s36, 3
      %p285 = por %p283, %p284
      %p286 = scmp.ne.s32.totalorder %s275, %s276
      %p287 = scmp.eq.s32.totalorder %s36, 0
      %p288 = por %p286, %p287
      %p289 = scmp.ne.s32.totalorder %s275, %s276
      %p290 = scmp.eq.s32.totalorder %s37, 3
      %p291 = por %p289, %p290
      %p293 = scmp.ne.s32.totalorder %s276, %s292
      %p294 = scmp.eq.s32.totalorder %s37, 0
      %p295 = por %p293, %p294
      %s296 = ssub.s32 %s39, %s46
      %p297 = scmp.eq.s32.totalorder %s296, 0
      %s299 = sadd.s32 %s298, 1
      %s300 = scalar_select %p297, %s298, %s299
      %p303 = pneg %p297
      %p304 = scmp.eq.s32.totalorder %s31, 3
      %p305 = por %p303, %p304
      %p306 = scmp.ne.s32.totalorder %s298, %s301
      %p307 = scmp.eq.s32.totalorder %s31, 0
      %p308 = por %p306, %p307
      %p309 = scmp.ne.s32.totalorder %s298, %s301
      %p310 = scmp.eq.s32.totalorder %s36, 3
      %p311 = por %p309, %p310
      %p312 = scmp.ne.s32.totalorder %s301, %s302
      %p313 = scmp.eq.s32.totalorder %s36, 0
      %p314 = por %p312, %p313
      %p315 = scmp.ne.s32.totalorder %s301, %s302
      %p316 = scmp.eq.s32.totalorder %s37, 3
      %p317 = por %p315, %p316
      %p319 = scmp.ne.s32.totalorder %s302, %s318
      %p320 = scmp.eq.s32.totalorder %s37, 0
      %p321 = por %p319, %p320
      %s322 = ssub.s32 %s39, %s46
      %p323 = scmp.eq.s32.totalorder %s322, 0
      %s325 = sadd.s32 %s324, 1
      %s326 = scalar_select %p323, %s324, %s325
      %p329 = pneg %p323
      %p330 = scmp.eq.s32.totalorder %s31, 3
      %p331 = por %p329, %p330
      %p332 = scmp.ne.s32.totalorder %s324, %s327
      %p333 = scmp.eq.s32.totalorder %s31, 0
      %p334 = por %p332, %p333
      %p335 = scmp.ne.s32.totalorder %s324, %s327
      %p336 = scmp.eq.s32.totalorder %s36, 3
      %p337 = por %p335, %p336
      %p338 = scmp.ne.s32.totalorder %s327, %s328
      %p339 = scmp.eq.s32.totalorder %s36, 0
      %p340 = por %p338, %p339
      %p341 = scmp.ne.s32.totalorder %s327, %s328
      %p342 = scmp.eq.s32.totalorder %s37, 3
      %p343 = por %p341, %p342
      %p345 = scmp.ne.s32.totalorder %s328, %s344
      %p346 = scmp.eq.s32.totalorder %s37, 0
      %p347 = por %p345, %p346
      %s348 = ssub.s32 %s39, %s46
      %p349 = scmp.eq.s32.totalorder %s348, 0
      %s351 = sadd.s32 %s350, 1
      %s352 = scalar_select %p349, %s350, %s351
      %p355 = pneg %p349
      %p356 = scmp.eq.s32.totalorder %s31, 3
      %p357 = por %p355, %p356
      %p358 = scmp.ne.s32.totalorder %s350, %s353
      %p359 = scmp.eq.s32.totalorder %s31, 0
      %p360 = por %p358, %p359
      %p361 = scmp.ne.s32.totalorder %s350, %s353
      %p362 = scmp.eq.s32.totalorder %s36, 3
      %p363 = por %p361, %p362
      %p364 = scmp.ne.s32.totalorder %s353, %s354
      %p365 = scmp.eq.s32.totalorder %s36, 0
      %p366 = por %p364, %p365
      %p367 = scmp.ne.s32.totalorder %s353, %s354
      %p368 = scmp.eq.s32.totalorder %s37, 3
      %p369 = por %p367, %p368
      %p371 = scmp.ne.s32.totalorder %s354, %s370
      %p372 = scmp.eq.s32.totalorder %s37, 0
      %p373 = por %p371, %p372
      %s374 = ssub.s32 %s39, %s46
      %p375 = scmp.eq.s32.totalorder %s374, 0
      %s377 = sadd.s32 %s376, 1
      %s378 = scalar_select %p375, %s376, %s377
      %p381 = pneg %p375
      %p382 = scmp.eq.s32.totalorder %s31, 3
      %p383 = por %p381, %p382
      %p384 = scmp.ne.s32.totalorder %s376, %s379
      %p385 = scmp.eq.s32.totalorder %s31, 0
      %p386 = por %p384, %p385
      %p387 = scmp.ne.s32.totalorder %s376, %s379
      %p388 = scmp.eq.s32.totalorder %s36, 3
      %p389 = por %p387, %p388
      %p390 = scmp.ne.s32.totalorder %s379, %s380
      %p391 = scmp.eq.s32.totalorder %s36, 0
      %p392 = por %p390, %p391
      %p393 = scmp.ne.s32.totalorder %s379, %s380
      %p394 = scmp.eq.s32.totalorder %s37, 3
      %p395 = por %p393, %p394
      %p397 = scmp.ne.s32.totalorder %s380, %s396
      %p398 = scmp.eq.s32.totalorder %s37, 0
      %p399 = por %p397, %p398
      %s400 = ssub.s32 %s39, %s46
      %p401 = scmp.eq.s32.totalorder %s400, 0
      %s403 = sadd.s32 %s402, 1
      %s404 = scalar_select %p401, %s402, %s403
      %p407 = pneg %p401
      %p408 = scmp.eq.s32.totalorder %s31, 3
      %p409 = por %p407, %p408
      %p410 = scmp.ne.s32.totalorder %s402, %s405
      %p411 = scmp.eq.s32.totalorder %s31, 0
      %p412 = por %p410, %p411
      %p413 = scmp.ne.s32.totalorder %s402, %s405
      %p414 = scmp.eq.s32.totalorder %s36, 3
      %p415 = por %p413, %p414
      %p416 = scmp.ne.s32.totalorder %s405, %s406
      %p417 = scmp.eq.s32.totalorder %s36, 0
      %p418 = por %p416, %p417
      %p419 = scmp.ne.s32.totalorder %s405, %s406
      %p420 = scmp.eq.s32.totalorder %s37, 3
      %p421 = por %p419, %p420
      %p423 = scmp.ne.s32.totalorder %s406, %s422
      %p424 = scmp.eq.s32.totalorder %s37, 0
      %p425 = por %p423, %p424
      %s426 = ssub.s32 %s39, %s46
      %p427 = scmp.eq.s32.totalorder %s426, 0
      %s429 = sadd.s32 %s428, 1
      %s430 = scalar_select %p427, %s428, %s429
      %p433 = pneg %p427
      %p434 = scmp.eq.s32.totalorder %s31, 3
      %p435 = por %p433, %p434
      %p436 = scmp.ne.s32.totalorder %s428, %s431
      %p437 = scmp.eq.s32.totalorder %s31, 0
      %p438 = por %p436, %p437
      %p439 = scmp.ne.s32.totalorder %s428, %s431
      %p440 = scmp.eq.s32.totalorder %s36, 3
      %p441 = por %p439, %p440
      %p442 = scmp.ne.s32.totalorder %s431, %s432
      %p443 = scmp.eq.s32.totalorder %s36, 0
      %p444 = por %p442, %p443
      %p445 = scmp.ne.s32.totalorder %s431, %s432
      %p446 = scmp.eq.s32.totalorder %s37, 3
      %p447 = por %p445, %p446
      %p449 = scmp.ne.s32.totalorder %s432, %s448
      %p450 = scmp.eq.s32.totalorder %s37, 0
      %p451 = por %p449, %p450
      %s453 = sadd.s32 %s452, 1
      %p456 = scmp.eq.s32.totalorder %s31, 3
      %p457 = scmp.ne.s32.totalorder %s452, %s454
      %p458 = scmp.eq.s32.totalorder %s31, 0
      %p459 = por %p457, %p458
      %p460 = scmp.ne.s32.totalorder %s452, %s454
      %p461 = scmp.eq.s32.totalorder %s36, 3
      %p462 = por %p460, %p461
      %p463 = scmp.ne.s32.totalorder %s454, %s455
      %p464 = scmp.eq.s32.totalorder %s36, 0
      %p465 = por %p463, %p464
      %p466 = scmp.ne.s32.totalorder %s454, %s455
      %p467 = scmp.eq.s32.totalorder %s37, 3
      %p468 = por %p466, %p467
      %p470 = scmp.ne.s32.totalorder %s455, %s469
      %p471 = scmp.eq.s32.totalorder %s37, 0
      %p472 = por %p470, %p471
      %s474 = sadd.s32 %s473, 1
      %p477 = scmp.eq.s32.totalorder %s31, 3
      %p478 = scmp.ne.s32.totalorder %s473, %s475
      %p479 = scmp.eq.s32.totalorder %s31, 0
      %p480 = por %p478, %p479
      %p481 = scmp.ne.s32.totalorder %s473, %s475
      %p482 = scmp.eq.s32.totalorder %s36, 3
      %p483 = por %p481, %p482
      %p484 = scmp.ne.s32.totalorder %s475, %s476
      %p485 = scmp.eq.s32.totalorder %s36, 0
      %p486 = por %p484, %p485
      %p487 = scmp.ne.s32.totalorder %s475, %s476
      %p488 = scmp.eq.s32.totalorder %s37, 3
      %p489 = por %p487, %p488
      %p491 = scmp.ne.s32.totalorder %s476, %s490
      %p492 = scmp.eq.s32.totalorder %s37, 0
      %p493 = por %p491, %p492
      %s495 = sadd.s32 %s494, 1
      %p498 = scmp.eq.s32.totalorder %s31, 3
      %p499 = scmp.ne.s32.totalorder %s494, %s496
      %p500 = scmp.eq.s32.totalorder %s31, 0
      %p501 = por %p499, %p500
      %p502 = scmp.ne.s32.totalorder %s494, %s496
      %p503 = scmp.eq.s32.totalorder %s36, 3
      %p504 = por %p502, %p503
      %p505 = scmp.ne.s32.totalorder %s496, %s497
      %p506 = scmp.eq.s32.totalorder %s36, 0
      %p507 = por %p505, %p506
      %p508 = scmp.ne.s32.totalorder %s496, %s497
      %p509 = scmp.eq.s32.totalorder %s37, 3
      %p510 = por %p508, %p509
      %p512 = scmp.ne.s32.totalorder %s497, %s511
      %p513 = scmp.eq.s32.totalorder %s37, 0
      %p514 = por %p512, %p513
      %s516 = sadd.s32 %s515, 1
      %p519 = scmp.eq.s32.totalorder %s31, 3
      %p520 = scmp.ne.s32.totalorder %s515, %s517
      %p521 = scmp.eq.s32.totalorder %s31, 0
      %p522 = por %p520, %p521
      %p523 = scmp.ne.s32.totalorder %s515, %s517
      %p524 = scmp.eq.s32.totalorder %s36, 3
      %p525 = por %p523, %p524
      %p526 = scmp.ne.s32.totalorder %s517, %s518
      %p527 = scmp.eq.s32.totalorder %s36, 0
      %p528 = por %p526, %p527
      %p529 = scmp.ne.s32.totalorder %s517, %s518
      %p530 = scmp.eq.s32.totalorder %s37, 3
      %p531 = por %p529, %p530
      %p533 = scmp.ne.s32.totalorder %s518, %s532
      %p534 = scmp.eq.s32.totalorder %s37, 0
      %p535 = por %p533, %p534
      %s536 = ssub.s32 %s38, %s50
      %p537 = scmp.eq.s32.totalorder %s536, 0
      %s539 = sadd.s32 %s538, 1
      %s540 = scalar_select %p537, %s538, %s539
      %p543 = pneg %p537
      %p544 = scmp.eq.s32.totalorder %s31, 3
      %p545 = por %p543, %p544
      %p546 = scmp.ne.s32.totalorder %s538, %s541
      %p547 = scmp.eq.s32.totalorder %s31, 0
      %p548 = por %p546, %p547
      %p549 = scmp.ne.s32.totalorder %s538, %s541
      %p550 = scmp.eq.s32.totalorder %s36, 3
      %p551 = por %p549, %p550
      %p552 = scmp.ne.s32.totalorder %s541, %s542
      %p553 = scmp.eq.s32.totalorder %s36, 0
      %p554 = por %p552, %p553
      %p555 = scmp.ne.s32.totalorder %s541, %s542
      %p556 = scmp.eq.s32.totalorder %s37, 3
      %p557 = por %p555, %p556
      %p559 = scmp.ne.s32.totalorder %s542, %s558
      %p560 = scmp.eq.s32.totalorder %s37, 0
      %p561 = por %p559, %p560
      %p562 = scmp.le.s32.totalorder 1, %s31
      %p563 = scmp.lt.s32.totalorder %s31, 5
      %p564 = pnand %p562, %p563
      %p565 = pneg %p564
      // Predicated region
      $region9: #{tpu_custom_call.1} parent=5 // pred_check
        _
      $region10: #{tpu_custom_call.1} parent=5 // pred_check_branch
        %567 = sbr.rel (%p564) target = $region12
      $region11: #{tpu_custom_call.1} parent=5 // pred_region
        %s568 = ssub.s32 %s31, 1
        // Predicated region
        $region13: #{tpu_custom_call.1} parent=11 // pred_check
          %p569 = pneg %p90
        $region14: #{tpu_custom_call.1} parent=11 // pred_check_branch
          %571 = sbr.rel (%p569) target = $region16
        $region15: #{tpu_custom_call.1} parent=11 // pred_region
          _
        $region16: #{tpu_custom_call.1} parent=11 // pred_fallthru
          _
        // Predicated region
        $region17: #{tpu_custom_call.1} parent=11 // pred_check
          %p572 = pneg %p111
        $region18: #{tpu_custom_call.1} parent=11 // pred_check_branch
          %574 = sbr.rel (%p572) target = $region20
        $region19: #{tpu_custom_call.1} parent=11 // pred_region
          %s576 = ssub.s32 16, 16
          %577 = vsyncadd [#allocation4], %s576
          %s579 = sshll.u32 [#allocation3], 4
          %s580 = int_to_ptr.vmem [resolvable:$true] %s579
          %582 = dma.hbm_to_vmem [thread:$0]  %s2, 16, %s580, [#allocation4]
        $region20: #{tpu_custom_call.1} parent=11 // pred_fallthru
          _
        // Predicated region
        $region21: #{tpu_custom_call.1} parent=11 // pred_check
          %p583 = pneg %p132
        $region22: #{tpu_custom_call.1} parent=11 // pred_check_branch
          %585 = sbr.rel (%p583) target = $region24
        $region23: #{tpu_custom_call.1} parent=11 // pred_region
          %s587 = ssub.s32 128, 128
          %588 = vsyncadd [#allocation7], %s587
          %s590 = sshll.u32 [#allocation6], 4
          %s591 = int_to_ptr.vmem [resolvable:$true] %s590
          %593 = dma.hbm_to_vmem [thread:$0]  %s3, 128, %s591, [#allocation7]
        $region24: #{tpu_custom_call.1} parent=11 // pred_fallthru
          _
        // Predicated region
        $region25: #{tpu_custom_call.1} parent=11 // pred_check
          %p594 = pneg %p465
        $region26: #{tpu_custom_call.1} parent=11 // pred_check_branch
          %596 = sbr.rel (%p594) target = $region28
        $region27: #{tpu_custom_call.1} parent=11 // pred_region
          _
        $region28: #{tpu_custom_call.1} parent=11 // pred_fallthru
          _
        // Predicated region
        $region29: #{tpu_custom_call.1} parent=11 // pred_check
          %p597 = pneg %p486
        $region30: #{tpu_custom_call.1} parent=11 // pred_check_branch
          %599 = sbr.rel (%p597) target = $region32
        $region31: #{tpu_custom_call.1} parent=11 // pred_region
          _
        $region32: #{tpu_custom_call.1} parent=11 // pred_fallthru
          _
        // Predicated region
        $region33: #{tpu_custom_call.1} parent=11 // pred_check
          %p600 = pneg %p507
        $region34: #{tpu_custom_call.1} parent=11 // pred_check_branch
          %602 = sbr.rel (%p600) target = $region36
        $region35: #{tpu_custom_call.1} parent=11 // pred_region
          _
        $region36: #{tpu_custom_call.1} parent=11 // pred_fallthru
          _
        // Predicated region
        $region37: #{tpu_custom_call.1} parent=11 // pred_check
          %p603 = pneg %p528
        $region38: #{tpu_custom_call.1} parent=11 // pred_check_branch
          %605 = sbr.rel (%p603) target = $region40
        $region39: #{tpu_custom_call.1} parent=11 // pred_region
          _
        $region40: #{tpu_custom_call.1} parent=11 // pred_fallthru
          _
      $region12: #{tpu_custom_call.1} parent=5 // pred_fallthru
        _
      %p606 = scmp.lt.s32.totalorder %s31, 4
      // Predicated region
      $region41: #{tpu_custom_call.1} parent=5 // pred_check
        %p607 = pneg %p606
      $region42: #{tpu_custom_call.1} parent=5 // pred_check_branch
        %609 = sbr.rel (%p607) target = $region44
      $region43: #{tpu_custom_call.1} parent=5 // pred_region
        // Predicated region
        $region45: #{tpu_custom_call.1} parent=43 // pred_check
          %p610 = pneg %p63
        $region46: #{tpu_custom_call.1} parent=43 // pred_check_branch
          %612 = sbr.rel (%p610) target = $region48
        $region47: #{tpu_custom_call.1} parent=43 // pred_region
          %p613 = scmp.lt.s32.totalorder %s38, 1
          %s614 = scalar_select %p613, %s38, 1
          %s615 = smul.addr %s614, 8
          %s616 = scalar_lea.vmem %s0, %s615
        $region48: #{tpu_custom_call.1} parent=43 // pred_fallthru
          _
        // Predicated region
        $region49: #{tpu_custom_call.1} parent=43 // pred_check
          %p617 = pneg %p152
        $region50: #{tpu_custom_call.1} parent=43 // pred_check_branch
          %619 = sbr.rel (%p617) target = $region52
        $region51: #{tpu_custom_call.1} parent=43 // pred_region
          %s620 = sand.u32 %s31, 1
          %s621 = scalar_lea.sflag [#allocation4], %s620
          %s622 = sand.u32 %s142, 1
          %s623 = scalar_lea.vmem [#allocation8], %s622
          %s625 = ssub.s32 16, 16
          %626 = vsyncadd %s621, %s625
          %s627 = smul.addr %s39, 16
          %s628 = scalar_lea.hbm %s4, %s627
          %s630 = sshll.u32 %s623, 4
          %s631 = int_to_ptr.vmem [resolvable:$true] %s630
          %633 = dma.hbm_to_vmem [thread:$0]  %s628, 16, %s631, %s621
        $region52: #{tpu_custom_call.1} parent=43 // pred_fallthru
          _
        // Predicated region
        $region53: #{tpu_custom_call.1} parent=43 // pred_check
          %p634 = pneg %p178
        $region54: #{tpu_custom_call.1} parent=43 // pred_check_branch
          %636 = sbr.rel (%p634) target = $region56
        $region55: #{tpu_custom_call.1} parent=43 // pred_region
          %s637 = sand.u32 %s31, 1
          %s638 = scalar_lea.sflag [#allocation4], %s637
          %s639 = sand.u32 %s168, 1
          %s640 = scalar_lea.vmem [#allocation9], %s639
          %s642 = ssub.s32 16, 16
          %643 = vsyncadd %s638, %s642
          %s644 = smul.addr %s39, 16
          %s645 = scalar_lea.hbm %s5, %s644
          %s647 = sshll.u32 %s640, 4
          %s648 = int_to_ptr.vmem [resolvable:$true] %s647
          %650 = dma.hbm_to_vmem [thread:$0]  %s645, 16, %s648, %s638
        $region56: #{tpu_custom_call.1} parent=43 // pred_fallthru
          _
        // Predicated region
        $region57: #{tpu_custom_call.1} parent=43 // pred_check
          %p651 = pneg %p204
        $region58: #{tpu_custom_call.1} parent=43 // pred_check_branch
          %653 = sbr.rel (%p651) target = $region60
        $region59: #{tpu_custom_call.1} parent=43 // pred_region
          %p654 = scmp.lt.s32.totalorder %s39, 1
          %s655 = scalar_select %p654, %s39, 1
          %s656 = smul.addr %s655, 16
          %s657 = smul.addr %s656, 4
          %s658 = scalar_lea.vmem %s6, %s657
        $region60: #{tpu_custom_call.1} parent=43 // pred_fallthru
          _
        // Predicated region
        $region61: #{tpu_custom_call.1} parent=43 // pred_check
          %p659 = pneg %p230
        $region62: #{tpu_custom_call.1} parent=43 // pred_check_branch
          %661 = sbr.rel (%p659) target = $region64
        $region63: #{tpu_custom_call.1} parent=43 // pred_region
          %p662 = scmp.lt.s32.totalorder %s39, 1
          %s663 = scalar_select %p662, %s39, 1
          %s664 = smul.addr %s663, 2
          %s665 = scalar_lea.vmem %s7, %s664
        $region64: #{tpu_custom_call.1} parent=43 // pred_fallthru
          _
        // Predicated region
        $region65: #{tpu_custom_call.1} parent=43 // pred_check
          %p666 = pneg %p256
        $region66: #{tpu_custom_call.1} parent=43 // pred_check_branch
          %668 = sbr.rel (%p666) target = $region68
        $region67: #{tpu_custom_call.1} parent=43 // pred_region
          %p669 = scmp.lt.s32.totalorder %s39, 1
          %s670 = scalar_select %p669, %s39, 1
          %s671 = smul.addr %s670, 8
          %s672 = smul.addr %s671, 4
          %s673 = scalar_lea.vmem %s8, %s672
        $region68: #{tpu_custom_call.1} parent=43 // pred_fallthru
          _
        // Predicated region
        $region69: #{tpu_custom_call.1} parent=43 // pred_check
          %p674 = pneg %p282
        $region70: #{tpu_custom_call.1} parent=43 // pred_check_branch
          %676 = sbr.rel (%p674) target = $region72
        $region71: #{tpu_custom_call.1} parent=43 // pred_region
          %p677 = scmp.lt.s32.totalorder %s39, 1
          %s678 = scalar_select %p677, %s39, 1
          %s679 = scalar_lea.vmem %s9, %s678
        $region72: #{tpu_custom_call.1} parent=43 // pred_fallthru
          _
        // Predicated region
        $region73: #{tpu_custom_call.1} parent=43 // pred_check
          %p680 = pneg %p308
        $region74: #{tpu_custom_call.1} parent=43 // pred_check_branch
          %682 = sbr.rel (%p680) target = $region76
        $region75: #{tpu_custom_call.1} parent=43 // pred_region
          %p683 = scmp.lt.s32.totalorder %s39, 1
          %s684 = scalar_select %p683, %s39, 1
          %s685 = scalar_lea.vmem %s10, %s684
        $region76: #{tpu_custom_call.1} parent=43 // pred_fallthru
          _
        // Predicated region
        $region77: #{tpu_custom_call.1} parent=43 // pred_check
          %p686 = pneg %p334
        $region78: #{tpu_custom_call.1} parent=43 // pred_check_branch
          %688 = sbr.rel (%p686) target = $region80
        $region79: #{tpu_custom_call.1} parent=43 // pred_region
          %p689 = scmp.lt.s32.totalorder %s39, 1
          %s690 = scalar_select %p689, %s39, 1
          %s691 = scalar_lea.vmem %s11, %s690
        $region80: #{tpu_custom_call.1} parent=43 // pred_fallthru
          _
        // Predicated region
        $region81: #{tpu_custom_call.1} parent=43 // pred_check
          %p692 = pneg %p360
        $region82: #{tpu_custom_call.1} parent=43 // pred_check_branch
          %694 = sbr.rel (%p692) target = $region84
        $region83: #{tpu_custom_call.1} parent=43 // pred_region
          %p695 = scmp.lt.s32.totalorder %s39, 1
          %s696 = scalar_select %p695, %s39, 1
          %s697 = smul.addr %s696, 16
          %s698 = smul.addr %s697, 4
          %s699 = scalar_lea.vmem %s12, %s698
        $region84: #{tpu_custom_call.1} parent=43 // pred_fallthru
          _
        // Predicated region
        $region85: #{tpu_custom_call.1} parent=43 // pred_check
          %p700 = pneg %p386
        $region86: #{tpu_custom_call.1} parent=43 // pred_check_branch
          %702 = sbr.rel (%p700) target = $region88
        $region87: #{tpu_custom_call.1} parent=43 // pred_region
          %p703 = scmp.lt.s32.totalorder %s39, 1
          %s704 = scalar_select %p703, %s39, 1
          %s705 = smul.addr %s704, 2
          %s706 = scalar_lea.vmem %s13, %s705
        $region88: #{tpu_custom_call.1} parent=43 // pred_fallthru
          _
        // Predicated region
        $region89: #{tpu_custom_call.1} parent=43 // pred_check
          %p707 = pneg %p412
        $region90: #{tpu_custom_call.1} parent=43 // pred_check_branch
          %709 = sbr.rel (%p707) target = $region92
        $region91: #{tpu_custom_call.1} parent=43 // pred_region
          %p710 = scmp.lt.s32.totalorder %s39, 1
          %s711 = scalar_select %p710, %s39, 1
          %s712 = smul.addr %s711, 32
          %s713 = smul.addr %s712, 4
          %s714 = scalar_lea.vmem %s14, %s713
        $region92: #{tpu_custom_call.1} parent=43 // pred_fallthru
          _
        // Predicated region
        $region93: #{tpu_custom_call.1} parent=43 // pred_check
          %p715 = pneg %p438
        $region94: #{tpu_custom_call.1} parent=43 // pred_check_branch
          %717 = sbr.rel (%p715) target = $region96
        $region95: #{tpu_custom_call.1} parent=43 // pred_region
          %p718 = scmp.lt.s32.totalorder %s39, 1
          %s719 = scalar_select %p718, %s39, 1
          %s720 = scalar_lea.vmem %s15, %s719
        $region96: #{tpu_custom_call.1} parent=43 // pred_fallthru
          _
      $region44: #{tpu_custom_call.1} parent=5 // pred_fallthru
        _
      %p721 = scmp.le.s32.totalorder 1, %s31
      %p722 = scmp.lt.s32.totalorder %s31, 5
      %p723 = pnand %p721, %p722
      %p724 = pneg %p723
      // Predicated region
      $region97: #{tpu_custom_call.1} parent=5 // pred_check
        _
      $region98: #{tpu_custom_call.1} parent=5 // pred_check_branch
        %726 = sbr.rel (%p723) target = $region100
      $region99: #{tpu_custom_call.1} parent=5 // pred_region
        %s727 = ssub.s32 %s31, 1
        // Predicated region
        $region101: #{tpu_custom_call.1} parent=99 // pred_check
          %p728 = pneg %p111
        $region102: #{tpu_custom_call.1} parent=99 // pred_check_branch
          %730 = sbr.rel (%p728) target = $region104
        $region103: #{tpu_custom_call.1} parent=99 // pred_region
          %731 = dma.done [#allocation4], 16
        $region104: #{tpu_custom_call.1} parent=99 // pred_fallthru
          _
        // Predicated region
        $region105: #{tpu_custom_call.1} parent=99 // pred_check
          %p732 = pneg %p132
        $region106: #{tpu_custom_call.1} parent=99 // pred_check_branch
          %734 = sbr.rel (%p732) target = $region108
        $region107: #{tpu_custom_call.1} parent=99 // pred_region
          %735 = dma.done [#allocation7], 128
        $region108: #{tpu_custom_call.1} parent=99 // pred_fallthru
          _
        %s736 = sand.u32 %s36, 1
        %s737 = scalar_lea.sflag [#allocation4], %s736
        %s738 = sand.u32 %s145, 1
        %s739 = scalar_lea.vmem [#allocation8], %s738
        // Predicated region
        $region109: #{tpu_custom_call.1} parent=99 // pred_check
          %p740 = pneg %p158
        $region110: #{tpu_custom_call.1} parent=99 // pred_check_branch
          %742 = sbr.rel (%p740) target = $region112
        $region111: #{tpu_custom_call.1} parent=99 // pred_region
          %743 = dma.done %s737, 16
        $region112: #{tpu_custom_call.1} parent=99 // pred_fallthru
          _
        %s744 = sand.u32 %s36, 1
        %s745 = scalar_lea.sflag [#allocation4], %s744
        %s746 = sand.u32 %s171, 1
        %s747 = scalar_lea.vmem [#allocation9], %s746
        // Predicated region
        $region113: #{tpu_custom_call.1} parent=99 // pred_check
          %p748 = pneg %p184
        $region114: #{tpu_custom_call.1} parent=99 // pred_check_branch
          %750 = sbr.rel (%p748) target = $region116
        $region115: #{tpu_custom_call.1} parent=99 // pred_region
          %751 = dma.done %s745, 16
        $region116: #{tpu_custom_call.1} parent=99 // pred_fallthru
          _
        %p752 = scmp.lt.s32.totalorder %s40, 1
        %s753 = scalar_select %p752, %s40, 1
        %s754 = smul.addr %s753, 8
        %s755 = scalar_lea.vmem %s0, %s754
        %p756 = pneg %p69
        %p757 = pneg %p66
        %p758 = pneg %p90
        %p759 = pneg %p87
        %p760 = pneg %p111
        %p761 = pneg %p108
        %p762 = pneg %p132
        %p763 = pneg %p129
        %s764 = sand.u32 %s36, 1
        %s765 = scalar_lea.sflag [#allocation4], %s764
        %s766 = sand.u32 %s145, 1
        %s767 = scalar_lea.vmem [#allocation8], %s766
        %p768 = pneg %p158
        %p769 = pneg %p155
        %s770 = sand.u32 %s36, 1
        %s771 = scalar_lea.sflag [#allocation4], %s770
        %s772 = sand.u32 %s171, 1
        %s773 = scalar_lea.vmem [#allocation9], %s772
        %p774 = pneg %p184
        %p775 = pneg %p181
        %p776 = scmp.lt.s32.totalorder %s41, 1
        %s777 = scalar_select %p776, %s41, 1
        %s778 = smul.addr %s777, 16
        %s779 = smul.addr %s778, 4
        %s780 = scalar_lea.vmem %s6, %s779
        %p781 = pneg %p210
        %p782 = pneg %p207
        %p783 = scmp.lt.s32.totalorder %s41, 1
        %s784 = scalar_select %p783, %s41, 1
        %s785 = smul.addr %s784, 2
        %s786 = scalar_lea.vmem %s7, %s785
        %p787 = pneg %p236
        %p788 = pneg %p233
        %p789 = scmp.lt.s32.totalorder %s41, 1
        %s790 = scalar_select %p789, %s41, 1
        %s791 = smul.addr %s790, 8
        %s792 = smul.addr %s791, 4
        %s793 = scalar_lea.vmem %s8, %s792
        %p794 = pneg %p262
        %p795 = pneg %p259
        %p796 = scmp.lt.s32.totalorder %s41, 1
        %s797 = scalar_select %p796, %s41, 1
        %s798 = scalar_lea.vmem %s9, %s797
        %p799 = pneg %p288
        %p800 = pneg %p285
        %p801 = scmp.lt.s32.totalorder %s41, 1
        %s802 = scalar_select %p801, %s41, 1
        %s803 = scalar_lea.vmem %s10, %s802
        %p804 = pneg %p314
        %p805 = pneg %p311
        %p806 = scmp.lt.s32.totalorder %s41, 1
        %s807 = scalar_select %p806, %s41, 1
        %s808 = scalar_lea.vmem %s11, %s807
        %p809 = pneg %p340
        %p810 = pneg %p337
        %p811 = scmp.lt.s32.totalorder %s41, 1
        %s812 = scalar_select %p811, %s41, 1
        %s813 = smul.addr %s812, 16
        %s814 = smul.addr %s813, 4
        %s815 = scalar_lea.vmem %s12, %s814
        %p816 = pneg %p366
        %p817 = pneg %p363
        %p818 = scmp.lt.s32.totalorder %s41, 1
        %s819 = scalar_select %p818, %s41, 1
        %s820 = smul.addr %s819, 2
        %s821 = scalar_lea.vmem %s13, %s820
        %p822 = pneg %p392
        %p823 = pneg %p389
        %p824 = scmp.lt.s32.totalorder %s41, 1
        %s825 = scalar_select %p824, %s41, 1
        %s826 = smul.addr %s825, 32
        %s827 = smul.addr %s826, 4
        %s828 = scalar_lea.vmem %s14, %s827
        %p829 = pneg %p418
        %p830 = pneg %p415
        %p831 = scmp.lt.s32.totalorder %s41, 1
        %s832 = scalar_select %p831, %s41, 1
        %s833 = scalar_lea.vmem %s15, %s832
        %p834 = pneg %p444
        %p835 = pneg %p441
        %p836 = pneg %p465
        %p837 = pneg %p462
        %p838 = pneg %p486
        %p839 = pneg %p483
        %p840 = pneg %p507
        %p841 = pneg %p504
        %p842 = pneg %p528
        %p843 = pneg %p525
        %p844 = pneg %p554
        %p845 = pneg %p551
        %s846 = sand.u32 %s541, 1
        %s847 = scalar_lea.sflag [#allocation5], %s846
        %s848 = sand.u32 %s541, 1
        %s849 = smul.addr %s848, 4
        %s850 = scalar_lea.vmem [#allocation10], %s849
        %p851 = scmp.lt.s32.totalorder %s40, 1
        %s852 = scalar_select %p851, %s40, 1
        %s853 = smul.addr %s852, 8
        %s854 = scalar_lea.vmem %s0, %s853
        %p855 = scmp.lt.s32.totalorder %s41, 1
        %s856 = scalar_select %p855, %s41, 1
        %s857 = smul.addr %s856, 16
        %s858 = smul.addr %s857, 4
        %s859 = scalar_lea.vmem %s6, %s858
        %p860 = scmp.lt.s32.totalorder %s41, 1
        %s861 = scalar_select %p860, %s41, 1
        %s862 = smul.addr %s861, 2
        %s863 = scalar_lea.vmem %s7, %s862
        %p864 = scmp.lt.s32.totalorder %s41, 1
        %s865 = scalar_select %p864, %s41, 1
        %s866 = smul.addr %s865, 8
        %s867 = smul.addr %s866, 4
        %s868 = scalar_lea.vmem %s8, %s867
        %p869 = scmp.lt.s32.totalorder %s41, 1
        %s870 = scalar_select %p869, %s41, 1
        %s871 = scalar_lea.vmem %s9, %s870
        %p872 = scmp.lt.s32.totalorder %s41, 1
        %s873 = scalar_select %p872, %s41, 1
        %s874 = scalar_lea.vmem %s10, %s873
        %p875 = scmp.lt.s32.totalorder %s41, 1
        %s876 = scalar_select %p875, %s41, 1
        %s877 = scalar_lea.vmem %s11, %s876
        %p878 = scmp.lt.s32.totalorder %s41, 1
        %s879 = scalar_select %p878, %s41, 1
        %s880 = smul.addr %s879, 16
        %s881 = smul.addr %s880, 4
        %s882 = scalar_lea.vmem %s12, %s881
        %p883 = scmp.lt.s32.totalorder %s41, 1
        %s884 = scalar_select %p883, %s41, 1
        %s885 = smul.addr %s884, 2
        %s886 = scalar_lea.vmem %s13, %s885
        %p887 = scmp.lt.s32.totalorder %s41, 1
        %s888 = scalar_select %p887, %s41, 1
        %s889 = smul.addr %s888, 32
        %s890 = smul.addr %s889, 4
        %s891 = scalar_lea.vmem %s14, %s890
        %p892 = scmp.lt.s32.totalorder %s41, 1
        %s893 = scalar_select %p892, %s41, 1
        %s894 = scalar_lea.vmem %s15, %s893
        %p896 = scmp.eq.s32.totalorder %s41, 0
        // Predicated region
        $region117: #{tpu_custom_call.1} parent=99 // pred_check
          %p897 = pneg %p896
        $region118: #{tpu_custom_call.1} parent=99 // pred_check_branch
          %899 = sbr.rel (%p897) target = $region120
        $region119: #{tpu_custom_call.1} parent=99 // pred_region
          %v900 = vld [vmem:[%s854] sm:$0xff]
          %v901 = vld [vmem:[%s1] sm:$0xf]
          %v902 = vld [vmem:[%s1 + $0x4] sm:$0xf]
          %v903 = vld [vmem:[%s1 + $0x8] sm:$0xf]
          %v904 = vld [vmem:[%s1 + $0xc] sm:$0xf]
          %v905 = vpack.c.bf16 %v900, %v900
          %v906 = vld [vmem:[#allocation3] sm:$0x1]
          %v908 = vlaneseq
          %v909 = vshrl.u32 %v908, 7
          %v910 = vsub.s32 0, %v909
          %v911 = vrot.slane %v906, %v910
          %v917 = vunpack.c.l.b16 %v901
          %v918 = vunpack.c.l.b16 %v902
          %v919 = vunpack.c.l.b16 %v903
          %v920 = vunpack.c.l.b16 %v904
          %v921 = vpack.c.b16 %v918, %v917
          %v922 = vpack.c.b16 %v920, %v919
          %vm925 = vcmask 261120
          %v927 = vsel %vm925, %v905, 0
          %929 = vmatprep.subr.bf16.mxu0 0
          %930 = vmatpush1.bf16.msra.mxu0 0
          %931 = vmatprep.subr.bf16.mxu0 0
          %932 = vmatpush1.bf16.msra.mxu0 0
          %933 = vmatprep.subr.bf16.mxu0 0
          %934 = vmatpush1.bf16.msra.mxu0 0
          %935 = vmatprep.subr.bf16.mxu0 0
          %936 = vmatpush1.bf16.msra.mxu0 0
          %937 = vmatprep.subr.bf16.mxu0 0
          %938 = vmatpush1.bf16.msra.mxu0 0
          %939 = vmatprep.subr.bf16.mxu0 0
          %940 = vmatpush1.bf16.msra.mxu0 0
          %941 = vmatprep.subr.bf16.mxu0 0
          %942 = vmatpush1.bf16.msra.mxu0 %v922
          %943 = vmatprep.subr.bf16.mxu0 0
          %944 = vmatpush1.bf16.msra.mxu0 %v921
          %945 = vmatprep.subr.bf16.mxu0 0
          %946 = vmatpush2.bf16.msra.mxu0 0
          %947 = vmatprep.subr.bf16.mxu0 0
          %948 = vmatpush2.bf16.msra.mxu0 0
          %949 = vmatprep.subr.bf16.mxu0 0
          %950 = vmatpush2.bf16.msra.mxu0 0
          %951 = vmatprep.subr.bf16.mxu0 0
          %952 = vmatpush2.bf16.msra.mxu0 0
          %953 = vmatprep.subr.bf16.mxu0 0
          %954 = vmatpush2.bf16.msra.mxu0 0
          %955 = vmatprep.subr.bf16.mxu0 0
          %956 = vmatpush2.bf16.msra.mxu0 0
          %957 = vmatprep.subr.bf16.mxu0 0
          %958 = vmatpush2.bf16.msra.mxu0 0
          %959 = vmatprep.subr.bf16.mxu0 0
          %960 = vmatpush2.bf16.msra.mxu0 0
          %961 = vmatprep.mubr.bf16.mxu0 0
          %962 = vmatmul.mubr.bf16.gmra.mxu0 %v927
          %v963 = vpop.f32.mrf.mxu0
          %v964 = vadd.f32 %v911, %v963
          %v965 = vpop.f32.mrf.mxu0
          %v966 = vpop.f32.mrf.mxu0
          %v967 = vpop.f32.mrf.mxu0
          %968 = vdwg.mxu0
          %v969 = vld [vmem:[#allocation6] sm:$0xff]
          %v970 = vadd.f32 %v964, %v969
          %vm971 = vcmask 523264
          %972 = vst.msk [vmem:[#allocation2] sm:$0xff] %vm971, %v970
        $region120: #{tpu_custom_call.1} parent=99 // pred_fallthru
          _
        %v973 = vld [vmem:[#allocation2] sm:$0xff]
        %v974 = vld [vmem:[%s739] sm:$0x1]
        %v975 = vld [vmem:[%s747] sm:$0x1]
        %vm976 = vcmask 523264
        %v977 = vsel %vm976, %v973, 0.0
        %978 = vadd.xlane.f32.xlu0 %v977
        %v979 = vpop.xlane.xlu0 %978
        %v980 = vrcp.pop 64.0
        %v981 = vmul.f32 %v979, %v980
        %v982 = vsub.f32 %v973, %v981
        %v983 = vmul.f32 %v982, %v982
        %v984 = vsel %vm976, %v983, 0.0
        %985 = vadd.xlane.f32.xlu0 %v984
        %v986 = vpop.xlane.xlu0 %985
        %v987 = vmul.f32 %v986, %v980
        %v988 = vadd.f32 %v987, 1e-05
        %v989 = vrsqrt.pop %v988
        %v990 = vmul.f32 %v982, %v989
        %v992 = vlaneseq
        %v993 = vshrl.u32 %v992, 7
        %v994 = vsub.s32 0, %v993
        %v995 = vrot.slane %v974, %v994
        %v997 = vmul.f32 %v990, %v995
        %v999 = vlaneseq
        %v1000 = vshrl.u32 %v999, 7
        %v1001 = vsub.s32 0, %v1000
        %v1002 = vrot.slane %v975, %v1001
        %v1004 = vadd.f32 %v997, %v1002
        %v1005 = vld [vmem:[%s859] sm:$0xff]
        %v1006 = vld [vmem:[%s859 + $0x8] sm:$0xff]
        %v1007 = vld [vmem:[%s859 + $0x10] sm:$0xff]
        %v1008 = vld [vmem:[%s859 + $0x18] sm:$0xff]
        %v1009 = vld [vmem:[%s859 + $0x20] sm:$0xff]
        %v1010 = vld [vmem:[%s859 + $0x28] sm:$0xff]
        %v1011 = vld [vmem:[%s859 + $0x30] sm:$0xff]
        %v1012 = vld [vmem:[%s859 + $0x38] sm:$0xff]
        %v1013 = vpack.c.bf16 %v1004, %v1004
        %v1014 = vld [vmem:[%s863] sm:$0x3]
        %v1016 = vlaneseq
        %v1017 = vshrl.u32 %v1016, 7
        %v1018 = vsub.s32 0, %v1017
        %v1019 = vrot.slane %v1014, %v1018
        %v1020 = vlaneseq
        %v1021 = vshrl.u32 %v1020, 7
        %v1022 = vsub.s32 1, %v1021
        %v1023 = vrot.slane %v1014, %v1022
        %v1034 = vunpack.c.l.b16 %v1005
        %v1035 = vunpack.c.h.b16 %v1005
        %v1036 = vunpack.c.l.b16 %v1006
        %v1037 = vunpack.c.h.b16 %v1006
        %v1038 = vunpack.c.l.b16 %v1007
        %v1039 = vunpack.c.h.b16 %v1007
        %v1040 = vunpack.c.l.b16 %v1008
        %v1041 = vunpack.c.h.b16 %v1008
        %v1042 = vunpack.c.l.b16 %v1009
        %v1043 = vunpack.c.h.b16 %v1009
        %v1044 = vunpack.c.l.b16 %v1010
        %v1045 = vunpack.c.h.b16 %v1010
        %v1046 = vunpack.c.l.b16 %v1011
        %v1047 = vunpack.c.h.b16 %v1011
        %v1048 = vunpack.c.l.b16 %v1012
        %v1049 = vunpack.c.h.b16 %v1012
        %v1050 = vpack.c.b16 %v1036, %v1034
        %v1051 = vpack.c.b16 %v1037, %v1035
        %v1052 = vpack.c.b16 %v1040, %v1038
        %v1053 = vpack.c.b16 %v1041, %v1039
        %v1054 = vpack.c.b16 %v1044, %v1042
        %v1055 = vpack.c.b16 %v1045, %v1043
        %v1056 = vpack.c.b16 %v1048, %v1046
        %v1057 = vpack.c.b16 %v1049, %v1047
        %v1067 = vsel %vm976, %v1013, 0
        %1069 = vmatprep.subr.bf16.mxu0 0
        %1070 = vmatpush1.bf16.msra.mxu0 0
        %1071 = vmatprep.subr.bf16.mxu0 0
        %1072 = vmatpush1.bf16.msra.mxu0 0
        %1073 = vmatprep.subr.bf16.mxu0 0
        %1074 = vmatpush1.bf16.msra.mxu0 0
        %1075 = vmatprep.subr.bf16.mxu0 0
        %1076 = vmatpush1.bf16.msra.mxu0 0
        %1077 = vmatprep.subr.bf16.mxu0 %v1057
        %1078 = vmatpush1.bf16.msra.mxu0 %v1056
        %1079 = vmatprep.subr.bf16.mxu0 %v1055
        %1080 = vmatpush1.bf16.msra.mxu0 %v1054
        %1081 = vmatprep.subr.bf16.mxu0 %v1053
        %1082 = vmatpush1.bf16.msra.mxu0 %v1052
        %1083 = vmatprep.subr.bf16.mxu0 %v1051
        %1084 = vmatpush1.bf16.msra.mxu0 %v1050
        %1085 = vmatprep.subr.bf16.mxu0 0
        %1086 = vmatpush2.bf16.msra.mxu0 0
        %1087 = vmatprep.subr.bf16.mxu0 0
        %1088 = vmatpush2.bf16.msra.mxu0 0
        %1089 = vmatprep.subr.bf16.mxu0 0
        %1090 = vmatpush2.bf16.msra.mxu0 0
        %1091 = vmatprep.subr.bf16.mxu0 0
        %1092 = vmatpush2.bf16.msra.mxu0 0
        %1093 = vmatprep.subr.bf16.mxu0 0
        %1094 = vmatpush2.bf16.msra.mxu0 0
        %1095 = vmatprep.subr.bf16.mxu0 0
        %1096 = vmatpush2.bf16.msra.mxu0 0
        %1097 = vmatprep.subr.bf16.mxu0 0
        %1098 = vmatpush2.bf16.msra.mxu0 0
        %1099 = vmatprep.subr.bf16.mxu0 0
        %1100 = vmatpush2.bf16.msra.mxu0 0
        %1101 = vmatprep.mubr.bf16.mxu0 0
        %1102 = vmatmul.mubr.bf16.gmra.mxu0 %v1067
        %v1103 = vpop.f32.mrf.mxu0
        %v1104 = vadd.f32 %v1019, %v1103
        %v1105 = vpop.f32.mrf.mxu0
        %v1106 = vadd.f32 %v1023, %v1105
        %v1107 = vpop.f32.mrf.mxu0
        %v1108 = vpop.f32.mrf.mxu0
        %1109 = vdwg.mxu0
        %v1110 = vpack.c.bf16 %v1104, %v1104
        %v1111 = vpack.c.bf16 %v1106, %v1106
        %1113 = vrot.lane.b32.xlu0 %v1110, 64
        %v1114 = vpop.permute.xlu0 %1113
        %vm1115 = vcmask 130048
        %v1117 = vsel %vm1115, %v1110, 0
        %v1120 = vsel %vm1115, %v1114, 0
        %1122 = vmatprep.subr.bf16.mxu0 0
        %1123 = vmatpush1.bf16.xpose.msra.mxu0 0
        %1124 = vmatprep.subr.bf16.mxu0 0
        %1125 = vmatpush1.bf16.xpose.msra.mxu0 0
        %1126 = vmatprep.subr.bf16.mxu0 0
        %1127 = vmatpush1.bf16.xpose.msra.mxu0 0
        %1128 = vmatprep.subr.bf16.mxu0 0
        %1129 = vmatpush1.bf16.xpose.msra.mxu0 0
        %1130 = vmatprep.subr.bf16.mxu0 0
        %1131 = vmatpush1.bf16.xpose.msra.mxu0 0
        %1132 = vmatprep.subr.bf16.mxu0 0
        %1133 = vmatpush1.bf16.xpose.msra.mxu0 0
        %1134 = vmatprep.subr.bf16.mxu0 0
        %1135 = vmatpush1.bf16.xpose.msra.mxu0 0
        %1136 = vmatprep.subr.bf16.mxu0 0
        %1137 = vmatpush1.bf16.xpose.msra.mxu0 %v1120
        %1138 = vmatprep.subr.bf16.mxu0 0
        %1139 = vmatpush2.bf16.xpose.msra.mxu0 0
        %1140 = vmatprep.subr.bf16.mxu0 0
        %1141 = vmatpush2.bf16.xpose.msra.mxu0 0
        %1142 = vmatprep.subr.bf16.mxu0 0
        %1143 = vmatpush2.bf16.xpose.msra.mxu0 0
        %1144 = vmatprep.subr.bf16.mxu0 0
        %1145 = vmatpush2.bf16.xpose.msra.mxu0 0
        %1146 = vmatprep.subr.bf16.mxu0 0
        %1147 = vmatpush2.bf16.xpose.msra.mxu0 0
        %1148 = vmatprep.subr.bf16.mxu0 0
        %1149 = vmatpush2.bf16.xpose.msra.mxu0 0
        %1150 = vmatprep.subr.bf16.mxu0 0
        %1151 = vmatpush2.bf16.xpose.msra.mxu0 0
        %1152 = vmatprep.subr.bf16.mxu0 0
        %1153 = vmatpush2.bf16.xpose.msra.mxu0 0
        %1154 = vmatprep.mubr.bf16.mxu0 0
        %1155 = vmatmul.mubr.bf16.gmra.mxu0 %v1117
        %v1156 = vpop.f32.mrf.mxu0
        %v1157 = vadd.f32 0.0, %v1156
        %v1158 = vpop.f32.mrf.mxu0
        %v1159 = vpop.f32.mrf.mxu0
        %v1160 = vpop.f32.mrf.mxu0
        %1161 = vdwg.mxu0
        %vm1162 = vcmask 64512
        %v1163 = vsel %vm1162, %v1157, -inf
        %1164 = vmax.xlane.f32.xlu0 %v1163
        %v1165 = vpop.xlane.xlu0 %1164
        %v1166 = vsub.f32 %v1157, %v1165
        %v1167 = vmul.f32 %v1166, 1.442695
        %v1168 = vpow.pop %v1167
        %v1169 = vsel %vm1162, %v1168, 0.0
        %1170 = vadd.xlane.f32.xlu0 %v1169
        %v1171 = vpop.xlane.xlu0 %1170
        %v1172 = vrcp.pop %v1171
        %v1173 = vpack.c.bf16 %v1168, %v1168
        %v1175 = vsel %vm1162, %v1173, 0
        %vm1177 = vcmask 1043456
        %v1179 = vsel %vm1177, %v1111, 0
        %1181 = vmatprep.subr.bf16.mxu0 0
        %1182 = vmatpush1.bf16.msra.mxu0 0
        %1183 = vmatprep.subr.bf16.mxu0 0
        %1184 = vmatpush1.bf16.msra.mxu0 0
        %1185 = vmatprep.subr.bf16.mxu0 0
        %1186 = vmatpush1.bf16.msra.mxu0 0
        %1187 = vmatprep.subr.bf16.mxu0 0
        %1188 = vmatpush1.bf16.msra.mxu0 0
        %1189 = vmatprep.subr.bf16.mxu0 0
        %1190 = vmatpush1.bf16.msra.mxu0 0
        %1191 = vmatprep.subr.bf16.mxu0 0
        %1192 = vmatpush1.bf16.msra.mxu0 0
        %1193 = vmatprep.subr.bf16.mxu0 0
        %1194 = vmatpush1.bf16.msra.mxu0 0
        %1195 = vmatprep.subr.bf16.mxu0 0
        %1196 = vmatpush1.bf16.msra.mxu0 %v1179
        %1197 = vmatprep.subr.bf16.mxu0 0
        %1198 = vmatpush2.bf16.msra.mxu0 0
        %1199 = vmatprep.subr.bf16.mxu0 0
        %1200 = vmatpush2.bf16.msra.mxu0 0
        %1201 = vmatprep.subr.bf16.mxu0 0
        %1202 = vmatpush2.bf16.msra.mxu0 0
        %1203 = vmatprep.subr.bf16.mxu0 0
        %1204 = vmatpush2.bf16.msra.mxu0 0
        %1205 = vmatprep.subr.bf16.mxu0 0
        %1206 = vmatpush2.bf16.msra.mxu0 0
        %1207 = vmatprep.subr.bf16.mxu0 0
        %1208 = vmatpush2.bf16.msra.mxu0 0
        %1209 = vmatprep.subr.bf16.mxu0 0
        %1210 = vmatpush2.bf16.msra.mxu0 0
        %1211 = vmatprep.subr.bf16.mxu0 0
        %1212 = vmatpush2.bf16.msra.mxu0 0
        %1213 = vmatprep.mubr.bf16.mxu0 0
        %1214 = vmatmul.mubr.bf16.gmra.mxu0 %v1175
        %v1215 = vpop.f32.mrf.mxu0
        %v1216 = vadd.f32 0.0, %v1215
        %v1217 = vpop.f32.mrf.mxu0
        %v1218 = vpop.f32.mrf.mxu0
        %v1219 = vpop.f32.mrf.mxu0
        %1220 = vdwg.mxu0
        %v1221 = vmul.f32 %v1216, %v1172
        %1222 = vrot.lane.b32.xlu0 %v1110, 112
        %v1223 = vpop.permute.xlu0 %1222
        %1224 = vrot.lane.b32.xlu0 %v1110, 48
        %v1225 = vpop.permute.xlu0 %1224
        %v1227 = vsel %vm1115, %v1223, 0
        %v1230 = vsel %vm1115, %v1225, 0
        %1232 = vmatprep.subr.bf16.mxu0 0
        %1233 = vmatpush1.bf16.xpose.msra.mxu0 0
        %1234 = vmatprep.subr.bf16.mxu0 0
        %1235 = vmatpush1.bf16.xpose.msra.mxu0 0
        %1236 = vmatprep.subr.bf16.mxu0 0
        %1237 = vmatpush1.bf16.xpose.msra.mxu0 0
        %1238 = vmatprep.subr.bf16.mxu0 0
        %1239 = vmatpush1.bf16.xpose.msra.mxu0 0
        %1240 = vmatprep.subr.bf16.mxu0 0
        %1241 = vmatpush1.bf16.xpose.msra.mxu0 0
        %1242 = vmatprep.subr.bf16.mxu0 0
        %1243 = vmatpush1.bf16.xpose.msra.mxu0 0
        %1244 = vmatprep.subr.bf16.mxu0 0
        %1245 = vmatpush1.bf16.xpose.msra.mxu0 0
        %1246 = vmatprep.subr.bf16.mxu0 0
        %1247 = vmatpush1.bf16.xpose.msra.mxu0 %v1230
        %1248 = vmatprep.subr.bf16.mxu0 0
        %1249 = vmatpush2.bf16.xpose.msra.mxu0 0
        %1250 = vmatprep.subr.bf16.mxu0 0
        %1251 = vmatpush2.bf16.xpose.msra.mxu0 0
        %1252 = vmatprep.subr.bf16.mxu0 0
        %1253 = vmatpush2.bf16.xpose.msra.mxu0 0
        %1254 = vmatprep.subr.bf16.mxu0 0
        %1255 = vmatpush2.bf16.xpose.msra.mxu0 0
        %1256 = vmatprep.subr.bf16.mxu0 0
        %1257 = vmatpush2.bf16.xpose.msra.mxu0 0
        %1258 = vmatprep.subr.bf16.mxu0 0
        %1259 = vmatpush2.bf16.xpose.msra.mxu0 0
        %1260 = vmatprep.subr.bf16.mxu0 0
        %1261 = vmatpush2.bf16.xpose.msra.mxu0 0
        %1262 = vmatprep.subr.bf16.mxu0 0
        %1263 = vmatpush2.bf16.xpose.msra.mxu0 0
        %1264 = vmatprep.mubr.bf16.mxu0 0
        %1265 = vmatmul.mubr.bf16.gmra.mxu0 %v1227
        %v1266 = vpop.f32.mrf.mxu0
        %v1267 = vadd.f32 0.0, %v1266
        %v1268 = vpop.f32.mrf.mxu0
        %v1269 = vpop.f32.mrf.mxu0
        %v1270 = vpop.f32.mrf.mxu0
        %1271 = vdwg.mxu0
        %v1272 = vsel %vm1162, %v1267, -inf
        %1273 = vmax.xlane.f32.xlu0 %v1272
        %v1274 = vpop.xlane.xlu0 %1273
        %v1275 = vsub.f32 %v1267, %v1274
        %v1276 = vmul.f32 %v1275, 1.442695
        %v1277 = vpow.pop %v1276
        %v1278 = vsel %vm1162, %v1277, 0.0
        %1279 = vadd.xlane.f32.xlu0 %v1278
        %v1280 = vpop.xlane.xlu0 %1279
        %v1281 = vrcp.pop %v1280
        %v1282 = vpack.c.bf16 %v1277, %v1277
        %1284 = vrot.lane.b32.xlu0 %v1111, 112
        %v1285 = vpop.permute.xlu0 %1284
        %v1287 = vsel %vm1162, %v1282, 0
        %v1290 = vsel %vm1177, %v1285, 0
        %1292 = vmatprep.subr.bf16.mxu0 0
        %1293 = vmatpush1.bf16.msra.mxu0 0
        %1294 = vmatprep.subr.bf16.mxu0 0
        %1295 = vmatpush1.bf16.msra.mxu0 0
        %1296 = vmatprep.subr.bf16.mxu0 0
        %1297 = vmatpush1.bf16.msra.mxu0 0
        %1298 = vmatprep.subr.bf16.mxu0 0
        %1299 = vmatpush1.bf16.msra.mxu0 0
        %1300 = vmatprep.subr.bf16.mxu0 0
        %1301 = vmatpush1.bf16.msra.mxu0 0
        %1302 = vmatprep.subr.bf16.mxu0 0
        %1303 = vmatpush1.bf16.msra.mxu0 0
        %1304 = vmatprep.subr.bf16.mxu0 0
        %1305 = vmatpush1.bf16.msra.mxu0 0
        %1306 = vmatprep.subr.bf16.mxu0 0
        %1307 = vmatpush1.bf16.msra.mxu0 %v1290
        %1308 = vmatprep.subr.bf16.mxu0 0
        %1309 = vmatpush2.bf16.msra.mxu0 0
        %1310 = vmatprep.subr.bf16.mxu0 0
        %1311 = vmatpush2.bf16.msra.mxu0 0
        %1312 = vmatprep.subr.bf16.mxu0 0
        %1313 = vmatpush2.bf16.msra.mxu0 0
        %1314 = vmatprep.subr.bf16.mxu0 0
        %1315 = vmatpush2.bf16.msra.mxu0 0
        %1316 = vmatprep.subr.bf16.mxu0 0
        %1317 = vmatpush2.bf16.msra.mxu0 0
        %1318 = vmatprep.subr.bf16.mxu0 0
        %1319 = vmatpush2.bf16.msra.mxu0 0
        %1320 = vmatprep.subr.bf16.mxu0 0
        %1321 = vmatpush2.bf16.msra.mxu0 0
        %1322 = vmatprep.subr.bf16.mxu0 0
        %1323 = vmatpush2.bf16.msra.mxu0 0
        %1324 = vmatprep.mubr.bf16.mxu0 0
        %1325 = vmatmul.mubr.bf16.gmra.mxu0 %v1287
        %v1326 = vpop.f32.mrf.mxu0
        %v1327 = vadd.f32 0.0, %v1326
        %v1328 = vpop.f32.mrf.mxu0
        %v1329 = vpop.f32.mrf.mxu0
        %v1330 = vpop.f32.mrf.mxu0
        %1331 = vdwg.mxu0
        %v1332 = vmul.f32 %v1327, %v1281
        %1333 = vrot.lane.b32.xlu0 %v1110, 96
        %v1334 = vpop.permute.xlu0 %1333
        %1335 = vrot.lane.b32.xlu0 %v1110, 32
        %v1336 = vpop.permute.xlu0 %1335
        %v1338 = vsel %vm1115, %v1334, 0
        %v1341 = vsel %vm1115, %v1336, 0
        %1343 = vmatprep.subr.bf16.mxu0 0
        %1344 = vmatpush1.bf16.xpose.msra.mxu0 0
        %1345 = vmatprep.subr.bf16.mxu0 0
        %1346 = vmatpush1.bf16.xpose.msra.mxu0 0
        %1347 = vmatprep.subr.bf16.mxu0 0
        %1348 = vmatpush1.bf16.xpose.msra.mxu0 0
        %1349 = vmatprep.subr.bf16.mxu0 0
        %1350 = vmatpush1.bf16.xpose.msra.mxu0 0
        %1351 = vmatprep.subr.bf16.mxu0 0
        %1352 = vmatpush1.bf16.xpose.msra.mxu0 0
        %1353 = vmatprep.subr.bf16.mxu0 0
        %1354 = vmatpush1.bf16.xpose.msra.mxu0 0
        %1355 = vmatprep.subr.bf16.mxu0 0
        %1356 = vmatpush1.bf16.xpose.msra.mxu0 0
        %1357 = vmatprep.subr.bf16.mxu0 0
        %1358 = vmatpush1.bf16.xpose.msra.mxu0 %v1341
        %1359 = vmatprep.subr.bf16.mxu0 0
        %1360 = vmatpush2.bf16.xpose.msra.mxu0 0
        %1361 = vmatprep.subr.bf16.mxu0 0
        %1362 = vmatpush2.bf16.xpose.msra.mxu0 0
        %1363 = vmatprep.subr.bf16.mxu0 0
        %1364 = vmatpush2.bf16.xpose.msra.mxu0 0
        %1365 = vmatprep.subr.bf16.mxu0 0
        %1366 = vmatpush2.bf16.xpose.msra.mxu0 0
        %1367 = vmatprep.subr.bf16.mxu0 0
        %1368 = vmatpush2.bf16.xpose.msra.mxu0 0
        %1369 = vmatprep.subr.bf16.mxu0 0
        %1370 = vmatpush2.bf16.xpose.msra.mxu0 0
        %1371 = vmatprep.subr.bf16.mxu0 0
        %1372 = vmatpush2.bf16.xpose.msra.mxu0 0
        %1373 = vmatprep.subr.bf16.mxu0 0
        %1374 = vmatpush2.bf16.xpose.msra.mxu0 0
        %1375 = vmatprep.mubr.bf16.mxu0 0
        %1376 = vmatmul.mubr.bf16.gmra.mxu0 %v1338
        %v1377 = vpop.f32.mrf.mxu0
        %v1378 = vadd.f32 0.0, %v1377
        %v1379 = vpop.f32.mrf.mxu0
        %v1380 = vpop.f32.mrf.mxu0
        %v1381 = vpop.f32.mrf.mxu0
        %1382 = vdwg.mxu0
        %v1383 = vsel %vm1162, %v1378, -inf
        %1384 = vmax.xlane.f32.xlu0 %v1383
        %v1385 = vpop.xlane.xlu0 %1384
        %v1386 = vsub.f32 %v1378, %v1385
        %v1387 = vmul.f32 %v1386, 1.442695
        %v1388 = vpow.pop %v1387
        %v1389 = vsel %vm1162, %v1388, 0.0
        %1390 = vadd.xlane.f32.xlu0 %v1389
        %v1391 = vpop.xlane.xlu0 %1390
        %v1392 = vrcp.pop %v1391
        %v1393 = vpack.c.bf16 %v1388, %v1388
        %1394 = vrot.lane.b32.xlu0 %v1111, 96
        %v1395 = vpop.permute.xlu0 %1394
        %v1397 = vsel %vm1162, %v1393, 0
        %v1400 = vsel %vm1177, %v1395, 0
        %1402 = vmatprep.subr.bf16.mxu0 0
        %1403 = vmatpush1.bf16.msra.mxu0 0
        %1404 = vmatprep.subr.bf16.mxu0 0
        %1405 = vmatpush1.bf16.msra.mxu0 0
        %1406 = vmatprep.subr.bf16.mxu0 0
        %1407 = vmatpush1.bf16.msra.mxu0 0
        %1408 = vmatprep.subr.bf16.mxu0 0
        %1409 = vmatpush1.bf16.msra.mxu0 0
        %1410 = vmatprep.subr.bf16.mxu0 0
        %1411 = vmatpush1.bf16.msra.mxu0 0
        %1412 = vmatprep.subr.bf16.mxu0 0
        %1413 = vmatpush1.bf16.msra.mxu0 0
        %1414 = vmatprep.subr.bf16.mxu0 0
        %1415 = vmatpush1.bf16.msra.mxu0 0
        %1416 = vmatprep.subr.bf16.mxu0 0
        %1417 = vmatpush1.bf16.msra.mxu0 %v1400
        %1418 = vmatprep.subr.bf16.mxu0 0
        %1419 = vmatpush2.bf16.msra.mxu0 0
        %1420 = vmatprep.subr.bf16.mxu0 0
        %1421 = vmatpush2.bf16.msra.mxu0 0
        %1422 = vmatprep.subr.bf16.mxu0 0
        %1423 = vmatpush2.bf16.msra.mxu0 0
        %1424 = vmatprep.subr.bf16.mxu0 0
        %1425 = vmatpush2.bf16.msra.mxu0 0
        %1426 = vmatprep.subr.bf16.mxu0 0
        %1427 = vmatpush2.bf16.msra.mxu0 0
        %1428 = vmatprep.subr.bf16.mxu0 0
        %1429 = vmatpush2.bf16.msra.mxu0 0
        %1430 = vmatprep.subr.bf16.mxu0 0
        %1431 = vmatpush2.bf16.msra.mxu0 0
        %1432 = vmatprep.subr.bf16.mxu0 0
        %1433 = vmatpush2.bf16.msra.mxu0 0
        %1434 = vmatprep.mubr.bf16.mxu0 0
        %1435 = vmatmul.mubr.bf16.gmra.mxu0 %v1397
        %v1436 = vpop.f32.mrf.mxu0
        %v1437 = vadd.f32 0.0, %v1436
        %v1438 = vpop.f32.mrf.mxu0
        %v1439 = vpop.f32.mrf.mxu0
        %v1440 = vpop.f32.mrf.mxu0
        %1441 = vdwg.mxu0
        %v1442 = vmul.f32 %v1437, %v1392
        %1443 = vrot.lane.b32.xlu0 %v1110, 80
        %v1444 = vpop.permute.xlu0 %1443
        %1445 = vrot.lane.b32.xlu0 %v1110, 16
        %v1446 = vpop.permute.xlu0 %1445
        %v1448 = vsel %vm1115, %v1444, 0
        %v1451 = vsel %vm1115, %v1446, 0
        %1453 = vmatprep.subr.bf16.mxu0 0
        %1454 = vmatpush1.bf16.xpose.msra.mxu0 0
        %1455 = vmatprep.subr.bf16.mxu0 0
        %1456 = vmatpush1.bf16.xpose.msra.mxu0 0
        %1457 = vmatprep.subr.bf16.mxu0 0
        %1458 = vmatpush1.bf16.xpose.msra.mxu0 0
        %1459 = vmatprep.subr.bf16.mxu0 0
        %1460 = vmatpush1.bf16.xpose.msra.mxu0 0
        %1461 = vmatprep.subr.bf16.mxu0 0
        %1462 = vmatpush1.bf16.xpose.msra.mxu0 0
        %1463 = vmatprep.subr.bf16.mxu0 0
        %1464 = vmatpush1.bf16.xpose.msra.mxu0 0
        %1465 = vmatprep.subr.bf16.mxu0 0
        %1466 = vmatpush1.bf16.xpose.msra.mxu0 0
        %1467 = vmatprep.subr.bf16.mxu0 0
        %1468 = vmatpush1.bf16.xpose.msra.mxu0 %v1451
        %1469 = vmatprep.subr.bf16.mxu0 0
        %1470 = vmatpush2.bf16.xpose.msra.mxu0 0
        %1471 = vmatprep.subr.bf16.mxu0 0
        %1472 = vmatpush2.bf16.xpose.msra.mxu0 0
        %1473 = vmatprep.subr.bf16.mxu0 0
        %1474 = vmatpush2.bf16.xpose.msra.mxu0 0
        %1475 = vmatprep.subr.bf16.mxu0 0
        %1476 = vmatpush2.bf16.xpose.msra.mxu0 0
        %1477 = vmatprep.subr.bf16.mxu0 0
        %1478 = vmatpush2.bf16.xpose.msra.mxu0 0
        %1479 = vmatprep.subr.bf16.mxu0 0
        %1480 = vmatpush2.bf16.xpose.msra.mxu0 0
        %1481 = vmatprep.subr.bf16.mxu0 0
        %1482 = vmatpush2.bf16.xpose.msra.mxu0 0
        %1483 = vmatprep.subr.bf16.mxu0 0
        %1484 = vmatpush2.bf16.xpose.msra.mxu0 0
        %1485 = vmatprep.mubr.bf16.mxu0 0
        %1486 = vmatmul.mubr.bf16.gmra.mxu0 %v1448
        %v1487 = vpop.f32.mrf.mxu0
        %v1488 = vadd.f32 0.0, %v1487
        %v1489 = vpop.f32.mrf.mxu0
        %v1490 = vpop.f32.mrf.mxu0
        %v1491 = vpop.f32.mrf.mxu0
        %1492 = vdwg.mxu0
        %v1493 = vsel %vm1162, %v1488, -inf
        %1494 = vmax.xlane.f32.xlu0 %v1493
        %v1495 = vpop.xlane.xlu0 %1494
        %v1496 = vsub.f32 %v1488, %v1495
        %v1497 = vmul.f32 %v1496, 1.442695
        %v1498 = vpow.pop %v1497
        %v1499 = vsel %vm1162, %v1498, 0.0
        %1500 = vadd.xlane.f32.xlu0 %v1499
        %v1501 = vpop.xlane.xlu0 %1500
        %v1502 = vrcp.pop %v1501
        %v1503 = vpack.c.bf16 %v1498, %v1498
        %1504 = vrot.lane.b32.xlu0 %v1111, 80
        %v1505 = vpop.permute.xlu0 %1504
        %v1507 = vsel %vm1162, %v1503, 0
        %v1510 = vsel %vm1177, %v1505, 0
        %1512 = vmatprep.subr.bf16.mxu0 0
        %1513 = vmatpush1.bf16.msra.mxu0 0
        %1514 = vmatprep.subr.bf16.mxu0 0
        %1515 = vmatpush1.bf16.msra.mxu0 0
        %1516 = vmatprep.subr.bf16.mxu0 0
        %1517 = vmatpush1.bf16.msra.mxu0 0
        %1518 = vmatprep.subr.bf16.mxu0 0
        %1519 = vmatpush1.bf16.msra.mxu0 0
        %1520 = vmatprep.subr.bf16.mxu0 0
        %1521 = vmatpush1.bf16.msra.mxu0 0
        %1522 = vmatprep.subr.bf16.mxu0 0
        %1523 = vmatpush1.bf16.msra.mxu0 0
        %1524 = vmatprep.subr.bf16.mxu0 0
        %1525 = vmatpush1.bf16.msra.mxu0 0
        %1526 = vmatprep.subr.bf16.mxu0 0
        %1527 = vmatpush1.bf16.msra.mxu0 %v1510
        %1528 = vmatprep.subr.bf16.mxu0 0
        %1529 = vmatpush2.bf16.msra.mxu0 0
        %1530 = vmatprep.subr.bf16.mxu0 0
        %1531 = vmatpush2.bf16.msra.mxu0 0
        %1532 = vmatprep.subr.bf16.mxu0 0
        %1533 = vmatpush2.bf16.msra.mxu0 0
        %1534 = vmatprep.subr.bf16.mxu0 0
        %1535 = vmatpush2.bf16.msra.mxu0 0
        %1536 = vmatprep.subr.bf16.mxu0 0
        %1537 = vmatpush2.bf16.msra.mxu0 0
        %1538 = vmatprep.subr.bf16.mxu0 0
        %1539 = vmatpush2.bf16.msra.mxu0 0
        %1540 = vmatprep.subr.bf16.mxu0 0
        %1541 = vmatpush2.bf16.msra.mxu0 0
        %1542 = vmatprep.subr.bf16.mxu0 0
        %1543 = vmatpush2.bf16.msra.mxu0 0
        %1544 = vmatprep.mubr.bf16.mxu0 0
        %1545 = vmatmul.mubr.bf16.gmra.mxu0 %v1507
        %v1546 = vpop.f32.mrf.mxu0
        %v1547 = vadd.f32 0.0, %v1546
        %v1548 = vpop.f32.mrf.mxu0
        %v1549 = vpop.f32.mrf.mxu0
        %v1550 = vpop.f32.mrf.mxu0
        %1551 = vdwg.mxu0
        %v1552 = vmul.f32 %v1547, %v1502
        %1554 = vrot.lane.b32.xlu0 %v1332, 16
        %v1555 = vpop.permute.xlu0 %1554
        %1558 = vrot.lane.b32.xlu0 %v1442, 32
        %v1559 = vpop.permute.xlu0 %1558
        %1562 = vrot.lane.b32.xlu0 %v1552, 48
        %v1563 = vpop.permute.xlu0 %1562
        %v1565 = vsel %vm1115, %v1221, %v1555
        %vm1566 = vcmask 261120
        %v1567 = vsel %vm1566, %v1565, %v1559
        %vm1568 = vcmask 392192
        %v1569 = vsel %vm1568, %v1567, %v1563
        %v1570 = vld [vmem:[%s868] sm:$0xf]
        %v1571 = vld [vmem:[%s868 + $0x4] sm:$0xf]
        %v1572 = vld [vmem:[%s868 + $0x8] sm:$0xf]
        %v1573 = vld [vmem:[%s868 + $0xc] sm:$0xf]
        %v1574 = vld [vmem:[%s868 + $0x10] sm:$0xf]
        %v1575 = vld [vmem:[%s868 + $0x14] sm:$0xf]
        %v1576 = vld [vmem:[%s868 + $0x18] sm:$0xf]
        %v1577 = vld [vmem:[%s868 + $0x1c] sm:$0xf]
        %v1578 = vpack.c.bf16 %v1569, %v1569
        %v1587 = vunpack.c.l.b16 %v1570
        %v1588 = vunpack.c.l.b16 %v1571
        %v1589 = vunpack.c.l.b16 %v1572
        %v1590 = vunpack.c.l.b16 %v1573
        %v1591 = vunpack.c.l.b16 %v1574
        %v1592 = vunpack.c.l.b16 %v1575
        %v1593 = vunpack.c.l.b16 %v1576
        %v1594 = vunpack.c.l.b16 %v1577
        %v1595 = vpack.c.b16 %v1588, %v1587
        %v1596 = vpack.c.b16 %v1590, %v1589
        %v1597 = vpack.c.b16 %v1592, %v1591
        %v1598 = vpack.c.b16 %v1594, %v1593
        %v1604 = vsel %vm976, %v1578, 0
        %1606 = vmatprep.subr.bf16.mxu0 0
        %1607 = vmatpush1.bf16.msra.mxu0 0
        %1608 = vmatprep.subr.bf16.mxu0 0
        %1609 = vmatpush1.bf16.msra.mxu0 0
        %1610 = vmatprep.subr.bf16.mxu0 0
        %1611 = vmatpush1.bf16.msra.mxu0 0
        %1612 = vmatprep.subr.bf16.mxu0 0
        %1613 = vmatpush1.bf16.msra.mxu0 0
        %1614 = vmatprep.subr.bf16.mxu0 0
        %1615 = vmatpush1.bf16.msra.mxu0 %v1598
        %1616 = vmatprep.subr.bf16.mxu0 0
        %1617 = vmatpush1.bf16.msra.mxu0 %v1597
        %1618 = vmatprep.subr.bf16.mxu0 0
        %1619 = vmatpush1.bf16.msra.mxu0 %v1596
        %1620 = vmatprep.subr.bf16.mxu0 0
        %1621 = vmatpush1.bf16.msra.mxu0 %v1595
        %1622 = vmatprep.subr.bf16.mxu0 0
        %1623 = vmatpush2.bf16.msra.mxu0 0
        %1624 = vmatprep.subr.bf16.mxu0 0
        %1625 = vmatpush2.bf16.msra.mxu0 0
        %1626 = vmatprep.subr.bf16.mxu0 0
        %1627 = vmatpush2.bf16.msra.mxu0 0
        %1628 = vmatprep.subr.bf16.mxu0 0
        %1629 = vmatpush2.bf16.msra.mxu0 0
        %1630 = vmatprep.subr.bf16.mxu0 0
        %1631 = vmatpush2.bf16.msra.mxu0 0
        %1632 = vmatprep.subr.bf16.mxu0 0
        %1633 = vmatpush2.bf16.msra.mxu0 0
        %1634 = vmatprep.subr.bf16.mxu0 0
        %1635 = vmatpush2.bf16.msra.mxu0 0
        %1636 = vmatprep.subr.bf16.mxu0 0
        %1637 = vmatpush2.bf16.msra.mxu0 0
        %1638 = vmatprep.mubr.bf16.mxu0 0
        %1639 = vmatmul.mubr.bf16.gmra.mxu0 %v1604
        %v1640 = vpop.f32.mrf.mxu0
        %v1641 = vadd.f32 0.0, %v1640
        %v1642 = vpop.f32.mrf.mxu0
        %v1643 = vpop.f32.mrf.mxu0
        %v1644 = vpop.f32.mrf.mxu0
        %1645 = vdwg.mxu0
        %v1646 = vadd.f32 %v973, %v1641
        %v1647 = vld [vmem:[%s871] sm:$0x1]
        %v1649 = vlaneseq
        %v1650 = vshrl.u32 %v1649, 7
        %v1651 = vsub.s32 0, %v1650
        %v1652 = vrot.slane %v1647, %v1651
        %v1654 = vadd.f32 %v1646, %v1652
        %v1655 = vld [vmem:[%s874] sm:$0x1]
        %v1656 = vld [vmem:[%s877] sm:$0x1]
        %v1657 = vsel %vm976, %v1654, 0.0
        %1658 = vadd.xlane.f32.xlu0 %v1657
        %v1659 = vpop.xlane.xlu0 %1658
        %v1660 = vmul.f32 %v1659, %v980
        %v1661 = vsub.f32 %v1654, %v1660
        %v1662 = vmul.f32 %v1661, %v1661
        %v1663 = vsel %vm976, %v1662, 0.0
        %1664 = vadd.xlane.f32.xlu0 %v1663
        %v1665 = vpop.xlane.xlu0 %1664
        %v1666 = vmul.f32 %v1665, %v980
        %v1667 = vadd.f32 %v1666, 1e-05
        %v1668 = vrsqrt.pop %v1667
        %v1669 = vmul.f32 %v1661, %v1668
        %v1671 = vlaneseq
        %v1672 = vshrl.u32 %v1671, 7
        %v1673 = vsub.s32 0, %v1672
        %v1674 = vrot.slane %v1655, %v1673
        %v1676 = vmul.f32 %v1669, %v1674
        %v1678 = vlaneseq
        %v1679 = vshrl.u32 %v1678, 7
        %v1680 = vsub.s32 0, %v1679
        %v1681 = vrot.slane %v1656, %v1680
        %v1683 = vadd.f32 %v1676, %v1681
        %v1684 = vpack.c.bf16 %v1683, %v1683
        %v1685 = vld [vmem:[%s894] sm:$0x1]
        %v1687 = vlaneseq
        %v1688 = vshrl.u32 %v1687, 7
        %v1689 = vsub.s32 0, %v1688
        %v1690 = vrot.slane %v1685, %v1689
        %v1692 = vadd.f32 %v1654, %v1690
        %v1693 = vld [vmem:[%s882] sm:$0xff]
        %v1694 = vld [vmem:[%s882 + $0x8] sm:$0xff]
        %v1695 = vld [vmem:[%s882 + $0x10] sm:$0xff]
        %v1696 = vld [vmem:[%s882 + $0x18] sm:$0xff]
        %v1697 = vld [vmem:[%s882 + $0x20] sm:$0xff]
        %v1698 = vld [vmem:[%s882 + $0x28] sm:$0xff]
        %v1699 = vld [vmem:[%s882 + $0x30] sm:$0xff]
        %v1700 = vld [vmem:[%s882 + $0x38] sm:$0xff]
        %v1701 = vld [vmem:[%s886] sm:$0x3]
        %v1703 = vlaneseq
        %v1704 = vshrl.u32 %v1703, 7
        %v1705 = vsub.s32 0, %v1704
        %v1706 = vrot.slane %v1701, %v1705
        %v1707 = vlaneseq
        %v1708 = vshrl.u32 %v1707, 7
        %v1709 = vsub.s32 1, %v1708
        %v1710 = vrot.slane %v1701, %v1709
        %v1721 = vunpack.c.l.b16 %v1693
        %v1722 = vunpack.c.h.b16 %v1693
        %v1723 = vunpack.c.l.b16 %v1694
        %v1724 = vunpack.c.h.b16 %v1694
        %v1725 = vunpack.c.l.b16 %v1695
        %v1726 = vunpack.c.h.b16 %v1695
        %v1727 = vunpack.c.l.b16 %v1696
        %v1728 = vunpack.c.h.b16 %v1696
        %v1729 = vunpack.c.l.b16 %v1697
        %v1730 = vunpack.c.h.b16 %v1697
        %v1731 = vunpack.c.l.b16 %v1698
        %v1732 = vunpack.c.h.b16 %v1698
        %v1733 = vunpack.c.l.b16 %v1699
        %v1734 = vunpack.c.h.b16 %v1699
        %v1735 = vunpack.c.l.b16 %v1700
        %v1736 = vunpack.c.h.b16 %v1700
        %v1737 = vpack.c.b16 %v1723, %v1721
        %v1738 = vpack.c.b16 %v1724, %v1722
        %v1739 = vpack.c.b16 %v1727, %v1725
        %v1740 = vpack.c.b16 %v1728, %v1726
        %v1741 = vpack.c.b16 %v1731, %v1729
        %v1742 = vpack.c.b16 %v1732, %v1730
        %v1743 = vpack.c.b16 %v1735, %v1733
        %v1744 = vpack.c.b16 %v1736, %v1734
        %v1754 = vsel %vm976, %v1684, 0
        %1756 = vmatprep.subr.bf16.mxu0 0
        %1757 = vmatpush1.bf16.msra.mxu0 0
        %1758 = vmatprep.subr.bf16.mxu0 0
        %1759 = vmatpush1.bf16.msra.mxu0 0
        %1760 = vmatprep.subr.bf16.mxu0 0
        %1761 = vmatpush1.bf16.msra.mxu0 0
        %1762 = vmatprep.subr.bf16.mxu0 0
        %1763 = vmatpush1.bf16.msra.mxu0 0
        %1764 = vmatprep.subr.bf16.mxu0 %v1744
        %1765 = vmatpush1.bf16.msra.mxu0 %v1743
        %1766 = vmatprep.subr.bf16.mxu0 %v1742
        %1767 = vmatpush1.bf16.msra.mxu0 %v1741
        %1768 = vmatprep.subr.bf16.mxu0 %v1740
        %1769 = vmatpush1.bf16.msra.mxu0 %v1739
        %1770 = vmatprep.subr.bf16.mxu0 %v1738
        %1771 = vmatpush1.bf16.msra.mxu0 %v1737
        %1772 = vmatprep.subr.bf16.mxu0 0
        %1773 = vmatpush2.bf16.msra.mxu0 0
        %1774 = vmatprep.subr.bf16.mxu0 0
        %1775 = vmatpush2.bf16.msra.mxu0 0
        %1776 = vmatprep.subr.bf16.mxu0 0
        %1777 = vmatpush2.bf16.msra.mxu0 0
        %1778 = vmatprep.subr.bf16.mxu0 0
        %1779 = vmatpush2.bf16.msra.mxu0 0
        %1780 = vmatprep.subr.bf16.mxu0 0
        %1781 = vmatpush2.bf16.msra.mxu0 0
        %1782 = vmatprep.subr.bf16.mxu0 0
        %1783 = vmatpush2.bf16.msra.mxu0 0
        %1784 = vmatprep.subr.bf16.mxu0 0
        %1785 = vmatpush2.bf16.msra.mxu0 0
        %1786 = vmatprep.subr.bf16.mxu0 0
        %1787 = vmatpush2.bf16.msra.mxu0 0
        %1788 = vmatprep.mubr.bf16.mxu0 0
        %1789 = vmatmul.mubr.bf16.gmra.mxu0 %v1754
        %v1790 = vpop.f32.mrf.mxu0
        %v1791 = vadd.f32 %v1706, %v1790
        %v1792 = vpop.f32.mrf.mxu0
        %v1793 = vadd.f32 %v1710, %v1792
        %v1794 = vpop.f32.mrf.mxu0
        %v1795 = vpop.f32.mrf.mxu0
        %1796 = vdwg.mxu0
        %v1797 = vmul.f32 %v1791, %v1791
        %v1798 = vmul.f32 %v1793, %v1793
        %v1799 = vmul.f32 %v1791, %v1797
        %v1800 = vmul.f32 %v1793, %v1798
        %v1801 = vmul.f32 %v1799, 0.044715
        %v1802 = vmul.f32 %v1800, 0.044715
        %v1803 = vadd.f32 %v1791, %v1801
        %v1804 = vadd.f32 %v1793, %v1802
        %v1805 = vmul.f32 %v1803, 0.7978846
        %v1806 = vmul.f32 %v1804, 0.7978846
        %v1807 = vtanh.pop %v1805
        %v1808 = vtanh.pop %v1806
        %v1809 = vadd.f32 %v1807, 1.0
        %v1810 = vadd.f32 %v1808, 1.0
        %v1811 = vmul.f32 %v1809, 0.5
        %v1812 = vmul.f32 %v1810, 0.5
        %v1813 = vmul.f32 %v1791, %v1811
        %v1814 = vmul.f32 %v1793, %v1812
        %v1815 = vpack.c.bf16 %v1813, %v1813
        %v1816 = vpack.c.bf16 %v1814, %v1814
        %v1817 = vld [vmem:[%s891] sm:$0xf]
        %v1818 = vld [vmem:[%s891 + $0x4] sm:$0xf]
        %v1819 = vld [vmem:[%s891 + $0x8] sm:$0xf]
        %v1820 = vld [vmem:[%s891 + $0xc] sm:$0xf]
        %v1821 = vld [vmem:[%s891 + $0x10] sm:$0xf]
        %v1822 = vld [vmem:[%s891 + $0x14] sm:$0xf]
        %v1823 = vld [vmem:[%s891 + $0x18] sm:$0xf]
        %v1824 = vld [vmem:[%s891 + $0x1c] sm:$0xf]
        %v1825 = vld [vmem:[%s891 + $0x20] sm:$0xf]
        %v1826 = vld [vmem:[%s891 + $0x24] sm:$0xf]
        %v1827 = vld [vmem:[%s891 + $0x28] sm:$0xf]
        %v1828 = vld [vmem:[%s891 + $0x2c] sm:$0xf]
        %v1829 = vld [vmem:[%s891 + $0x30] sm:$0xf]
        %v1830 = vld [vmem:[%s891 + $0x34] sm:$0xf]
        %v1831 = vld [vmem:[%s891 + $0x38] sm:$0xf]
        %v1832 = vld [vmem:[%s891 + $0x3c] sm:$0xf]
        %v1833 = vld [vmem:[%s891 + $0x40] sm:$0xf]
        %v1834 = vld [vmem:[%s891 + $0x44] sm:$0xf]
        %v1835 = vld [vmem:[%s891 + $0x48] sm:$0xf]
        %v1836 = vld [vmem:[%s891 + $0x4c] sm:$0xf]
        %v1837 = vld [vmem:[%s891 + $0x50] sm:$0xf]
        %v1838 = vld [vmem:[%s891 + $0x54] sm:$0xf]
        %v1839 = vld [vmem:[%s891 + $0x58] sm:$0xf]
        %v1840 = vld [vmem:[%s891 + $0x5c] sm:$0xf]
        %v1841 = vld [vmem:[%s891 + $0x60] sm:$0xf]
        %v1842 = vld [vmem:[%s891 + $0x64] sm:$0xf]
        %v1843 = vld [vmem:[%s891 + $0x68] sm:$0xf]
        %v1844 = vld [vmem:[%s891 + $0x6c] sm:$0xf]
        %v1845 = vld [vmem:[%s891 + $0x70] sm:$0xf]
        %v1846 = vld [vmem:[%s891 + $0x74] sm:$0xf]
        %v1847 = vld [vmem:[%s891 + $0x78] sm:$0xf]
        %v1848 = vld [vmem:[%s891 + $0x7c] sm:$0xf]
        %v1881 = vunpack.c.l.b16 %v1817
        %v1882 = vunpack.c.l.b16 %v1818
        %v1883 = vunpack.c.l.b16 %v1819
        %v1884 = vunpack.c.l.b16 %v1820
        %v1885 = vunpack.c.l.b16 %v1821
        %v1886 = vunpack.c.l.b16 %v1822
        %v1887 = vunpack.c.l.b16 %v1823
        %v1888 = vunpack.c.l.b16 %v1824
        %v1889 = vunpack.c.l.b16 %v1825
        %v1890 = vunpack.c.l.b16 %v1826
        %v1891 = vunpack.c.l.b16 %v1827
        %v1892 = vunpack.c.l.b16 %v1828
        %v1893 = vunpack.c.l.b16 %v1829
        %v1894 = vunpack.c.l.b16 %v1830
        %v1895 = vunpack.c.l.b16 %v1831
        %v1896 = vunpack.c.l.b16 %v1832
        %v1897 = vunpack.c.l.b16 %v1833
        %v1898 = vunpack.c.l.b16 %v1834
        %v1899 = vunpack.c.l.b16 %v1835
        %v1900 = vunpack.c.l.b16 %v1836
        %v1901 = vunpack.c.l.b16 %v1837
        %v1902 = vunpack.c.l.b16 %v1838
        %v1903 = vunpack.c.l.b16 %v1839
        %v1904 = vunpack.c.l.b16 %v1840
        %v1905 = vunpack.c.l.b16 %v1841
        %v1906 = vunpack.c.l.b16 %v1842
        %v1907 = vunpack.c.l.b16 %v1843
        %v1908 = vunpack.c.l.b16 %v1844
        %v1909 = vunpack.c.l.b16 %v1845
        %v1910 = vunpack.c.l.b16 %v1846
        %v1911 = vunpack.c.l.b16 %v1847
        %v1912 = vunpack.c.l.b16 %v1848
        %v1913 = vpack.c.b16 %v1882, %v1881
        %v1914 = vpack.c.b16 %v1884, %v1883
        %v1915 = vpack.c.b16 %v1886, %v1885
        %v1916 = vpack.c.b16 %v1888, %v1887
        %v1917 = vpack.c.b16 %v1890, %v1889
        %v1918 = vpack.c.b16 %v1892, %v1891
        %v1919 = vpack.c.b16 %v1894, %v1893
        %v1920 = vpack.c.b16 %v1896, %v1895
        %v1921 = vpack.c.b16 %v1898, %v1897
        %v1922 = vpack.c.b16 %v1900, %v1899
        %v1923 = vpack.c.b16 %v1902, %v1901
        %v1924 = vpack.c.b16 %v1904, %v1903
        %v1925 = vpack.c.b16 %v1906, %v1905
        %v1926 = vpack.c.b16 %v1908, %v1907
        %v1927 = vpack.c.b16 %v1910, %v1909
        %v1928 = vpack.c.b16 %v1912, %v1911
        %1945 = vmatprep.subr.bf16.mxu0 0
        %1946 = vmatpush1.bf16.msra.mxu0 %v1920
        %1947 = vmatprep.subr.bf16.mxu0 0
        %1948 = vmatpush1.bf16.msra.mxu0 %v1919
        %1949 = vmatprep.subr.bf16.mxu0 0
        %1950 = vmatpush1.bf16.msra.mxu0 %v1918
        %1951 = vmatprep.subr.bf16.mxu0 0
        %1952 = vmatpush1.bf16.msra.mxu0 %v1917
        %1953 = vmatprep.subr.bf16.mxu0 0
        %1954 = vmatpush1.bf16.msra.mxu0 %v1916
        %1955 = vmatprep.subr.bf16.mxu0 0
        %1956 = vmatpush1.bf16.msra.mxu0 %v1915
        %1957 = vmatprep.subr.bf16.mxu0 0
        %1958 = vmatpush1.bf16.msra.mxu0 %v1914
        %1959 = vmatprep.subr.bf16.mxu0 0
        %1960 = vmatpush1.bf16.msra.mxu0 %v1913
        %1961 = vmatprep.subr.bf16.mxu0 0
        %1962 = vmatpush2.bf16.msra.mxu0 %v1928
        %1963 = vmatprep.subr.bf16.mxu0 0
        %1964 = vmatpush2.bf16.msra.mxu0 %v1927
        %1965 = vmatprep.subr.bf16.mxu0 0
        %1966 = vmatpush2.bf16.msra.mxu0 %v1926
        %1967 = vmatprep.subr.bf16.mxu0 0
        %1968 = vmatpush2.bf16.msra.mxu0 %v1925
        %1969 = vmatprep.subr.bf16.mxu0 0
        %1970 = vmatpush2.bf16.msra.mxu0 %v1924
        %1971 = vmatprep.subr.bf16.mxu0 0
        %1972 = vmatpush2.bf16.msra.mxu0 %v1923
        %1973 = vmatprep.subr.bf16.mxu0 0
        %1974 = vmatpush2.bf16.msra.mxu0 %v1922
        %1975 = vmatprep.subr.bf16.mxu0 0
        %1976 = vmatpush2.bf16.msra.mxu0 %v1921
        %1977 = vmatprep.mubr.bf16.mxu0 %v1816
        %1978 = vmatmul.mubr.bf16.gmra.mxu0 %v1815
        %v1979 = vpop.f32.mrf.mxu0
        %v1980 = vadd.f32 0.0, %v1979
        %v1981 = vpop.f32.mrf.mxu0
        %v1982 = vpop.f32.mrf.mxu0
        %v1983 = vpop.f32.mrf.mxu0
        %1984 = vdwg.mxu0
        %v1985 = vadd.f32 %v1692, %v1980
        %1986 = vst.msk [vmem:[#allocation2] sm:$0xff] %vm976, %v1985
        %p1987 = scmp.eq.s32.totalorder %s41, 1
        // Predicated region
        $region121: #{tpu_custom_call.1} parent=99 // pred_check
          %p1988 = pneg %p1987
        $region122: #{tpu_custom_call.1} parent=99 // pred_check_branch
          %1990 = sbr.rel (%p1988) target = $region124
        $region123: #{tpu_custom_call.1} parent=99 // pred_region
          %v1991 = vld [vmem:[%s16] sm:$0x1]
          %v1992 = vld [vmem:[%s17] sm:$0x1]
          %v1993 = vsel %vm976, %v1985, 0.0
          %1994 = vadd.xlane.f32.xlu0 %v1993
          %v1995 = vpop.xlane.xlu0 %1994
          %v1996 = vmul.f32 %v1995, %v980
          %v1997 = vsub.f32 %v1985, %v1996
          %v1998 = vmul.f32 %v1997, %v1997
          %v1999 = vsel %vm976, %v1998, 0.0
          %2000 = vadd.xlane.f32.xlu0 %v1999
          %v2001 = vpop.xlane.xlu0 %2000
          %v2002 = vmul.f32 %v2001, %v980
          %v2003 = vadd.f32 %v2002, 1e-05
          %v2004 = vrsqrt.pop %v2003
          %v2005 = vmul.f32 %v1997, %v2004
          %v2007 = vlaneseq
          %v2008 = vshrl.u32 %v2007, 7
          %v2009 = vsub.s32 0, %v2008
          %v2010 = vrot.slane %v1991, %v2009
          %v2012 = vmul.f32 %v2005, %v2010
          %v2014 = vlaneseq
          %v2015 = vshrl.u32 %v2014, 7
          %v2016 = vsub.s32 0, %v2015
          %v2017 = vrot.slane %v1992, %v2016
          %v2019 = vadd.f32 %v2012, %v2017
          %v2020 = vld [vmem:[%s18] sm:$0xf]
          %v2021 = vld [vmem:[%s18 + $0x4] sm:$0xf]
          %v2022 = vld [vmem:[%s18 + $0x8] sm:$0xf]
          %v2023 = vld [vmem:[%s18 + $0xc] sm:$0xf]
          %v2024 = vld [vmem:[%s18 + $0x10] sm:$0xf]
          %v2025 = vld [vmem:[%s18 + $0x14] sm:$0xf]
          %v2026 = vld [vmem:[%s18 + $0x18] sm:$0xf]
          %v2027 = vld [vmem:[%s18 + $0x1c] sm:$0xf]
          %v2028 = vpack.c.bf16 %v2019, %v2019
          %v2029 = vld [vmem:[%s19] sm:$0x1]
          %v2031 = vlaneseq
          %v2032 = vshrl.u32 %v2031, 7
          %v2033 = vsub.s32 0, %v2032
          %v2034 = vrot.slane %v2029, %v2033
          %v2044 = vunpack.c.l.b16 %v2020
          %v2045 = vunpack.c.l.b16 %v2021
          %v2046 = vunpack.c.l.b16 %v2022
          %v2047 = vunpack.c.l.b16 %v2023
          %v2048 = vunpack.c.l.b16 %v2024
          %v2049 = vunpack.c.l.b16 %v2025
          %v2050 = vunpack.c.l.b16 %v2026
          %v2051 = vunpack.c.l.b16 %v2027
          %v2052 = vpack.c.b16 %v2045, %v2044
          %v2053 = vpack.c.b16 %v2047, %v2046
          %v2054 = vpack.c.b16 %v2049, %v2048
          %v2055 = vpack.c.b16 %v2051, %v2050
          %v2061 = vsel %vm976, %v2028, 0
          %2063 = vmatprep.subr.bf16.mxu0 0
          %2064 = vmatpush1.bf16.msra.mxu0 0
          %2065 = vmatprep.subr.bf16.mxu0 0
          %2066 = vmatpush1.bf16.msra.mxu0 0
          %2067 = vmatprep.subr.bf16.mxu0 0
          %2068 = vmatpush1.bf16.msra.mxu0 0
          %2069 = vmatprep.subr.bf16.mxu0 0
          %2070 = vmatpush1.bf16.msra.mxu0 0
          %2071 = vmatprep.subr.bf16.mxu0 0
          %2072 = vmatpush1.bf16.msra.mxu0 %v2055
          %2073 = vmatprep.subr.bf16.mxu0 0
          %2074 = vmatpush1.bf16.msra.mxu0 %v2054
          %2075 = vmatprep.subr.bf16.mxu0 0
          %2076 = vmatpush1.bf16.msra.mxu0 %v2053
          %2077 = vmatprep.subr.bf16.mxu0 0
          %2078 = vmatpush1.bf16.msra.mxu0 %v2052
          %2079 = vmatprep.subr.bf16.mxu0 0
          %2080 = vmatpush2.bf16.msra.mxu0 0
          %2081 = vmatprep.subr.bf16.mxu0 0
          %2082 = vmatpush2.bf16.msra.mxu0 0
          %2083 = vmatprep.subr.bf16.mxu0 0
          %2084 = vmatpush2.bf16.msra.mxu0 0
          %2085 = vmatprep.subr.bf16.mxu0 0
          %2086 = vmatpush2.bf16.msra.mxu0 0
          %2087 = vmatprep.subr.bf16.mxu0 0
          %2088 = vmatpush2.bf16.msra.mxu0 0
          %2089 = vmatprep.subr.bf16.mxu0 0
          %2090 = vmatpush2.bf16.msra.mxu0 0
          %2091 = vmatprep.subr.bf16.mxu0 0
          %2092 = vmatpush2.bf16.msra.mxu0 0
          %2093 = vmatprep.subr.bf16.mxu0 0
          %2094 = vmatpush2.bf16.msra.mxu0 0
          %2095 = vmatprep.mubr.bf16.mxu0 0
          %2096 = vmatmul.mubr.bf16.gmra.mxu0 %v2061
          %v2097 = vpop.f32.mrf.mxu0
          %v2098 = vadd.f32 %v2034, %v2097
          %v2099 = vpop.f32.mrf.mxu0
          %v2100 = vpop.f32.mrf.mxu0
          %v2101 = vpop.f32.mrf.mxu0
          %2102 = vdwg.mxu0
          %v2103 = vpack.c.bf16 %v2098, %v2098
          %2104 = vst [vmem:[%s850] sm:$0xf] %v2103
        $region124: #{tpu_custom_call.1} parent=99 // pred_fallthru
          _
        %s2105 = sand.u32 %s541, 1
        %s2106 = scalar_lea.sflag [#allocation5], %s2105
        %s2107 = sand.u32 %s541, 1
        %s2108 = smul.addr %s2107, 4
        %s2109 = scalar_lea.vmem [#allocation10], %s2108
        // Predicated region
        $region125: #{tpu_custom_call.1} parent=99 // pred_check
          %p2110 = pneg %p551
        $region126: #{tpu_custom_call.1} parent=99 // pred_check_branch
          %2112 = sbr.rel (%p2110) target = $region128
        $region127: #{tpu_custom_call.1} parent=99 // pred_region
          %s2114 = ssub.s32 64, 64
          %2115 = vsyncadd %s2106, %s2114
          %s2116 = smul.addr %s40, 64
          %s2117 = scalar_lea.hbm %s20, %s2116
          %s2119 = sshll.u32 %s2109, 4
          %s2120 = int_to_ptr.vmem [resolvable:$true] %s2119
          %2122 = dma.vmem_to_hbm [thread:$0]  %s2120, 64, %s2117, %s2106
        $region128: #{tpu_custom_call.1} parent=99 // pred_fallthru
          _
      $region100: #{tpu_custom_call.1} parent=5 // pred_fallthru
        _
      %p2123 = scmp.le.s32.totalorder 2, %s31
      // Predicated region
      $region129: #{tpu_custom_call.1} parent=5 // pred_check
        %p2124 = pneg %p2123
      $region130: #{tpu_custom_call.1} parent=5 // pred_check_branch
        %2126 = sbr.rel (%p2124) target = $region132
      $region131: #{tpu_custom_call.1} parent=5 // pred_region
        %s2127 = ssub.s32 %s31, 2
        // Predicated region
        $region133: #{tpu_custom_call.1} parent=131 // pred_check
          %p2128 = pneg %p557
        $region134: #{tpu_custom_call.1} parent=131 // pred_check_branch
          %2130 = sbr.rel (%p2128) target = $region136
        $region135: #{tpu_custom_call.1} parent=131 // pred_region
          %s2131 = sand.u32 %s542, 1
          %s2132 = scalar_lea.sflag [#allocation5], %s2131
          %s2133 = sand.u32 %s542, 1
          %s2134 = smul.addr %s2133, 4
          %s2135 = scalar_lea.vmem [#allocation10], %s2134
          %2136 = dma.done %s2132, 64
        $region136: #{tpu_custom_call.1} parent=131 // pred_fallthru
          _
      $region132: #{tpu_custom_call.1} parent=5 // pred_fallthru
        _
    $region6: #{tpu_custom_call.1} parent=1 // loop_footer
      %s35 = sadd.s32 1, %s31
    $region7: #{tpu_custom_call.1} parent=1 // loop_footer_branch
      %30 = sbr.rel target = $region3
    $region8: #{tpu_custom_call.1} parent=1 // loop_exit
      _
    %2137 = vsyncpa [#allocation4], 1
    %s2138 = scalar_lea.sflag [#allocation4], 1
    %2139 = vsyncpa %s2138, 1
    %2140 = vsyncpa [#allocation7], 1
    %2141 = vsyncpa [#allocation5], 1
    %s2142 = scalar_lea.sflag [#allocation5], 1
    %2143 = vsyncpa %s2142, 1

</llo_original>
